<compile_context>
chip_gen: v6e
topology: v6e:2x2x1
jax: 0.10.0
libtpu: 0.0.40
codegen_flags: <defaults>
</compile_context>

<pallas_src>
import math
import functools

import jax
import jax.numpy as jnp
from jax import lax
from jax.experimental import pallas as pl
from jax.experimental.pallas import tpu as pltpu


# --------------------------------------------------------------------------
# in-kernel helpers (f32 statistics)
# --------------------------------------------------------------------------
def _layernorm(x, g, b, eps=1e-5):
    mu = jnp.mean(x, axis=-1, keepdims=True)
    xc = x - mu
    var = jnp.mean(xc * xc, axis=-1, keepdims=True)
    return xc * lax.rsqrt(var + eps) * g + b


def _gelu_exact(x):
    return 0.5 * x * (1.0 + lax.erf(x * (1.0 / math.sqrt(2.0))))


def _weight_spec(shape, single_buffer):
    """Constant-index (fetched once) weight block; optionally single-buffered."""
    index_map = lambda *_: (0,) * len(shape)
    if single_buffer and hasattr(pl, "Buffered"):
        try:
            return pl.BlockSpec(shape, index_map, pipeline_mode=pl.Buffered(1))
        except Exception:  # pragma: no cover - older jax without pipeline_mode
            pass
    return pl.BlockSpec(shape, index_map)


def _default_vmem_limit():
    # ~3/4 of physical VMEM: ~48 MiB on v7x (64 MiB/TC), ~96 MiB on v5e/v6e (128 MiB).
    try:
        cap = int(pltpu.get_tpu_info().vmem_capacity_bytes)
        return max(32 * 1024 * 1024, min(cap * 3 // 4, 110 * 1024 * 1024))
    except Exception:  # pragma: no cover
        return 64 * 1024 * 1024


# --------------------------------------------------------------------------
# Kernel 1: GroupNorm (precomputed stats) + conv1 + LN1 + QKV projection
#           (reads channel-major x; writes lane-dense (B, S, C) q/k/v/h)
# --------------------------------------------------------------------------
def _pre_kernel(x_ref, gsc_ref, gsh_ref, c1w_ref, c1b_ref, ln1g_ref, ln1b_ref,
                wq_ref, wk_ref, wv_ref,
                h_ref, q_ref, k_ref, v_ref):
    bf16 = jnp.bfloat16
    # x arrives channel-major (C, TS); one in-VMEM transpose replaces the wrapper-side
    # NCHW -> (B, S, C) HBM relayout pass.
    x_t = x_ref[0].T                                   # (TS, C) f32
    xg = x_t * gsc_ref[0] + gsh_ref[0]                 # GroupNorm (per-(b,chan) affine)

    h = jnp.dot(xg.astype(bf16), c1w_ref[...],
                preferred_element_type=jnp.float32) + c1b_ref[...]
    h_ref[0] = h.astype(bf16)                          # residue_short handoff (bf16)

    hn = _layernorm(h, ln1g_ref[...], ln1b_ref[...]).astype(bf16)
    # lane-dense q/k/v; the softmax scale is pre-folded into wq in the wrapper.
    q_ref[0] = jnp.dot(hn, wq_ref[...], preferred_element_type=jnp.float32).astype(bf16)
    k_ref[0] = jnp.dot(hn, wk_ref[...], preferred_element_type=jnp.float32).astype(bf16)
    v_ref[0] = jnp.dot(hn, wv_ref[...], preferred_element_type=jnp.float32).astype(bf16)


# --------------------------------------------------------------------------
# Kernel 2: flash-style self-attention (online softmax, resident K/V by default)
# --------------------------------------------------------------------------
def _flash_self_attn_kernel(q_ref, k_ref, v_ref, o_ref,
                            m_scr, l_scr, acc_scr, *, n_head):
    ki = pl.program_id(2)
    C = q_ref.shape[-1]
    dh = C // n_head

    @pl.when(ki == 0)
    def _():
        m_scr[...] = jnp.full(m_scr.shape, -jnp.inf, jnp.float32)
        l_scr[...] = jnp.zeros(l_scr.shape, jnp.float32)
        acc_scr[...] = jnp.zeros(acc_scr.shape, jnp.float32)

    for hh in range(n_head):
        sl = slice(hh * dh, (hh + 1) * dh)
        qh = q_ref[0, :, sl]                           # (TQ, dh) bf16 (pre-scaled)
        kh = k_ref[0, :, sl]                           # (TK, dh) bf16
        vh = v_ref[0, :, sl]
        s = lax.dot_general(qh, kh, (((1,), (1,)), ((), ())),
                            preferred_element_type=jnp.float32)       # (TQ, TK) f32
        m_prev = m_scr[hh]
        m_new = jnp.maximum(m_prev, jnp.max(s, axis=-1, keepdims=True))
        alpha = jnp.exp(m_prev - m_new)
        p = jnp.exp(s - m_new)
        l_scr[hh] = alpha * l_scr[hh] + jnp.sum(p, axis=-1, keepdims=True)
        acc_scr[hh] = alpha * acc_scr[hh] + jnp.dot(
            p.astype(jnp.bfloat16), vh, preferred_element_type=jnp.float32)
        m_scr[hh] = m_new

    @pl.when(ki == pl.num_programs(2) - 1)
    def _():
        for hh in range(n_head):
            sl = slice(hh * dh, (hh + 1) * dh)
            o_ref[0, :, sl] = (acc_scr[hh] *
                               pl.reciprocal(l_scr[hh], approx=True)).astype(o_ref.dtype)


# --------------------------------------------------------------------------
# Kernel 3: self-attn out-proj + residual, cross-attention, GeGLU FF, conv2,
#           long residual (writes channel-major output)
# --------------------------------------------------------------------------
def _epilogue_kernel(o_ref, h_ref, x0_ref, ctx_ref,
                     sa_wo_ref, sa_bo_ref, ln2_g_ref, ln2_b_ref,
                     ca_wq_ref, ca_wk_ref, ca_wv_ref, ca_wo_ref, ca_bo_ref,
                     ln3_g_ref, ln3_b_ref,
                     l1a_w_ref, l1a_b_ref, l1g_w_ref, l1g_b_ref,
                     l2_w_ref, l2_b_ref, c2_w_ref, c2_b_ref,
                     out_ref, att_scr, *, n_head):
    f32, bf16 = jnp.float32, jnp.bfloat16
    h = h_ref[0].astype(f32)                           # (TS, C) residue_short
    C = h.shape[-1]
    dh = C // n_head
    ctx = ctx_ref[0]                                   # (Sc, Dctx) bf16

    # ---- self-attention output projection: single depth-C matmul + residual ----
    x = jnp.dot(o_ref[0], sa_wo_ref[...],
                preferred_element_type=f32) + sa_bo_ref[...] + h

    # ---- cross attention against the (small) context ----
    # ctx K/V are tiny; recomputing the (Sc, C) projections per S-tile is negligible.
    res = x
    xn = _layernorm(x, ln2_g_ref[...], ln2_b_ref[...]).astype(bf16)
    qc = jnp.dot(xn, ca_wq_ref[...], preferred_element_type=f32)     # (TS, C); scale folded
    kc = jnp.dot(ctx, ca_wk_ref[...], preferred_element_type=f32)    # (Sc, C)
    vc = jnp.dot(ctx, ca_wv_ref[...], preferred_element_type=f32)
    for hh in range(n_head):
        sl = slice(hh * dh, (hh + 1) * dh)
        s = lax.dot_general(qc[:, sl].astype(bf16), kc[:, sl].astype(bf16),
                            (((1,), (1,)), ((), ())),
                            preferred_element_type=f32)              # (TS, Sc)
        s = s - jnp.max(s, axis=-1, keepdims=True)
        p = jnp.exp(s)
        p = p / jnp.sum(p, axis=-1, keepdims=True)                   # exact softmax
        att_scr[:, sl] = jnp.dot(p.astype(bf16), vc[:, sl].astype(bf16),
                                 preferred_element_type=f32).astype(bf16)
    x = jnp.dot(att_scr[...], ca_wo_ref[...],
                preferred_element_type=f32) + ca_bo_ref[...] + res

    # ---- GeGLU feed-forward (l1 split into two (C,4C) halves) ----
    res = x
    xn = _layernorm(x, ln3_g_ref[...], ln3_b_ref[...]).astype(bf16)
    a = jnp.dot(xn, l1a_w_ref[...], preferred_element_type=f32) + l1a_b_ref[...]
    g = jnp.dot(xn, l1g_w_ref[...], preferred_element_type=f32) + l1g_b_ref[...]
    ff = (a * _gelu_exact(g)).astype(bf16)
    x = jnp.dot(ff, l2_w_ref[...], preferred_element_type=f32) + l2_b_ref[...] + res

    # ---- conv2 (1x1) + long residual; stored channel-major (no wrapper transpose) ----
    y = jnp.dot(x.astype(bf16), c2_w_ref[...], preferred_element_type=f32) + c2_b_ref[...]
    out_ref[0] = y.T + x0_ref[0]


# --------------------------------------------------------------------------
# wrapper
# --------------------------------------------------------------------------
def unet_attention_block(x_nchw, context, params, *, n_head, n_groups=32,
                         seq_tile=None, kv_tile=None,
                         single_buffer_weights=True, vmem_limit_bytes=None):
    f32, bf16 = jnp.float32, jnp.bfloat16
    B, C, H, W = x_nchw.shape
    S = H * W
    dh = C // n_head
    Sc, Dctx = context.shape[1], context.shape[2]
    sm_scale = 1.0 / math.sqrt(dh)

    if seq_tile is None:
        seq_tile = S if S <= 512 else 512
    if kv_tile is None:
        kv_tile = S            # resident K/V per batch
    assert S % seq_tile == 0 and S % kv_tile == 0
    # channel-major (B, C, S) blocks put seq_tile on the lane axis:
    assert seq_tile == S or seq_tile % 128 == 0
    assert seq_tile % 16 == 0 and kv_tile % 16 == 0 and C % 8 == 0
    ns = S // seq_tile
    nk = S // kv_tile

    if vmem_limit_bytes is None:
        vmem_limit_bytes = _default_vmem_limit()

    # channel-major view of x (free reshape; the relayout happens inside the kernels)
    x_cs = x_nchw.reshape(B, C, S).astype(f32)
    ctx_bf16 = context.astype(bf16)

    # ---- GroupNorm statistics: small centered two-pass f32 reduction (pre-kernel) ----
    # TODO(synk): this is one extra HBM read of x; fold into a tiny Pallas reduction
    # kernel if it shows up at production scale.
    G = n_groups
    cg = C // G
    xg = x_cs.reshape(B, G, cg * S)
    mu = jnp.mean(xg, axis=-1)                                    # (B, G)
    var = jnp.mean((xg - mu[..., None]) ** 2, axis=-1)
    inv = lax.rsqrt(var + 1e-6)
    inv_c = jnp.repeat(inv, cg, axis=1)                           # (B, C)
    mu_c = jnp.repeat(mu, cg, axis=1)
    gamma = params['gn_g'].reshape(1, C)
    beta = params['gn_b'].reshape(1, C)
    gn_scale = (gamma * inv_c).reshape(B, 1, C).astype(f32)
    gn_shift = (beta - mu_c * gamma * inv_c).reshape(B, 1, C).astype(f32)

    # ---- weights: bf16 matmul operands; biases / norm affines stay f32 ----
    c1_w = params['c1_w'].astype(bf16)
    c1_b = params['c1_b'].astype(f32)
    ln1_g, ln1_b = params['ln1_g'].astype(f32), params['ln1_b'].astype(f32)
    w_in = params['sa_w_in']
    wq = (w_in[:, :C] * sm_scale).astype(bf16)        # softmax scale folded into q proj
    wk = w_in[:, C:2 * C].astype(bf16)
    wv = w_in[:, 2 * C:].astype(bf16)
    sa_wo = params['sa_w_out'].astype(bf16)           # un-split: single (C,C) out-proj
    sa_bo = params['sa_b_out'].astype(f32)
    ln2_g, ln2_b = params['ln2_g'].astype(f32), params['ln2_b'].astype(f32)
    ca_wq = (params['ca_wq'] * sm_scale).astype(bf16)
    ca_wk = params['ca_wk'].astype(bf16)
    ca_wv = params['ca_wv'].astype(bf16)
    ca_wo = params['ca_w_out'].astype(bf16)
    ca_bo = params['ca_b_out'].astype(f32)
    ln3_g, ln3_b = params['ln3_g'].astype(f32), params['ln3_b'].astype(f32)
    l1a_w = params['l1_w'][:, :4 * C].astype(bf16)
    l1g_w = params['l1_w'][:, 4 * C:].astype(bf16)
    l1a_b = params['l1_b'][:, :4 * C].astype(f32)
    l1g_b = params['l1_b'][:, 4 * C:].astype(f32)
    l2_w = params['l2_w'].astype(bf16)
    l2_b = params['l2_b'].astype(f32)
    c2_w = params['c2_w'].astype(bf16)
    c2_b = params['c2_b'].astype(f32)

    wspec = functools.partial(_weight_spec, single_buffer=single_buffer_weights)

    cparams2 = pltpu.CompilerParams(
        dimension_semantics=("parallel", "parallel"),
        vmem_limit_bytes=vmem_limit_bytes)
    cparams3 = pltpu.CompilerParams(
        dimension_semantics=("parallel", "parallel", "arbitrary"),
        vmem_limit_bytes=vmem_limit_bytes)

    ce_pre = pl.CostEstimate(
        flops=int(8 * B * S * C * C),
        transcendentals=0,
        bytes_accessed=int(B * S * C * 12 + 8 * C * C))
    ce_attn = pl.CostEstimate(
        flops=int(4 * B * S * S * C),
        transcendentals=int(B * n_head * S * S),
        bytes_accessed=int(B * S * C * 2 * (2 + 2 * max(1, nk))))
    ce_epi = pl.CostEstimate(
        flops=int(30 * B * S * C * C + 4 * B * S * Sc * C + 4 * B * Sc * Dctx * C),
        transcendentals=int(B * S * (4 * C + n_head * Sc)),
        bytes_accessed=int(B * S * C * 12 + 30 * C * C))

    # ---------------- Kernel 1: GN + conv1 + LN1 + QKV ----------------
    pre_in_specs = [
        pl.BlockSpec((1, C, seq_tile), lambda b, si: (b, 0, si)),      # x (channel-major)
        pl.BlockSpec((1, 1, C), lambda b, si: (b, 0, 0)),              # gn_scale
        pl.BlockSpec((1, 1, C), lambda b, si: (b, 0, 0)),              # gn_shift
        wspec((C, C)), wspec((1, C)),                                  # conv1
        wspec((1, C)), wspec((1, C)),                                  # ln1
        wspec((C, C)), wspec((C, C)), wspec((C, C)),                   # wq / wk / wv
    ]
    seq_spec = pl.BlockSpec((1, seq_tile, C), lambda b, si: (b, si, 0))
    pre_out_shapes = (
        jax.ShapeDtypeStruct((B, S, C), bf16),        # h (residue_short, bf16 handoff)
        jax.ShapeDtypeStruct((B, S, C), bf16),        # q
        jax.ShapeDtypeStruct((B, S, C), bf16),        # k
        jax.ShapeDtypeStruct((B, S, C), bf16),        # v
    )
    h_res, q_ld, k_ld, v_ld = pl.pallas_call(
        _pre_kernel,
        out_shape=pre_out_shapes,
        grid_spec=pltpu.PrefetchScalarGridSpec(
            num_scalar_prefetch=0, grid=(B, ns),
            in_specs=pre_in_specs,
            out_specs=[seq_spec, seq_spec, seq_spec, seq_spec]),
        compiler_params=cparams2,
        cost_estimate=ce_pre,
    )(x_cs, gn_scale, gn_shift, c1_w, c1_b, ln1_g, ln1_b, wq, wk, wv)

    # ---------------- Kernel 2: flash self-attention ----------------
    o_ld = pl.pallas_call(
        functools.partial(_flash_self_attn_kernel, n_head=n_head),
        out_shape=jax.ShapeDtypeStruct((B, S, C), bf16),
        grid_spec=pltpu.PrefetchScalarGridSpec(
            num_scalar_prefetch=0, grid=(B, ns, nk),
            in_specs=[
                pl.BlockSpec((1, seq_tile, C), lambda b, qi, ki: (b, qi, 0)),
                pl.BlockSpec((1, kv_tile, C), lambda b, qi, ki: (b, ki, 0)),
                pl.BlockSpec((1, kv_tile, C), lambda b, qi, ki: (b, ki, 0)),
            ],
            out_specs=pl.BlockSpec((1, seq_tile, C), lambda b, qi, ki: (b, qi, 0)),
            scratch_shapes=[
                pltpu.VMEM((n_head, seq_tile, 1), jnp.float32),   # m
                pltpu.VMEM((n_head, seq_tile, 1), jnp.float32),   # l
                pltpu.VMEM((n_head, seq_tile, dh), jnp.float32),  # acc
            ]),
        compiler_params=cparams3,
        cost_estimate=ce_attn,
    )(q_ld, k_ld, v_ld)

    # ---------------- Kernel 3: out-proj + cross-attn + GeGLU + conv2 ----------------
    epi_in_specs = [
        pl.BlockSpec((1, seq_tile, C), lambda b, si: (b, si, 0)),      # o
        pl.BlockSpec((1, seq_tile, C), lambda b, si: (b, si, 0)),      # h (residue_short)
        pl.BlockSpec((1, C, seq_tile), lambda b, si: (b, 0, si)),      # x0 (residue_long)
        pl.BlockSpec((1, Sc, Dctx), lambda b, si: (b, 0, 0)),          # ctx
        wspec((C, C)), wspec((1, C)),                                  # sa_wo / sa_bo
        wspec((1, C)), wspec((1, C)),                                  # ln2
        wspec((C, C)), wspec((Dctx, C)), wspec((Dctx, C)),             # ca q/k/v
        wspec((C, C)), wspec((1, C)),                                  # ca_wo / ca_bo
        wspec((1, C)), wspec((1, C)),                                  # ln3
        wspec((C, 4 * C)), wspec((1, 4 * C)),                          # l1 (value half)
        wspec((C, 4 * C)), wspec((1, 4 * C)),                          # l1 (gate half)
        wspec((4 * C, C)), wspec((1, C)),                              # l2
        wspec((C, C)), wspec((1, C)),                                  # conv2
    ]
    out_cs = pl.pallas_call(
        functools.partial(_epilogue_kernel, n_head=n_head),
        out_shape=jax.ShapeDtypeStruct((B, C, S), f32),
        grid_spec=pltpu.PrefetchScalarGridSpec(
            num_scalar_prefetch=0, grid=(B, ns),
            in_specs=epi_in_specs,
            out_specs=pl.BlockSpec((1, C, seq_tile), lambda b, si: (b, 0, si)),
            scratch_shapes=[pltpu.VMEM((seq_tile, C), bf16)]),         # cross-attn heads
        compiler_params=cparams2,
        cost_estimate=ce_epi,
    )(o_ld, h_res, x_cs, ctx_bf16,
      sa_wo, sa_bo, ln2_g, ln2_b,
      ca_wq, ca_wk, ca_wv, ca_wo, ca_bo,
      ln3_g, ln3_b,
      l1a_w, l1a_b, l1g_w, l1g_b, l2_w, l2_b, c2_w, c2_b)

    return out_cs.reshape(B, C, H, W)


# --------------------------------------------------------------------------
# deterministic synthetic parameters (shapes from __init__; no checkpoint load)
# --------------------------------------------------------------------------
def init_params(key, n_head, n_embd, d_context, n_groups=32):
    C = n_embd * n_head
    ks = jax.random.split(key, 24)

    def nrm(k, shape, scale=0.05):
        return (scale * jax.random.normal(k, shape)).astype(jnp.float32)

    return dict(
        gn_g=jnp.ones((1, C), jnp.float32) + nrm(ks[0], (1, C)),
        gn_b=nrm(ks[1], (1, C)),
        c1_w=nrm(ks[2], (C, C)),           # 1x1 conv as (C_in, C_out)
        c1_b=nrm(ks[3], (1, C)),
        ln1_g=jnp.ones((1, C), jnp.float32) + nrm(ks[4], (1, C)),
        ln1_b=nrm(ks[5], (1, C)),
        sa_w_in=nrm(ks[6], (C, 3 * C)),    # no in_proj bias
        sa_w_out=nrm(ks[7], (C, C)),
        sa_b_out=nrm(ks[8], (1, C)),
        ln2_g=jnp.ones((1, C), jnp.float32) + nrm(ks[9], (1, C)),
        ln2_b=nrm(ks[10], (1, C)),
        ca_wq=nrm(ks[11], (C, C)),
        ca_wk=nrm(ks[12], (d_context, C)),
        ca_wv=nrm(ks[13], (d_context, C)),
        ca_w_out=nrm(ks[14], (C, C)),
        ca_b_out=nrm(ks[15], (1, C)),
        ln3_g=jnp.ones((1, C), jnp.float32) + nrm(ks[16], (1, C)),
        ln3_b=nrm(ks[17], (1, C)),
        l1_w=nrm(ks[18], (C, 8 * C)),
        l1_b=nrm(ks[19], (1, 8 * C)),
        l2_w=nrm(ks[20], (4 * C, C)),
        l2_b=nrm(ks[21], (1, C)),
        c2_w=nrm(ks[22], (C, C)),
        c2_b=nrm(ks[23], (1, C)),
    )


# --------------------------------------------------------------------------
# pure-JAX f32 reference (mirrors the PyTorch forward) for a correctness check
# --------------------------------------------------------------------------
def reference_forward(x_nchw, context, p, *, n_head, n_groups=32):
    B, C, H, W = x_nchw.shape
    S = H * W
    dh = C // n_head
    hp = jax.lax.Precision.HIGHEST

    def ln(x, g, b, eps=1e-5):
        mu = x.mean(-1, keepdims=True)
        var = ((x - mu) ** 2).mean(-1, keepdims=True)
        return (x - mu) / jnp.sqrt(var + eps) * g + b

    def mha(q, k, v):
        Sq, Sk = q.shape[1], k.shape[1]
        qh = q.reshape(B, Sq, n_head, dh).transpose(0, 2, 1, 3)
        kh = k.reshape(B, Sk, n_head, dh).transpose(0, 2, 1, 3)
        vh = v.reshape(B, Sk, n_head, dh).transpose(0, 2, 1, 3)
        w = jnp.einsum('bhqd,bhkd->bhqk', qh, kh, precision=hp) / math.sqrt(dh)
        w = jax.nn.softmax(w, axis=-1)
        o = jnp.einsum('bhqk,bhkd->bhqd', w, vh, precision=hp)
        return o.transpose(0, 2, 1, 3).reshape(B, Sq, C)

    residue_long = x_nchw
    xg = x_nchw.reshape(B, n_groups, (C // n_groups) * H * W)
    mu = xg.mean(-1, keepdims=True)
    var = ((xg - mu) ** 2).mean(-1, keepdims=True)
    xg = (xg - mu) / jnp.sqrt(var + 1e-6)
    xg = xg.reshape(B, C, H, W) * p['gn_g'].reshape(1, C, 1, 1) + p['gn_b'].reshape(1, C, 1, 1)
    x = jnp.einsum('bchw,cd->bdhw', xg, p['c1_w'], precision=hp) + p['c1_b'].reshape(1, C, 1, 1)
    x = x.reshape(B, C, S).transpose(0, 2, 1)
    rs = x
    x = ln(x, p['ln1_g'], p['ln1_b'])
    qkv = jnp.einsum('bsc,cd->bsd', x, p['sa_w_in'], precision=hp)
    x = mha(qkv[..., :C], qkv[..., C:2 * C], qkv[..., 2 * C:])
    x = jnp.einsum('bsc,cd->bsd', x, p['sa_w_out'], precision=hp) + p['sa_b_out']
    x = x + rs
    rs = x
    x = ln(x, p['ln2_g'], p['ln2_b'])
    q = jnp.einsum('bsc,cd->bsd', x, p['ca_wq'], precision=hp)
    k = jnp.einsum('bsc,cd->bsd', context, p['ca_wk'], precision=hp)
    v = jnp.einsum('bsc,cd->bsd', context, p['ca_wv'], precision=hp)
    x = mha(q, k, v)
    x = jnp.einsum('bsc,cd->bsd', x, p['ca_w_out'], precision=hp) + p['ca_b_out']
    x = x + rs
    rs = x
    x = ln(x, p['ln3_g'], p['ln3_b'])
    x = jnp.einsum('bsc,cd->bsd', x, p['l1_w'], precision=hp) + p['l1_b']
    a_half, gate = x[..., :4 * C], x[..., 4 * C:]
    x = a_half * jax.nn.gelu(gate, approximate=False)
    x = jnp.einsum('bsc,cd->bsd', x, p['l2_w'], precision=hp) + p['l2_b']
    x = x + rs
    x = x.transpose(0, 2, 1).reshape(B, C, H, W)
    x = jnp.einsum('bchw,cd->bdhw', x, p['c2_w'], precision=hp) + p['c2_b'].reshape(1, C, 1, 1)
    return x + residue_long


# --------------------------------------------------------------------------
if __name__ == "__main__":
    n_head, n_embd = 4, 32            # channels = 128 (divisible by 32 GroupNorm groups)
    d_context = 64
    B, Hs, Ws, Sc = 2, 16, 16, 16     # S = 256
    C = n_head * n_embd

    key = jax.random.PRNGKey(0)
    kx, kc, kp = jax.random.split(key, 3)
    x = jax.random.normal(kx, (B, C, Hs, Ws), dtype=jnp.float32)
    context = jax.random.normal(kc, (B, Sc, d_context), dtype=jnp.float32)
    params = init_params(kp, n_head, n_embd, d_context)

    ref = reference_forward(x, context, params, n_head=n_head)

    def _run_and_check(**kw):
        out = jax.block_until_ready(
            unet_attention_block(x, context, params, n_head=n_head, **kw))
        assert out.shape == x.shape
        if not bool(jnp.allclose(out, ref, atol=5e-2, rtol=5e-2)):
            err = float(jnp.max(jnp.abs(out - ref)))
            raise AssertionError(
                f"Pallas output mismatch vs JAX reference (max abs err {err:.4f})")

    try:
        # default config: resident K/V (kv_tile = S), single-buffered weight blocks
        _run_and_check(seq_tile=128)
        # also exercise the online-softmax k-loop (kv_tile < S)
        _run_and_check(seq_tile=128, kv_tile=128)
    except Exception:
        # TODO(synk): portability fallback for jax versions without BlockSpec
        # pipeline_mode / pl.Buffered support; re-run with default double-buffering.
        _run_and_check(seq_tile=128, single_buffer_weights=False)
        _run_and_check(seq_tile=128, kv_tile=128, single_buffer_weights=False)

    print("KERNEL_OK")
</pallas_src>

<mosaic_0001>
module attributes {stable_mosaic.version = 11 : i64} {
  func.func @_pre_kernel(%arg0: i32, %arg1: i32, %arg2: memref<1x128x128xf32, #tpu.memory_space<vmem>>, %arg3: memref<1x1x128xf32, #tpu.memory_space<vmem>>, %arg4: memref<1x1x128xf32, #tpu.memory_space<vmem>>, %arg5: memref<128x128xbf16, #tpu.memory_space<vmem>>, %arg6: memref<1x128xf32, #tpu.memory_space<vmem>>, %arg7: memref<1x128xf32, #tpu.memory_space<vmem>>, %arg8: memref<1x128xf32, #tpu.memory_space<vmem>>, %arg9: memref<128x128xbf16, #tpu.memory_space<vmem>>, %arg10: memref<128x128xbf16, #tpu.memory_space<vmem>>, %arg11: memref<128x128xbf16, #tpu.memory_space<vmem>>, %arg12: memref<1x128x128xbf16, #tpu.memory_space<vmem>>, %arg13: memref<1x128x128xbf16, #tpu.memory_space<vmem>>, %arg14: memref<1x128x128xbf16, #tpu.memory_space<vmem>>, %arg15: memref<1x128x128xbf16, #tpu.memory_space<vmem>>) attributes {dimension_semantics = [#tpu.dimension_semantics<parallel>, #tpu.dimension_semantics<parallel>], iteration_bounds = array<i64: 2, 2>, scalar_prefetch = 0 : i64, scratch_operands = 0 : i64, tpu.core_type = #tpu.core_type<tc>, window_params = [{transform_indices = @transform_0, window_bounds = array<i64: 1, 128, 128>}, {transform_indices = @transform_1, window_bounds = array<i64: 1, 1, 128>}, {transform_indices = @transform_2, window_bounds = array<i64: 1, 1, 128>}, {pipeline_mode = #tpu.pipeline_mode<synchronous>, transform_indices = @transform_3, window_bounds = array<i64: 128, 128>}, {pipeline_mode = #tpu.pipeline_mode<synchronous>, transform_indices = @transform_4, window_bounds = array<i64: 1, 128>}, {pipeline_mode = #tpu.pipeline_mode<synchronous>, transform_indices = @transform_5, window_bounds = array<i64: 1, 128>}, {pipeline_mode = #tpu.pipeline_mode<synchronous>, transform_indices = @transform_6, window_bounds = array<i64: 1, 128>}, {pipeline_mode = #tpu.pipeline_mode<synchronous>, transform_indices = @transform_7, window_bounds = array<i64: 128, 128>}, {pipeline_mode = #tpu.pipeline_mode<synchronous>, transform_indices = @transform_8, window_bounds = array<i64: 128, 128>}, {pipeline_mode = #tpu.pipeline_mode<synchronous>, transform_indices = @transform_9, window_bounds = array<i64: 128, 128>}, {transform_indices = @transform_10, window_bounds = array<i64: 1, 128, 128>}, {transform_indices = @transform_11, window_bounds = array<i64: 1, 128, 128>}, {transform_indices = @transform_12, window_bounds = array<i64: 1, 128, 128>}, {transform_indices = @transform_13, window_bounds = array<i64: 1, 128, 128>}]} {
    %c0 = arith.constant 0 : index
    %c0_0 = arith.constant 0 : index
    %c0_1 = arith.constant 0 : index
    %0 = vector.load %arg2[%c0, %c0_0, %c0_1] : memref<1x128x128xf32, #tpu.memory_space<vmem>>, vector<1x128x128xf32>
    %1 = vector.shape_cast %0 : vector<1x128x128xf32> to vector<128x128xf32>
    %2 = tpu.transpose %1, [1, 0] : vector<128x128xf32> -> vector<128x128xf32>
    %c0_2 = arith.constant 0 : index
    %c0_3 = arith.constant 0 : index
    %c0_4 = arith.constant 0 : index
    %3 = vector.load %arg3[%c0_2, %c0_3, %c0_4] : memref<1x1x128xf32, #tpu.memory_space<vmem>>, vector<1x1x128xf32>
    %4 = vector.shape_cast %3 : vector<1x1x128xf32> to vector<1x128xf32>
    %5 = vector.broadcast %4 : vector<1x128xf32> to vector<128x128xf32>
    %6 = arith.mulf %2, %5 : vector<128x128xf32>
    %c0_5 = arith.constant 0 : index
    %c0_6 = arith.constant 0 : index
    %c0_7 = arith.constant 0 : index
    %7 = vector.load %arg4[%c0_5, %c0_6, %c0_7] : memref<1x1x128xf32, #tpu.memory_space<vmem>>, vector<1x1x128xf32>
    %8 = vector.shape_cast %7 : vector<1x1x128xf32> to vector<1x128xf32>
    %9 = vector.broadcast %8 : vector<1x128xf32> to vector<128x128xf32>
    %10 = arith.addf %6, %9 : vector<128x128xf32>
    %11 = arith.truncf %10 : vector<128x128xf32> to vector<128x128xbf16>
    %c0_8 = arith.constant 0 : index
    %c0_9 = arith.constant 0 : index
    %12 = vector.load %arg5[%c0_8, %c0_9] : memref<128x128xbf16, #tpu.memory_space<vmem>>, vector<128x128xbf16>
    %cst = arith.constant dense<0.000000e+00> : vector<128x128xf32>
    %13 = tpu.matmul %11, %12, %cst {dimension_numbers = #tpu.dot_dimension_numbers<[1], [0], [0], [1], [0, 0, 1, 1], [], []>} : vector<128x128xbf16>, vector<128x128xbf16>, vector<128x128xf32> -> vector<128x128xf32>
    %c0_10 = arith.constant 0 : index
    %c0_11 = arith.constant 0 : index
    %14 = vector.load %arg6[%c0_10, %c0_11] : memref<1x128xf32, #tpu.memory_space<vmem>>, vector<1x128xf32>
    %15 = vector.broadcast %14 : vector<1x128xf32> to vector<128x128xf32>
    %16 = arith.addf %13, %15 : vector<128x128xf32>
    %17 = arith.truncf %16 : vector<128x128xf32> to vector<128x128xbf16>
    %c0_12 = arith.constant 0 : index
    %c0_13 = arith.constant 0 : index
    %c0_14 = arith.constant 0 : index
    %18 = vector.load %arg12[%c0_12, %c0_13, %c0_14] : memref<1x128x128xbf16, #tpu.memory_space<vmem>>, vector<1x128x128xbf16>
    %19 = vector.shape_cast %18 : vector<1x128x128xbf16> to vector<128x128xbf16>
    %20 = vector.shape_cast %17 : vector<128x128xbf16> to vector<1x128x128xbf16>
    tpu.vector_store %arg12[%c0_12, %c0_13, %c0_14], %20 {strides = array<i32>} : memref<1x128x128xbf16, #tpu.memory_space<vmem>>, vector<1x128x128xbf16>,
    %c0_15 = arith.constant 0 : index
    %c0_16 = arith.constant 0 : index
    %21 = vector.load %arg7[%c0_15, %c0_16] : memref<1x128xf32, #tpu.memory_space<vmem>>, vector<1x128xf32>
    %c0_17 = arith.constant 0 : index
    %c0_18 = arith.constant 0 : index
    %22 = vector.load %arg8[%c0_17, %c0_18] : memref<1x128xf32, #tpu.memory_space<vmem>>, vector<1x128xf32>
    %cst_19 = arith.constant dense<0.000000e+00> : vector<128xf32>
    %23 = vector.multi_reduction <add>, %16, %cst_19 [1] : vector<128x128xf32> to vector<128xf32>
    %24 = vector.shape_cast %23 : vector<128xf32> to vector<128x1xf32>
    %cst_20 = arith.constant 1.280000e+02 : f32
    %25 = vector.broadcast %cst_20 : f32 to vector<128x1xf32>
    %26 = arith.divf %24, %25 : vector<128x1xf32>
    %27 = vector.broadcast %26 : vector<128x1xf32> to vector<128x128xf32>
    %28 = arith.subf %16, %27 : vector<128x128xf32>
    %29 = arith.mulf %28, %28 : vector<128x128xf32>
    %cst_21 = arith.constant dense<0.000000e+00> : vector<128xf32>
    %30 = vector.multi_reduction <add>, %29, %cst_21 [1] : vector<128x128xf32> to vector<128xf32>
    %31 = vector.shape_cast %30 : vector<128xf32> to vector<128x1xf32>
    %cst_22 = arith.constant 1.280000e+02 : f32
    %32 = vector.broadcast %cst_22 : f32 to vector<128x1xf32>
    %33 = arith.divf %31, %32 : vector<128x1xf32>
    %cst_23 = arith.constant 9.99999974E-6 : f32
    %34 = vector.broadcast %cst_23 : f32 to vector<128x1xf32>
    %35 = arith.addf %33, %34 : vector<128x1xf32>
    %36 = math.rsqrt %35 : vector<128x1xf32>
    %37 = vector.broadcast %36 : vector<128x1xf32> to vector<128x128xf32>
    %38 = arith.mulf %28, %37 : vector<128x128xf32>
    %39 = vector.broadcast %21 : vector<1x128xf32> to vector<128x128xf32>
    %40 = arith.mulf %38, %39 : vector<128x128xf32>
    %41 = vector.broadcast %22 : vector<1x128xf32> to vector<128x128xf32>
    %42 = arith.addf %40, %41 : vector<128x128xf32>
    %43 = arith.truncf %42 : vector<128x128xf32> to vector<128x128xbf16>
    %c0_24 = arith.constant 0 : index
    %c0_25 = arith.constant 0 : index
    %44 = vector.load %arg9[%c0_24, %c0_25] : memref<128x128xbf16, #tpu.memory_space<vmem>>, vector<128x128xbf16>
    %cst_26 = arith.constant dense<0.000000e+00> : vector<128x128xf32>
    %45 = tpu.matmul %43, %44, %cst_26 {dimension_numbers = #tpu.dot_dimension_numbers<[1], [0], [0], [1], [0, 0, 1, 1], [], []>} : vector<128x128xbf16>, vector<128x128xbf16>, vector<128x128xf32> -> vector<128x128xf32>
    %46 = arith.truncf %45 : vector<128x128xf32> to vector<128x128xbf16>
    %c0_27 = arith.constant 0 : index
    %c0_28 = arith.constant 0 : index
    %c0_29 = arith.constant 0 : index
    %47 = vector.load %arg13[%c0_27, %c0_28, %c0_29] : memref<1x128x128xbf16, #tpu.memory_space<vmem>>, vector<1x128x128xbf16>
    %48 = vector.shape_cast %47 : vector<1x128x128xbf16> to vector<128x128xbf16>
    %49 = vector.shape_cast %46 : vector<128x128xbf16> to vector<1x128x128xbf16>
    tpu.vector_store %arg13[%c0_27, %c0_28, %c0_29], %49 {strides = array<i32>} : memref<1x128x128xbf16, #tpu.memory_space<vmem>>, vector<1x128x128xbf16>,
    %c0_30 = arith.constant 0 : index
    %c0_31 = arith.constant 0 : index
    %50 = vector.load %arg10[%c0_30, %c0_31] : memref<128x128xbf16, #tpu.memory_space<vmem>>, vector<128x128xbf16>
    %cst_32 = arith.constant dense<0.000000e+00> : vector<128x128xf32>
    %51 = tpu.matmul %43, %50, %cst_32 {dimension_numbers = #tpu.dot_dimension_numbers<[1], [0], [0], [1], [0, 0, 1, 1], [], []>} : vector<128x128xbf16>, vector<128x128xbf16>, vector<128x128xf32> -> vector<128x128xf32>
    %52 = arith.truncf %51 : vector<128x128xf32> to vector<128x128xbf16>
    %c0_33 = arith.constant 0 : index
    %c0_34 = arith.constant 0 : index
    %c0_35 = arith.constant 0 : index
    %53 = vector.load %arg14[%c0_33, %c0_34, %c0_35] : memref<1x128x128xbf16, #tpu.memory_space<vmem>>, vector<1x128x128xbf16>
    %54 = vector.shape_cast %53 : vector<1x128x128xbf16> to vector<128x128xbf16>
    %55 = vector.shape_cast %52 : vector<128x128xbf16> to vector<1x128x128xbf16>
    tpu.vector_store %arg14[%c0_33, %c0_34, %c0_35], %55 {strides = array<i32>} : memref<1x128x128xbf16, #tpu.memory_space<vmem>>, vector<1x128x128xbf16>,
    %c0_36 = arith.constant 0 : index
    %c0_37 = arith.constant 0 : index
    %56 = vector.load %arg11[%c0_36, %c0_37] : memref<128x128xbf16, #tpu.memory_space<vmem>>, vector<128x128xbf16>
    %cst_38 = arith.constant dense<0.000000e+00> : vector<128x128xf32>
    %57 = tpu.matmul %43, %56, %cst_38 {dimension_numbers = #tpu.dot_dimension_numbers<[1], [0], [0], [1], [0, 0, 1, 1], [], []>} : vector<128x128xbf16>, vector<128x128xbf16>, vector<128x128xf32> -> vector<128x128xf32>
    %58 = arith.truncf %57 : vector<128x128xf32> to vector<128x128xbf16>
    %c0_39 = arith.constant 0 : index
    %c0_40 = arith.constant 0 : index
    %c0_41 = arith.constant 0 : index
    %59 = vector.load %arg15[%c0_39, %c0_40, %c0_41] : memref<1x128x128xbf16, #tpu.memory_space<vmem>>, vector<1x128x128xbf16>
    %60 = vector.shape_cast %59 : vector<1x128x128xbf16> to vector<128x128xbf16>
    %61 = vector.shape_cast %58 : vector<128x128xbf16> to vector<1x128x128xbf16>
    tpu.vector_store %arg15[%c0_39, %c0_40, %c0_41], %61 {strides = array<i32>} : memref<1x128x128xbf16, #tpu.memory_space<vmem>>, vector<1x128x128xbf16>,
    return
  }
  func.func @transform_0(%arg0: i32, %arg1: i32) -> (i32, i32, i32) {
    %c0_i32 = arith.constant 0 : i32
    %c0_i32_0 = arith.constant 0 : i32
    return %arg0, %c0_i32, %arg1 : i32, i32, i32
  }
  func.func @transform_1(%arg0: i32, %arg1: i32) -> (i32, i32, i32) {
    %c0_i32 = arith.constant 0 : i32
    %c0_i32_0 = arith.constant 0 : i32
    %c0_i32_1 = arith.constant 0 : i32
    return %arg0, %c0_i32, %c0_i32_0 : i32, i32, i32
  }
  func.func @transform_2(%arg0: i32, %arg1: i32) -> (i32, i32, i32) {
    %c0_i32 = arith.constant 0 : i32
    %c0_i32_0 = arith.constant 0 : i32
    %c0_i32_1 = arith.constant 0 : i32
    return %arg0, %c0_i32, %c0_i32_0 : i32, i32, i32
  }
  func.func @transform_3(%arg0: i32, %arg1: i32) -> (i32, i32) {
    %c0_i32 = arith.constant 0 : i32
    %c0_i32_0 = arith.constant 0 : i32
    %c0_i32_1 = arith.constant 0 : i32
    return %c0_i32, %c0_i32_0 : i32, i32
  }
  func.func @transform_4(%arg0: i32, %arg1: i32) -> (i32, i32) {
    %c0_i32 = arith.constant 0 : i32
    %c0_i32_0 = arith.constant 0 : i32
    %c0_i32_1 = arith.constant 0 : i32
    return %c0_i32, %c0_i32_0 : i32, i32
  }
  func.func @transform_5(%arg0: i32, %arg1: i32) -> (i32, i32) {
    %c0_i32 = arith.constant 0 : i32
    %c0_i32_0 = arith.constant 0 : i32
    %c0_i32_1 = arith.constant 0 : i32
    return %c0_i32, %c0_i32_0 : i32, i32
  }
  func.func @transform_6(%arg0: i32, %arg1: i32) -> (i32, i32) {
    %c0_i32 = arith.constant 0 : i32
    %c0_i32_0 = arith.constant 0 : i32
    %c0_i32_1 = arith.constant 0 : i32
    return %c0_i32, %c0_i32_0 : i32, i32
  }
  func.func @transform_7(%arg0: i32, %arg1: i32) -> (i32, i32) {
    %c0_i32 = arith.constant 0 : i32
    %c0_i32_0 = arith.constant 0 : i32
    %c0_i32_1 = arith.constant 0 : i32
    return %c0_i32, %c0_i32_0 : i32, i32
  }
  func.func @transform_8(%arg0: i32, %arg1: i32) -> (i32, i32) {
    %c0_i32 = arith.constant 0 : i32
    %c0_i32_0 = arith.constant 0 : i32
    %c0_i32_1 = arith.constant 0 : i32
    return %c0_i32, %c0_i32_0 : i32, i32
  }
  func.func @transform_9(%arg0: i32, %arg1: i32) -> (i32, i32) {
    %c0_i32 = arith.constant 0 : i32
    %c0_i32_0 = arith.constant 0 : i32
    %c0_i32_1 = arith.constant 0 : i32
    return %c0_i32, %c0_i32_0 : i32, i32
  }
  func.func @transform_10(%arg0: i32, %arg1: i32) -> (i32, i32, i32) {
    %c0_i32 = arith.constant 0 : i32
    %c0_i32_0 = arith.constant 0 : i32
    return %arg0, %arg1, %c0_i32 : i32, i32, i32
  }
  func.func @transform_11(%arg0: i32, %arg1: i32) -> (i32, i32, i32) {
    %c0_i32 = arith.constant 0 : i32
    %c0_i32_0 = arith.constant 0 : i32
    return %arg0, %arg1, %c0_i32 : i32, i32, i32
  }
  func.func @transform_12(%arg0: i32, %arg1: i32) -> (i32, i32, i32) {
    %c0_i32 = arith.constant 0 : i32
    %c0_i32_0 = arith.constant 0 : i32
    return %arg0, %arg1, %c0_i32 : i32, i32, i32
  }
  func.func @transform_13(%arg0: i32, %arg1: i32) -> (i32, i32, i32) {
    %c0_i32 = arith.constant 0 : i32
    %c0_i32_0 = arith.constant 0 : i32
    return %arg0, %arg1, %c0_i32 : i32, i32, i32
  }
}

module attributes {stable_mosaic.version = 11 : i64} {
  func.func @_pre_kernel(%arg0: i32, %arg1: i32, %arg2: memref<1x128x128xf32, #tpu.memory_space<vmem>>, %arg3: memref<1x1x128xf32, #tpu.memory_space<vmem>>, %arg4: memref<1x1x128xf32, #tpu.memory_space<vmem>>, %arg5: memref<128x128xbf16, #tpu.memory_space<vmem>>, %arg6: memref<1x128xf32, #tpu.memory_space<vmem>>, %arg7: memref<1x128xf32, #tpu.memory_space<vmem>>, %arg8: memref<1x128xf32, #tpu.memory_space<vmem>>, %arg9: memref<128x128xbf16, #tpu.memory_space<vmem>>, %arg10: memref<128x128xbf16, #tpu.memory_space<vmem>>, %arg11: memref<128x128xbf16, #tpu.memory_space<vmem>>, %arg12: memref<1x128x128xbf16, #tpu.memory_space<vmem>>, %arg13: memref<1x128x128xbf16, #tpu.memory_space<vmem>>, %arg14: memref<1x128x128xbf16, #tpu.memory_space<vmem>>, %arg15: memref<1x128x128xbf16, #tpu.memory_space<vmem>>) attributes {dimension_semantics = [#tpu.dimension_semantics<parallel>, #tpu.dimension_semantics<parallel>], iteration_bounds = array<i64: 2, 2>, scalar_prefetch = 0 : i64, scratch_operands = 0 : i64, tpu.core_type = #tpu.core_type<tc>, window_params = [{transform_indices = @transform_0, window_bounds = array<i64: 1, 128, 128>}, {transform_indices = @transform_1, window_bounds = array<i64: 1, 1, 128>}, {transform_indices = @transform_2, window_bounds = array<i64: 1, 1, 128>}, {pipeline_mode = #tpu.pipeline_mode<synchronous>, transform_indices = @transform_3, window_bounds = array<i64: 128, 128>}, {pipeline_mode = #tpu.pipeline_mode<synchronous>, transform_indices = @transform_4, window_bounds = array<i64: 1, 128>}, {pipeline_mode = #tpu.pipeline_mode<synchronous>, transform_indices = @transform_5, window_bounds = array<i64: 1, 128>}, {pipeline_mode = #tpu.pipeline_mode<synchronous>, transform_indices = @transform_6, window_bounds = array<i64: 1, 128>}, {pipeline_mode = #tpu.pipeline_mode<synchronous>, transform_indices = @transform_7, window_bounds = array<i64: 128, 128>}, {pipeline_mode = #tpu.pipeline_mode<synchronous>, transform_indices = @transform_8, window_bounds = array<i64: 128, 128>}, {pipeline_mode = #tpu.pipeline_mode<synchronous>, transform_indices = @transform_9, window_bounds = array<i64: 128, 128>}, {transform_indices = @transform_10, window_bounds = array<i64: 1, 128, 128>}, {transform_indices = @transform_11, window_bounds = array<i64: 1, 128, 128>}, {transform_indices = @transform_12, window_bounds = array<i64: 1, 128, 128>}, {transform_indices = @transform_13, window_bounds = array<i64: 1, 128, 128>}]} {
    %c0 = arith.constant 0 : index
    %c0_0 = arith.constant 0 : index
    %c0_1 = arith.constant 0 : index
    %0 = vector.load %arg2[%c0, %c0_0, %c0_1] : memref<1x128x128xf32, #tpu.memory_space<vmem>>, vector<1x128x128xf32>
    %1 = vector.shape_cast %0 : vector<1x128x128xf32> to vector<128x128xf32>
    %2 = tpu.transpose %1, [1, 0] : vector<128x128xf32> -> vector<128x128xf32>
    %c0_2 = arith.constant 0 : index
    %c0_3 = arith.constant 0 : index
    %c0_4 = arith.constant 0 : index
    %3 = vector.load %arg3[%c0_2, %c0_3, %c0_4] : memref<1x1x128xf32, #tpu.memory_space<vmem>>, vector<1x1x128xf32>
    %4 = vector.shape_cast %3 : vector<1x1x128xf32> to vector<1x128xf32>
    %5 = vector.broadcast %4 : vector<1x128xf32> to vector<128x128xf32>
    %6 = arith.mulf %2, %5 : vector<128x128xf32>
    %c0_5 = arith.constant 0 : index
    %c0_6 = arith.constant 0 : index
    %c0_7 = arith.constant 0 : index
    %7 = vector.load %arg4[%c0_5, %c0_6, %c0_7] : memref<1x1x128xf32, #tpu.memory_space<vmem>>, vector<1x1x128xf32>
    %8 = vector.shape_cast %7 : vector<1x1x128xf32> to vector<1x128xf32>
    %9 = vector.broadcast %8 : vector<1x128xf32> to vector<128x128xf32>
    %10 = arith.addf %6, %9 : vector<128x128xf32>
    %11 = arith.truncf %10 : vector<128x128xf32> to vector<128x128xbf16>
    %c0_8 = arith.constant 0 : index
    %c0_9 = arith.constant 0 : index
    %12 = vector.load %arg5[%c0_8, %c0_9] : memref<128x128xbf16, #tpu.memory_space<vmem>>, vector<128x128xbf16>
    %cst = arith.constant dense<0.000000e+00> : vector<128x128xf32>
    %13 = tpu.matmul %11, %12, %cst {dimension_numbers = #tpu.dot_dimension_numbers<[1], [0], [0], [1], [0, 0, 1, 1], [], []>} : vector<128x128xbf16>, vector<128x128xbf16>, vector<128x128xf32> -> vector<128x128xf32>
    %c0_10 = arith.constant 0 : index
    %c0_11 = arith.constant 0 : index
    %14 = vector.load %arg6[%c0_10, %c0_11] : memref<1x128xf32, #tpu.memory_space<vmem>>, vector<1x128xf32>
    %15 = vector.broadcast %14 : vector<1x128xf32> to vector<128x128xf32>
    %16 = arith.addf %13, %15 : vector<128x128xf32>
    %17 = arith.truncf %16 : vector<128x128xf32> to vector<128x128xbf16>
    %c0_12 = arith.constant 0 : index
    %c0_13 = arith.constant 0 : index
    %c0_14 = arith.constant 0 : index
    %18 = vector.load %arg12[%c0_12, %c0_13, %c0_14] : memref<1x128x128xbf16, #tpu.memory_space<vmem>>, vector<1x128x128xbf16>
    %19 = vector.shape_cast %18 : vector<1x128x128xbf16> to vector<128x128xbf16>
    %20 = vector.shape_cast %17 : vector<128x128xbf16> to vector<1x128x128xbf16>
    tpu.vector_store %arg12[%c0_12, %c0_13, %c0_14], %20 {strides = array<i32>} : memref<1x128x128xbf16, #tpu.memory_space<vmem>>, vector<1x128x128xbf16>,
    %c0_15 = arith.constant 0 : index
    %c0_16 = arith.constant 0 : index
    %21 = vector.load %arg7[%c0_15, %c0_16] : memref<1x128xf32, #tpu.memory_space<vmem>>, vector<1x128xf32>
    %c0_17 = arith.constant 0 : index
    %c0_18 = arith.constant 0 : index
    %22 = vector.load %arg8[%c0_17, %c0_18] : memref<1x128xf32, #tpu.memory_space<vmem>>, vector<1x128xf32>
    %cst_19 = arith.constant dense<0.000000e+00> : vector<128xf32>
    %23 = vector.multi_reduction <add>, %16, %cst_19 [1] : vector<128x128xf32> to vector<128xf32>
    %24 = vector.shape_cast %23 : vector<128xf32> to vector<128x1xf32>
    %cst_20 = arith.constant 1.280000e+02 : f32
    %25 = vector.broadcast %cst_20 : f32 to vector<128x1xf32>
    %26 = arith.divf %24, %25 : vector<128x1xf32>
    %27 = vector.broadcast %26 : vector<128x1xf32> to vector<128x128xf32>
    %28 = arith.subf %16, %27 : vector<128x128xf32>
    %29 = arith.mulf %28, %28 : vector<128x128xf32>
    %cst_21 = arith.constant dense<0.000000e+00> : vector<128xf32>
    %30 = vector.multi_reduction <add>, %29, %cst_21 [1] : vector<128x128xf32> to vector<128xf32>
    %31 = vector.shape_cast %30 : vector<128xf32> to vector<128x1xf32>
    %cst_22 = arith.constant 1.280000e+02 : f32
    %32 = vector.broadcast %cst_22 : f32 to vector<128x1xf32>
    %33 = arith.divf %31, %32 : vector<128x1xf32>
    %cst_23 = arith.constant 9.99999974E-6 : f32
    %34 = vector.broadcast %cst_23 : f32 to vector<128x1xf32>
    %35 = arith.addf %33, %34 : vector<128x1xf32>
    %36 = math.rsqrt %35 : vector<128x1xf32>
    %37 = vector.broadcast %36 : vector<128x1xf32> to vector<128x128xf32>
    %38 = arith.mulf %28, %37 : vector<128x128xf32>
    %39 = vector.broadcast %21 : vector<1x128xf32> to vector<128x128xf32>
    %40 = arith.mulf %38, %39 : vector<128x128xf32>
    %41 = vector.broadcast %22 : vector<1x128xf32> to vector<128x128xf32>
    %42 = arith.addf %40, %41 : vector<128x128xf32>
    %43 = arith.truncf %42 : vector<128x128xf32> to vector<128x128xbf16>
    %c0_24 = arith.constant 0 : index
    %c0_25 = arith.constant 0 : index
    %44 = vector.load %arg9[%c0_24, %c0_25] : memref<128x128xbf16, #tpu.memory_space<vmem>>, vector<128x128xbf16>
    %cst_26 = arith.constant dense<0.000000e+00> : vector<128x128xf32>
    %45 = tpu.matmul %43, %44, %cst_26 {dimension_numbers = #tpu.dot_dimension_numbers<[1], [0], [0], [1], [0, 0, 1, 1], [], []>} : vector<128x128xbf16>, vector<128x128xbf16>, vector<128x128xf32> -> vector<128x128xf32>
    %46 = arith.truncf %45 : vector<128x128xf32> to vector<128x128xbf16>
    %c0_27 = arith.constant 0 : index
    %c0_28 = arith.constant 0 : index
    %c0_29 = arith.constant 0 : index
    %47 = vector.load %arg13[%c0_27, %c0_28, %c0_29] : memref<1x128x128xbf16, #tpu.memory_space<vmem>>, vector<1x128x128xbf16>
    %48 = vector.shape_cast %47 : vector<1x128x128xbf16> to vector<128x128xbf16>
    %49 = vector.shape_cast %46 : vector<128x128xbf16> to vector<1x128x128xbf16>
    tpu.vector_store %arg13[%c0_27, %c0_28, %c0_29], %49 {strides = array<i32>} : memref<1x128x128xbf16, #tpu.memory_space<vmem>>, vector<1x128x128xbf16>,
    %c0_30 = arith.constant 0 : index
    %c0_31 = arith.constant 0 : index
    %50 = vector.load %arg10[%c0_30, %c0_31] : memref<128x128xbf16, #tpu.memory_space<vmem>>, vector<128x128xbf16>
    %cst_32 = arith.constant dense<0.000000e+00> : vector<128x128xf32>
    %51 = tpu.matmul %43, %50, %cst_32 {dimension_numbers = #tpu.dot_dimension_numbers<[1], [0], [0], [1], [0, 0, 1, 1], [], []>} : vector<128x128xbf16>, vector<128x128xbf16>, vector<128x128xf32> -> vector<128x128xf32>
    %52 = arith.truncf %51 : vector<128x128xf32> to vector<128x128xbf16>
    %c0_33 = arith.constant 0 : index
    %c0_34 = arith.constant 0 : index
    %c0_35 = arith.constant 0 : index
    %53 = vector.load %arg14[%c0_33, %c0_34, %c0_35] : memref<1x128x128xbf16, #tpu.memory_space<vmem>>, vector<1x128x128xbf16>
    %54 = vector.shape_cast %53 : vector<1x128x128xbf16> to vector<128x128xbf16>
    %55 = vector.shape_cast %52 : vector<128x128xbf16> to vector<1x128x128xbf16>
    tpu.vector_store %arg14[%c0_33, %c0_34, %c0_35], %55 {strides = array<i32>} : memref<1x128x128xbf16, #tpu.memory_space<vmem>>, vector<1x128x128xbf16>,
    %c0_36 = arith.constant 0 : index
    %c0_37 = arith.constant 0 : index
    %56 = vector.load %arg11[%c0_36, %c0_37] : memref<128x128xbf16, #tpu.memory_space<vmem>>, vector<128x128xbf16>
    %cst_38 = arith.constant dense<0.000000e+00> : vector<128x128xf32>
    %57 = tpu.matmul %43, %56, %cst_38 {dimension_numbers = #tpu.dot_dimension_numbers<[1], [0], [0], [1], [0, 0, 1, 1], [], []>} : vector<128x128xbf16>, vector<128x128xbf16>, vector<128x128xf32> -> vector<128x128xf32>
    %58 = arith.truncf %57 : vector<128x128xf32> to vector<128x128xbf16>
    %c0_39 = arith.constant 0 : index
    %c0_40 = arith.constant 0 : index
    %c0_41 = arith.constant 0 : index
    %59 = vector.load %arg15[%c0_39, %c0_40, %c0_41] : memref<1x128x128xbf16, #tpu.memory_space<vmem>>, vector<1x128x128xbf16>
    %60 = vector.shape_cast %59 : vector<1x128x128xbf16> to vector<128x128xbf16>
    %61 = vector.shape_cast %58 : vector<128x128xbf16> to vector<1x128x128xbf16>
    tpu.vector_store %arg15[%c0_39, %c0_40, %c0_41], %61 {strides = array<i32>} : memref<1x128x128xbf16, #tpu.memory_space<vmem>>, vector<1x128x128xbf16>,
    return
  }
  func.func @transform_0(%arg0: i32, %arg1: i32) -> (i32, i32, i32) {
    %c0_i32 = arith.constant 0 : i32
    %c0_i32_0 = arith.constant 0 : i32
    return %arg0, %c0_i32, %arg1 : i32, i32, i32
  }
  func.func @transform_1(%arg0: i32, %arg1: i32) -> (i32, i32, i32) {
    %c0_i32 = arith.constant 0 : i32
    %c0_i32_0 = arith.constant 0 : i32
    %c0_i32_1 = arith.constant 0 : i32
    return %arg0, %c0_i32, %c0_i32_0 : i32, i32, i32
  }
  func.func @transform_2(%arg0: i32, %arg1: i32) -> (i32, i32, i32) {
    %c0_i32 = arith.constant 0 : i32
    %c0_i32_0 = arith.constant 0 : i32
    %c0_i32_1 = arith.constant 0 : i32
    return %arg0, %c0_i32, %c0_i32_0 : i32, i32, i32
  }
  func.func @transform_3(%arg0: i32, %arg1: i32) -> (i32, i32) {
    %c0_i32 = arith.constant 0 : i32
    %c0_i32_0 = arith.constant 0 : i32
    %c0_i32_1 = arith.constant 0 : i32
    return %c0_i32, %c0_i32_0 : i32, i32
  }
  func.func @transform_4(%arg0: i32, %arg1: i32) -> (i32, i32) {
    %c0_i32 = arith.constant 0 : i32
    %c0_i32_0 = arith.constant 0 : i32
    %c0_i32_1 = arith.constant 0 : i32
    return %c0_i32, %c0_i32_0 : i32, i32
  }
  func.func @transform_5(%arg0: i32, %arg1: i32) -> (i32, i32) {
    %c0_i32 = arith.constant 0 : i32
    %c0_i32_0 = arith.constant 0 : i32
    %c0_i32_1 = arith.constant 0 : i32
    return %c0_i32, %c0_i32_0 : i32, i32
  }
  func.func @transform_6(%arg0: i32, %arg1: i32) -> (i32, i32) {
    %c0_i32 = arith.constant 0 : i32
    %c0_i32_0 = arith.constant 0 : i32
    %c0_i32_1 = arith.constant 0 : i32
    return %c0_i32, %c0_i32_0 : i32, i32
  }
  func.func @transform_7(%arg0: i32, %arg1: i32) -> (i32, i32) {
    %c0_i32 = arith.constant 0 : i32
    %c0_i32_0 = arith.constant 0 : i32
    %c0_i32_1 = arith.constant 0 : i32
    return %c0_i32, %c0_i32_0 : i32, i32
  }
  func.func @transform_8(%arg0: i32, %arg1: i32) -> (i32, i32) {
    %c0_i32 = arith.constant 0 : i32
    %c0_i32_0 = arith.constant 0 : i32
    %c0_i32_1 = arith.constant 0 : i32
    return %c0_i32, %c0_i32_0 : i32, i32
  }
  func.func @transform_9(%arg0: i32, %arg1: i32) -> (i32, i32) {
    %c0_i32 = arith.constant 0 : i32
    %c0_i32_0 = arith.constant 0 : i32
    %c0_i32_1 = arith.constant 0 : i32
    return %c0_i32, %c0_i32_0 : i32, i32
  }
  func.func @transform_10(%arg0: i32, %arg1: i32) -> (i32, i32, i32) {
    %c0_i32 = arith.constant 0 : i32
    %c0_i32_0 = arith.constant 0 : i32
    return %arg0, %arg1, %c0_i32 : i32, i32, i32
  }
  func.func @transform_11(%arg0: i32, %arg1: i32) -> (i32, i32, i32) {
    %c0_i32 = arith.constant 0 : i32
    %c0_i32_0 = arith.constant 0 : i32
    return %arg0, %arg1, %c0_i32 : i32, i32, i32
  }
  func.func @transform_12(%arg0: i32, %arg1: i32) -> (i32, i32, i32) {
    %c0_i32 = arith.constant 0 : i32
    %c0_i32_0 = arith.constant 0 : i32
    return %arg0, %arg1, %c0_i32 : i32, i32, i32
  }
  func.func @transform_13(%arg0: i32, %arg1: i32) -> (i32, i32, i32) {
    %c0_i32 = arith.constant 0 : i32
    %c0_i32_0 = arith.constant 0 : i32
    return %arg0, %arg1, %c0_i32 : i32, i32, i32
  }
}

</mosaic_0001>

<llo_original>
// kernel: tpu_custom_call.1
$region0: #{tpu_custom_call.1}
  #allocation0 [shape = 'u32[]', space=smem, size = 0x4, offset = 0x4, fixed_abs, tag = 'smem constant byte address 0x4 - core index']
  #allocation1 [shape = 'u32[144,128]{1,0:T(1,128)}', space=vmem, size = 0x12000, scoped, tag = 'internal scratch']
  %s0 = inlined_call_operand.hbm [shape: f32[2,128,256], index: 0, kind: input, shape index: {}]
  %s1 = inlined_call_operand.hbm [shape: f32[2,1,128], index: 1, kind: input, shape index: {}]
  %s2 = inlined_call_operand.vmem [shape: f32[2,1,128], index: 2, kind: input, shape index: {}]
  %s3 = inlined_call_operand.hbm [shape: bf16[128,128], index: 3, kind: input, shape index: {}]
  %s4 = inlined_call_operand.vmem [shape: f32[1,128], index: 4, kind: input, shape index: {}]
  %s5 = inlined_call_operand.vmem [shape: f32[1,128], index: 5, kind: input, shape index: {}]
  %s6 = inlined_call_operand.vmem [shape: f32[1,128], index: 6, kind: input, shape index: {}]
  %s7 = inlined_call_operand.hbm [shape: bf16[128,128], index: 7, kind: input, shape index: {}]
  %s8 = inlined_call_operand.hbm [shape: bf16[128,128], index: 8, kind: input, shape index: {}]
  %s9 = inlined_call_operand.hbm [shape: bf16[128,128], index: 9, kind: input, shape index: {}]
  %s10 = inlined_call_operand.hbm [shape: bf16[2,256,128], index: 10, kind: output, shape index: {0}]
  %s11 = inlined_call_operand.hbm [shape: bf16[2,256,128], index: 11, kind: output, shape index: {1}]
  %s12 = inlined_call_operand.hbm [shape: bf16[2,256,128], index: 12, kind: output, shape index: {2}]
  %s13 = inlined_call_operand.hbm [shape: bf16[2,256,128], index: 13, kind: output, shape index: {3}]
  %14 = xla_tuple %s10, %s11, %s12, %s13
  %s15 = sld [smem:[#allocation0]]
  $region121: #{tpu_custom_call.1} parent=0
    _
  %s17 = ssub.s32 1, %s15
  %s18 = scalar_select 0, %s17, %s15
  $region1: #{tpu_custom_call.1} parent=0
    #allocation2 [shape = 'u8[131072]{0}', space=vmem, size = 0x20000, scoped, tag = 'input window, operand 0']
    #allocation3 [shape = 's32[2]{0}', space=sflag, size = 0x8, scoped, tag = 'scoped memory for tpu_custom_call.1']
    #allocation4 [shape = 's32[2]{0}', space=sflag, size = 0x8, scoped, tag = 'scoped memory for tpu_custom_call.1']
    #allocation5 [shape = 'u8[1024]{0}', space=vmem, size = 0x400, scoped, tag = 'input window, operand 1']
    #allocation6 [shape = 's32[2]{0}', space=sflag, size = 0x8, scoped, tag = 'scoped memory for tpu_custom_call.1']
    #allocation7 [shape = 'u8[32768]{0}', space=vmem, size = 0x8000, scoped, tag = 'input window, operand 3, single buffered']
    #allocation8 [shape = 'u8[32768]{0}', space=vmem, size = 0x8000, scoped, tag = 'input window, operand 7, single buffered']
    #allocation9 [shape = 's32[1]{0}', space=sflag, size = 0x4, scoped, tag = 'scoped memory for tpu_custom_call.1']
    #allocation10 [shape = 'u8[32768]{0}', space=vmem, size = 0x8000, scoped, tag = 'input window, operand 8, single buffered']
    #allocation11 [shape = 'u8[32768]{0}', space=vmem, size = 0x8000, scoped, tag = 'input window, operand 9, single buffered']
    #allocation12 [shape = 's32[1]{0}', space=sflag, size = 0x4, scoped, tag = 'scoped memory for tpu_custom_call.1']
    #allocation13 [shape = 'u8[65536]{0}', space=vmem, size = 0x10000, scoped, tag = 'output window, operand 0']
    #allocation14 [shape = 'u8[65536]{0}', space=vmem, size = 0x10000, scoped, tag = 'output window, operand 1']
    #allocation15 [shape = 's32[2]{0}', space=sflag, size = 0x8, scoped, tag = 'scoped memory for tpu_custom_call.1']
    #allocation16 [shape = 'u8[65536]{0}', space=vmem, size = 0x10000, scoped, tag = 'output window, operand 2']
    #allocation17 [shape = 'u8[65536]{0}', space=vmem, size = 0x10000, scoped, tag = 'output window, operand 3']
    #allocation18 [shape = 's32[2]{0}', space=sflag, size = 0x8, scoped, tag = 'scoped memory for tpu_custom_call.1']
    %19 = vsyncpa [#allocation3], 0
    %s20 = scalar_lea.sflag [#allocation3], 1
    %21 = vsyncpa %s20, 0
    %22 = vsyncpa [#allocation6], 0
    %s23 = scalar_lea.sflag [#allocation6], 1
    %24 = vsyncpa %s23, 0
    %25 = vsyncpa [#allocation9], 0
    %26 = vsyncpa [#allocation12], 0
    %27 = vsyncpa [#allocation4], 0
    %s28 = scalar_lea.sflag [#allocation4], 1
    %29 = vsyncpa %s28, 0
    %30 = vsyncpa [#allocation15], 0
    %s31 = scalar_lea.sflag [#allocation15], 1
    %32 = vsyncpa %s31, 0
    %33 = vsyncpa [#allocation18], 0
    %s34 = scalar_lea.sflag [#allocation18], 1
    %35 = vsyncpa %s34, 0
    loop: start=0, step=1, limit=6
    $region2: #{tpu_custom_call.1} parent=1 // loop_pre_header
      _
    $region3: #{tpu_custom_call.1} parent=1 // loop_header
      %s37 = sphi 0, %s41
      %p38 = scmp.ge.s32.totalorder %s37, 6
      %s44 = sphi 0, %s56
      %s45 = sphi 0, %s52
      %s46 = sphi 0, %s44
      %s47 = sphi 0, %s45
      %s48 = sphi 0, %s46
      %s49 = sphi 0, %s47
      %s61 = sphi 0, %s63
      %s64 = sphi 0, %s61
      %s65 = sphi 0, %s64
      %s81 = sphi 0, %s65
      %s87 = sphi 0, %s89
      %s90 = sphi 0, %s87
      %s91 = sphi 0, %s90
      %s107 = sphi 0, %s91
      %s113 = sphi 0, %s115
      %s116 = sphi 0, %s113
      %s117 = sphi 0, %s116
      %s133 = sphi 0, %s117
      %s137 = sphi 0, %s137
      %s139 = sphi 0, %s137
      %s140 = sphi 0, %s139
      %s154 = sphi 0, %s140
      %s158 = sphi 0, %s158
      %s160 = sphi 0, %s158
      %s161 = sphi 0, %s160
      %s175 = sphi 0, %s161
      %s179 = sphi 0, %s179
      %s181 = sphi 0, %s179
      %s182 = sphi 0, %s181
      %s196 = sphi 0, %s182
      %s200 = sphi 0, %s200
      %s202 = sphi 0, %s200
      %s203 = sphi 0, %s202
      %s217 = sphi 0, %s203
      %s221 = sphi 0, %s221
      %s223 = sphi 0, %s221
      %s224 = sphi 0, %s223
      %s238 = sphi 0, %s224
      %s242 = sphi 0, %s242
      %s244 = sphi 0, %s242
      %s245 = sphi 0, %s244
      %s259 = sphi 0, %s245
      %s263 = sphi 0, %s263
      %s265 = sphi 0, %s263
      %s266 = sphi 0, %s265
      %s280 = sphi 0, %s266
      %s288 = sphi 0, %s290
      %s291 = sphi 0, %s288
      %s292 = sphi 0, %s291
      %s308 = sphi 0, %s292
      %s316 = sphi 0, %s318
      %s319 = sphi 0, %s316
      %s320 = sphi 0, %s319
      %s336 = sphi 0, %s320
      %s344 = sphi 0, %s346
      %s347 = sphi 0, %s344
      %s348 = sphi 0, %s347
      %s364 = sphi 0, %s348
      %s372 = sphi 0, %s374
      %s375 = sphi 0, %s372
      %s376 = sphi 0, %s375
      %s392 = sphi 0, %s376
    $region4: #{tpu_custom_call.1} parent=1 // loop_header_branch
      %40 = sbr.rel (%p38) target = $region8
    $region5: #{tpu_custom_call.1} parent=1 // loop_body
      %s42 = ssub.s32 %s37, 1
      %s43 = ssub.s32 %s37, 2
      %s50 = sadd.s32 1, %s45
      %p51 = scmp.ge.s32.totalorder %s50, 2
      %s52 = scalar_select %p51, 0, %s50
      %s53 = sadd.s32 1, %s44
      %s54 = scalar_select %p51, %s53, %s44
      %p55 = scmp.ge.s32.totalorder %s54, 2
      %s56 = scalar_select %p55, 0, %s54
      %s57 = ssub.s32 %s44, %s56
      %s58 = ssub.s32 %s45, %s52
      %s59 = sor.u32 %s57, %s58
      %p60 = scmp.eq.s32.totalorder %s59, 0
      %s62 = sadd.s32 %s61, 1
      %s63 = scalar_select %p60, %s61, %s62
      %p66 = pneg %p60
      %p67 = scmp.eq.s32.totalorder %s37, 3
      %p68 = por %p66, %p67
      %p69 = scmp.ne.s32.totalorder %s61, %s64
      %p70 = scmp.eq.s32.totalorder %s37, 0
      %p71 = por %p69, %p70
      %p72 = scmp.ne.s32.totalorder %s61, %s64
      %p73 = scmp.eq.s32.totalorder %s42, 3
      %p74 = por %p72, %p73
      %p75 = scmp.ne.s32.totalorder %s64, %s65
      %p76 = scmp.eq.s32.totalorder %s42, 0
      %p77 = por %p75, %p76
      %p78 = scmp.ne.s32.totalorder %s64, %s65
      %p79 = scmp.eq.s32.totalorder %s43, 3
      %p80 = por %p78, %p79
      %p82 = scmp.ne.s32.totalorder %s65, %s81
      %p83 = scmp.eq.s32.totalorder %s43, 0
      %p84 = por %p82, %p83
      %s85 = ssub.s32 %s44, %s56
      %p86 = scmp.eq.s32.totalorder %s85, 0
      %s88 = sadd.s32 %s87, 1
      %s89 = scalar_select %p86, %s87, %s88
      %p92 = pneg %p86
      %p93 = scmp.eq.s32.totalorder %s37, 3
      %p94 = por %p92, %p93
      %p95 = scmp.ne.s32.totalorder %s87, %s90
      %p96 = scmp.eq.s32.totalorder %s37, 0
      %p97 = por %p95, %p96
      %p98 = scmp.ne.s32.totalorder %s87, %s90
      %p99 = scmp.eq.s32.totalorder %s42, 3
      %p100 = por %p98, %p99
      %p101 = scmp.ne.s32.totalorder %s90, %s91
      %p102 = scmp.eq.s32.totalorder %s42, 0
      %p103 = por %p101, %p102
      %p104 = scmp.ne.s32.totalorder %s90, %s91
      %p105 = scmp.eq.s32.totalorder %s43, 3
      %p106 = por %p104, %p105
      %p108 = scmp.ne.s32.totalorder %s91, %s107
      %p109 = scmp.eq.s32.totalorder %s43, 0
      %p110 = por %p108, %p109
      %s111 = ssub.s32 %s44, %s56
      %p112 = scmp.eq.s32.totalorder %s111, 0
      %s114 = sadd.s32 %s113, 1
      %s115 = scalar_select %p112, %s113, %s114
      %p118 = pneg %p112
      %p119 = scmp.eq.s32.totalorder %s37, 3
      %p120 = por %p118, %p119
      %p121 = scmp.ne.s32.totalorder %s113, %s116
      %p122 = scmp.eq.s32.totalorder %s37, 0
      %p123 = por %p121, %p122
      %p124 = scmp.ne.s32.totalorder %s113, %s116
      %p125 = scmp.eq.s32.totalorder %s42, 3
      %p126 = por %p124, %p125
      %p127 = scmp.ne.s32.totalorder %s116, %s117
      %p128 = scmp.eq.s32.totalorder %s42, 0
      %p129 = por %p127, %p128
      %p130 = scmp.ne.s32.totalorder %s116, %s117
      %p131 = scmp.eq.s32.totalorder %s43, 3
      %p132 = por %p130, %p131
      %p134 = scmp.ne.s32.totalorder %s117, %s133
      %p135 = scmp.eq.s32.totalorder %s43, 0
      %p136 = por %p134, %p135
      %s138 = sadd.s32 %s137, 1
      %p141 = scmp.eq.s32.totalorder %s37, 3
      %p142 = scmp.ne.s32.totalorder %s137, %s139
      %p143 = scmp.eq.s32.totalorder %s37, 0
      %p144 = por %p142, %p143
      %p145 = scmp.ne.s32.totalorder %s137, %s139
      %p146 = scmp.eq.s32.totalorder %s42, 3
      %p147 = por %p145, %p146
      %p148 = scmp.ne.s32.totalorder %s139, %s140
      %p149 = scmp.eq.s32.totalorder %s42, 0
      %p150 = por %p148, %p149
      %p151 = scmp.ne.s32.totalorder %s139, %s140
      %p152 = scmp.eq.s32.totalorder %s43, 3
      %p153 = por %p151, %p152
      %p155 = scmp.ne.s32.totalorder %s140, %s154
      %p156 = scmp.eq.s32.totalorder %s43, 0
      %p157 = por %p155, %p156
      %s159 = sadd.s32 %s158, 1
      %p162 = scmp.eq.s32.totalorder %s37, 3
      %p163 = scmp.ne.s32.totalorder %s158, %s160
      %p164 = scmp.eq.s32.totalorder %s37, 0
      %p165 = por %p163, %p164
      %p166 = scmp.ne.s32.totalorder %s158, %s160
      %p167 = scmp.eq.s32.totalorder %s42, 3
      %p168 = por %p166, %p167
      %p169 = scmp.ne.s32.totalorder %s160, %s161
      %p170 = scmp.eq.s32.totalorder %s42, 0
      %p171 = por %p169, %p170
      %p172 = scmp.ne.s32.totalorder %s160, %s161
      %p173 = scmp.eq.s32.totalorder %s43, 3
      %p174 = por %p172, %p173
      %p176 = scmp.ne.s32.totalorder %s161, %s175
      %p177 = scmp.eq.s32.totalorder %s43, 0
      %p178 = por %p176, %p177
      %s180 = sadd.s32 %s179, 1
      %p183 = scmp.eq.s32.totalorder %s37, 3
      %p184 = scmp.ne.s32.totalorder %s179, %s181
      %p185 = scmp.eq.s32.totalorder %s37, 0
      %p186 = por %p184, %p185
      %p187 = scmp.ne.s32.totalorder %s179, %s181
      %p188 = scmp.eq.s32.totalorder %s42, 3
      %p189 = por %p187, %p188
      %p190 = scmp.ne.s32.totalorder %s181, %s182
      %p191 = scmp.eq.s32.totalorder %s42, 0
      %p192 = por %p190, %p191
      %p193 = scmp.ne.s32.totalorder %s181, %s182
      %p194 = scmp.eq.s32.totalorder %s43, 3
      %p195 = por %p193, %p194
      %p197 = scmp.ne.s32.totalorder %s182, %s196
      %p198 = scmp.eq.s32.totalorder %s43, 0
      %p199 = por %p197, %p198
      %s201 = sadd.s32 %s200, 1
      %p204 = scmp.eq.s32.totalorder %s37, 3
      %p205 = scmp.ne.s32.totalorder %s200, %s202
      %p206 = scmp.eq.s32.totalorder %s37, 0
      %p207 = por %p205, %p206
      %p208 = scmp.ne.s32.totalorder %s200, %s202
      %p209 = scmp.eq.s32.totalorder %s42, 3
      %p210 = por %p208, %p209
      %p211 = scmp.ne.s32.totalorder %s202, %s203
      %p212 = scmp.eq.s32.totalorder %s42, 0
      %p213 = por %p211, %p212
      %p214 = scmp.ne.s32.totalorder %s202, %s203
      %p215 = scmp.eq.s32.totalorder %s43, 3
      %p216 = por %p214, %p215
      %p218 = scmp.ne.s32.totalorder %s203, %s217
      %p219 = scmp.eq.s32.totalorder %s43, 0
      %p220 = por %p218, %p219
      %s222 = sadd.s32 %s221, 1
      %p225 = scmp.eq.s32.totalorder %s37, 3
      %p226 = scmp.ne.s32.totalorder %s221, %s223
      %p227 = scmp.eq.s32.totalorder %s37, 0
      %p228 = por %p226, %p227
      %p229 = scmp.ne.s32.totalorder %s221, %s223
      %p230 = scmp.eq.s32.totalorder %s42, 3
      %p231 = por %p229, %p230
      %p232 = scmp.ne.s32.totalorder %s223, %s224
      %p233 = scmp.eq.s32.totalorder %s42, 0
      %p234 = por %p232, %p233
      %p235 = scmp.ne.s32.totalorder %s223, %s224
      %p236 = scmp.eq.s32.totalorder %s43, 3
      %p237 = por %p235, %p236
      %p239 = scmp.ne.s32.totalorder %s224, %s238
      %p240 = scmp.eq.s32.totalorder %s43, 0
      %p241 = por %p239, %p240
      %s243 = sadd.s32 %s242, 1
      %p246 = scmp.eq.s32.totalorder %s37, 3
      %p247 = scmp.ne.s32.totalorder %s242, %s244
      %p248 = scmp.eq.s32.totalorder %s37, 0
      %p249 = por %p247, %p248
      %p250 = scmp.ne.s32.totalorder %s242, %s244
      %p251 = scmp.eq.s32.totalorder %s42, 3
      %p252 = por %p250, %p251
      %p253 = scmp.ne.s32.totalorder %s244, %s245
      %p254 = scmp.eq.s32.totalorder %s42, 0
      %p255 = por %p253, %p254
      %p256 = scmp.ne.s32.totalorder %s244, %s245
      %p257 = scmp.eq.s32.totalorder %s43, 3
      %p258 = por %p256, %p257
      %p260 = scmp.ne.s32.totalorder %s245, %s259
      %p261 = scmp.eq.s32.totalorder %s43, 0
      %p262 = por %p260, %p261
      %s264 = sadd.s32 %s263, 1
      %p267 = scmp.eq.s32.totalorder %s37, 3
      %p268 = scmp.ne.s32.totalorder %s263, %s265
      %p269 = scmp.eq.s32.totalorder %s37, 0
      %p270 = por %p268, %p269
      %p271 = scmp.ne.s32.totalorder %s263, %s265
      %p272 = scmp.eq.s32.totalorder %s42, 3
      %p273 = por %p271, %p272
      %p274 = scmp.ne.s32.totalorder %s265, %s266
      %p275 = scmp.eq.s32.totalorder %s42, 0
      %p276 = por %p274, %p275
      %p277 = scmp.ne.s32.totalorder %s265, %s266
      %p278 = scmp.eq.s32.totalorder %s43, 3
      %p279 = por %p277, %p278
      %p281 = scmp.ne.s32.totalorder %s266, %s280
      %p282 = scmp.eq.s32.totalorder %s43, 0
      %p283 = por %p281, %p282
      %s284 = ssub.s32 %s44, %s56
      %s285 = ssub.s32 %s45, %s52
      %s286 = sor.u32 %s284, %s285
      %p287 = scmp.eq.s32.totalorder %s286, 0
      %s289 = sadd.s32 %s288, 1
      %s290 = scalar_select %p287, %s288, %s289
      %p293 = pneg %p287
      %p294 = scmp.eq.s32.totalorder %s37, 3
      %p295 = por %p293, %p294
      %p296 = scmp.ne.s32.totalorder %s288, %s291
      %p297 = scmp.eq.s32.totalorder %s37, 0
      %p298 = por %p296, %p297
      %p299 = scmp.ne.s32.totalorder %s288, %s291
      %p300 = scmp.eq.s32.totalorder %s42, 3
      %p301 = por %p299, %p300
      %p302 = scmp.ne.s32.totalorder %s291, %s292
      %p303 = scmp.eq.s32.totalorder %s42, 0
      %p304 = por %p302, %p303
      %p305 = scmp.ne.s32.totalorder %s291, %s292
      %p306 = scmp.eq.s32.totalorder %s43, 3
      %p307 = por %p305, %p306
      %p309 = scmp.ne.s32.totalorder %s292, %s308
      %p310 = scmp.eq.s32.totalorder %s43, 0
      %p311 = por %p309, %p310
      %s312 = ssub.s32 %s44, %s56
      %s313 = ssub.s32 %s45, %s52
      %s314 = sor.u32 %s312, %s313
      %p315 = scmp.eq.s32.totalorder %s314, 0
      %s317 = sadd.s32 %s316, 1
      %s318 = scalar_select %p315, %s316, %s317
      %p321 = pneg %p315
      %p322 = scmp.eq.s32.totalorder %s37, 3
      %p323 = por %p321, %p322
      %p324 = scmp.ne.s32.totalorder %s316, %s319
      %p325 = scmp.eq.s32.totalorder %s37, 0
      %p326 = por %p324, %p325
      %p327 = scmp.ne.s32.totalorder %s316, %s319
      %p328 = scmp.eq.s32.totalorder %s42, 3
      %p329 = por %p327, %p328
      %p330 = scmp.ne.s32.totalorder %s319, %s320
      %p331 = scmp.eq.s32.totalorder %s42, 0
      %p332 = por %p330, %p331
      %p333 = scmp.ne.s32.totalorder %s319, %s320
      %p334 = scmp.eq.s32.totalorder %s43, 3
      %p335 = por %p333, %p334
      %p337 = scmp.ne.s32.totalorder %s320, %s336
      %p338 = scmp.eq.s32.totalorder %s43, 0
      %p339 = por %p337, %p338
      %s340 = ssub.s32 %s44, %s56
      %s341 = ssub.s32 %s45, %s52
      %s342 = sor.u32 %s340, %s341
      %p343 = scmp.eq.s32.totalorder %s342, 0
      %s345 = sadd.s32 %s344, 1
      %s346 = scalar_select %p343, %s344, %s345
      %p349 = pneg %p343
      %p350 = scmp.eq.s32.totalorder %s37, 3
      %p351 = por %p349, %p350
      %p352 = scmp.ne.s32.totalorder %s344, %s347
      %p353 = scmp.eq.s32.totalorder %s37, 0
      %p354 = por %p352, %p353
      %p355 = scmp.ne.s32.totalorder %s344, %s347
      %p356 = scmp.eq.s32.totalorder %s42, 3
      %p357 = por %p355, %p356
      %p358 = scmp.ne.s32.totalorder %s347, %s348
      %p359 = scmp.eq.s32.totalorder %s42, 0
      %p360 = por %p358, %p359
      %p361 = scmp.ne.s32.totalorder %s347, %s348
      %p362 = scmp.eq.s32.totalorder %s43, 3
      %p363 = por %p361, %p362
      %p365 = scmp.ne.s32.totalorder %s348, %s364
      %p366 = scmp.eq.s32.totalorder %s43, 0
      %p367 = por %p365, %p366
      %s368 = ssub.s32 %s44, %s56
      %s369 = ssub.s32 %s45, %s52
      %s370 = sor.u32 %s368, %s369
      %p371 = scmp.eq.s32.totalorder %s370, 0
      %s373 = sadd.s32 %s372, 1
      %s374 = scalar_select %p371, %s372, %s373
      %p377 = pneg %p371
      %p378 = scmp.eq.s32.totalorder %s37, 3
      %p379 = por %p377, %p378
      %p380 = scmp.ne.s32.totalorder %s372, %s375
      %p381 = scmp.eq.s32.totalorder %s37, 0
      %p382 = por %p380, %p381
      %p383 = scmp.ne.s32.totalorder %s372, %s375
      %p384 = scmp.eq.s32.totalorder %s42, 3
      %p385 = por %p383, %p384
      %p386 = scmp.ne.s32.totalorder %s375, %s376
      %p387 = scmp.eq.s32.totalorder %s42, 0
      %p388 = por %p386, %p387
      %p389 = scmp.ne.s32.totalorder %s375, %s376
      %p390 = scmp.eq.s32.totalorder %s43, 3
      %p391 = por %p389, %p390
      %p393 = scmp.ne.s32.totalorder %s376, %s392
      %p394 = scmp.eq.s32.totalorder %s43, 0
      %p395 = por %p393, %p394
      %p396 = scmp.le.s32.totalorder 1, %s37
      %p397 = scmp.lt.s32.totalorder %s37, 5
      %p398 = pnand %p396, %p397
      %p399 = pneg %p398
      // Predicated region
      $region9: #{tpu_custom_call.1} parent=5 // pred_check
        _
      $region10: #{tpu_custom_call.1} parent=5 // pred_check_branch
        %401 = sbr.rel (%p398) target = $region12
      $region11: #{tpu_custom_call.1} parent=5 // pred_region
        %s402 = ssub.s32 %s37, 1
        // Predicated region
        $region13: #{tpu_custom_call.1} parent=11 // pred_check
          %p403 = pneg %p150
        $region14: #{tpu_custom_call.1} parent=11 // pred_check_branch
          %405 = sbr.rel (%p403) target = $region16
        $region15: #{tpu_custom_call.1} parent=11 // pred_region
          %s407 = ssub.s32 1024, 1024
          %408 = vsyncadd [#allocation6], %s407
          %s409 = sshll.u32 [#allocation7], 4
          %s410 = int_to_ptr.vmem [resolvable:$true] %s409
          %415 = dma.hbm_to_vmem [thread:$0]  %s3, 1024, %s410, [#allocation6], 64, 64, 4
        $region16: #{tpu_custom_call.1} parent=11 // pred_fallthru
          _
        // Predicated region
        $region17: #{tpu_custom_call.1} parent=11 // pred_check
          %p416 = pneg %p171
        $region18: #{tpu_custom_call.1} parent=11 // pred_check_branch
          %418 = sbr.rel (%p416) target = $region20
        $region19: #{tpu_custom_call.1} parent=11 // pred_region
          _
        $region20: #{tpu_custom_call.1} parent=11 // pred_fallthru
          _
        // Predicated region
        $region21: #{tpu_custom_call.1} parent=11 // pred_check
          %p419 = pneg %p192
        $region22: #{tpu_custom_call.1} parent=11 // pred_check_branch
          %421 = sbr.rel (%p419) target = $region24
        $region23: #{tpu_custom_call.1} parent=11 // pred_region
          _
        $region24: #{tpu_custom_call.1} parent=11 // pred_fallthru
          _
        // Predicated region
        $region25: #{tpu_custom_call.1} parent=11 // pred_check
          %p422 = pneg %p213
        $region26: #{tpu_custom_call.1} parent=11 // pred_check_branch
          %424 = sbr.rel (%p422) target = $region28
        $region27: #{tpu_custom_call.1} parent=11 // pred_region
          _
        $region28: #{tpu_custom_call.1} parent=11 // pred_fallthru
          _
        // Predicated region
        $region29: #{tpu_custom_call.1} parent=11 // pred_check
          %p425 = pneg %p234
        $region30: #{tpu_custom_call.1} parent=11 // pred_check_branch
          %427 = sbr.rel (%p425) target = $region32
        $region31: #{tpu_custom_call.1} parent=11 // pred_region
          %s429 = ssub.s32 1024, 1024
          %430 = vsyncadd [#allocation9], %s429
          %s431 = sshll.u32 [#allocation8], 4
          %s432 = int_to_ptr.vmem [resolvable:$true] %s431
          %437 = dma.hbm_to_vmem [thread:$0]  %s7, 1024, %s432, [#allocation9], 64, 64, 4
        $region32: #{tpu_custom_call.1} parent=11 // pred_fallthru
          _
        // Predicated region
        $region33: #{tpu_custom_call.1} parent=11 // pred_check
          %p438 = pneg %p255
        $region34: #{tpu_custom_call.1} parent=11 // pred_check_branch
          %440 = sbr.rel (%p438) target = $region36
        $region35: #{tpu_custom_call.1} parent=11 // pred_region
          %s442 = ssub.s32 1024, 1024
          %443 = vsyncadd [#allocation9], %s442
          %s444 = sshll.u32 [#allocation10], 4
          %s445 = int_to_ptr.vmem [resolvable:$true] %s444
          %450 = dma.hbm_to_vmem [thread:$0]  %s8, 1024, %s445, [#allocation9], 64, 64, 4
        $region36: #{tpu_custom_call.1} parent=11 // pred_fallthru
          _
        // Predicated region
        $region37: #{tpu_custom_call.1} parent=11 // pred_check
          %p451 = pneg %p276
        $region38: #{tpu_custom_call.1} parent=11 // pred_check_branch
          %453 = sbr.rel (%p451) target = $region40
        $region39: #{tpu_custom_call.1} parent=11 // pred_region
          %s455 = ssub.s32 1024, 1024
          %456 = vsyncadd [#allocation12], %s455
          %s457 = sshll.u32 [#allocation11], 4
          %s458 = int_to_ptr.vmem [resolvable:$true] %s457
          %463 = dma.hbm_to_vmem [thread:$0]  %s9, 1024, %s458, [#allocation12], 64, 64, 4
        $region40: #{tpu_custom_call.1} parent=11 // pred_fallthru
          _
      $region12: #{tpu_custom_call.1} parent=5 // pred_fallthru
        _
      %p464 = scmp.lt.s32.totalorder %s37, 4
      // Predicated region
      $region41: #{tpu_custom_call.1} parent=5 // pred_check
        %p465 = pneg %p464
      $region42: #{tpu_custom_call.1} parent=5 // pred_check_branch
        %467 = sbr.rel (%p465) target = $region44
      $region43: #{tpu_custom_call.1} parent=5 // pred_region
        // Predicated region
        $region45: #{tpu_custom_call.1} parent=43 // pred_check
          %p468 = pneg %p71
        $region46: #{tpu_custom_call.1} parent=43 // pred_check_branch
          %470 = sbr.rel (%p468) target = $region48
        $region47: #{tpu_custom_call.1} parent=43 // pred_region
          %s471 = sand.u32 %s61, 1
          %s472 = scalar_lea.sflag [#allocation3], %s471
          %s473 = sand.u32 %s61, 1
          %s474 = smul.addr %s473, 128
          %s475 = scalar_lea.vmem [#allocation2], %s474
          %s477 = ssub.s32 2048, 2048
          %478 = vsyncadd %s472, %s477
          %s479 = smul.addr %s44, 32
          %s480 = sadd.s32 %s45, %s479
          %s481 = smul.addr %s480, 128
          %s482 = scalar_lea.hbm %s0, %s481
          %s483 = sshll.u32 %s475, 4
          %s484 = int_to_ptr.vmem [resolvable:$true] %s483
          %489 = dma.hbm_to_vmem [thread:$0]  %s482, 2048, %s484, %s472, 256, 128, 8
        $region48: #{tpu_custom_call.1} parent=43 // pred_fallthru
          _
        // Predicated region
        $region49: #{tpu_custom_call.1} parent=43 // pred_check
          %p490 = pneg %p97
        $region50: #{tpu_custom_call.1} parent=43 // pred_check_branch
          %492 = sbr.rel (%p490) target = $region52
        $region51: #{tpu_custom_call.1} parent=43 // pred_region
          %s493 = sand.u32 %s37, 1
          %s494 = scalar_lea.sflag [#allocation6], %s493
          %s495 = sand.u32 %s87, 1
          %s496 = scalar_lea.vmem [#allocation5], %s495
          %s498 = ssub.s32 16, 16
          %499 = vsyncadd %s494, %s498
          %s500 = smul.addr %s44, 16
          %s501 = scalar_lea.hbm %s1, %s500
          %s503 = sshll.u32 %s496, 4
          %s504 = int_to_ptr.vmem [resolvable:$true] %s503
          %506 = dma.hbm_to_vmem [thread:$0]  %s501, 16, %s504, %s494
        $region52: #{tpu_custom_call.1} parent=43 // pred_fallthru
          _
        // Predicated region
        $region53: #{tpu_custom_call.1} parent=43 // pred_check
          %p507 = pneg %p123
        $region54: #{tpu_custom_call.1} parent=43 // pred_check_branch
          %509 = sbr.rel (%p507) target = $region56
        $region55: #{tpu_custom_call.1} parent=43 // pred_region
          %p510 = scmp.lt.s32.totalorder %s44, 1
          %s511 = scalar_select %p510, %s44, 1
          %s512 = scalar_lea.vmem %s2, %s511
        $region56: #{tpu_custom_call.1} parent=43 // pred_fallthru
          _
      $region44: #{tpu_custom_call.1} parent=5 // pred_fallthru
        _
      %p513 = scmp.le.s32.totalorder 1, %s37
      %p514 = scmp.lt.s32.totalorder %s37, 5
      %p515 = pnand %p513, %p514
      %p516 = pneg %p515
      // Predicated region
      $region57: #{tpu_custom_call.1} parent=5 // pred_check
        _
      $region58: #{tpu_custom_call.1} parent=5 // pred_check_branch
        %518 = sbr.rel (%p515) target = $region60
      $region59: #{tpu_custom_call.1} parent=5 // pred_region
        %s519 = ssub.s32 %s37, 1
        %s520 = sand.u32 %s64, 1
        %s521 = scalar_lea.sflag [#allocation3], %s520
        %s522 = sand.u32 %s64, 1
        %s523 = smul.addr %s522, 128
        %s524 = scalar_lea.vmem [#allocation2], %s523
        // Predicated region
        $region61: #{tpu_custom_call.1} parent=59 // pred_check
          %p525 = pneg %p77
        $region62: #{tpu_custom_call.1} parent=59 // pred_check_branch
          %527 = sbr.rel (%p525) target = $region64
        $region63: #{tpu_custom_call.1} parent=59 // pred_region
          %528 = dma.done %s521, 2048
        $region64: #{tpu_custom_call.1} parent=59 // pred_fallthru
          _
        %s529 = sand.u32 %s42, 1
        %s530 = scalar_lea.sflag [#allocation6], %s529
        %s531 = sand.u32 %s90, 1
        %s532 = scalar_lea.vmem [#allocation5], %s531
        // Predicated region
        $region65: #{tpu_custom_call.1} parent=59 // pred_check
          %p533 = pneg %p103
        $region66: #{tpu_custom_call.1} parent=59 // pred_check_branch
          %535 = sbr.rel (%p533) target = $region68
        $region67: #{tpu_custom_call.1} parent=59 // pred_region
          %536 = dma.done %s530, 16
        $region68: #{tpu_custom_call.1} parent=59 // pred_fallthru
          _
        // Predicated region
        $region69: #{tpu_custom_call.1} parent=59 // pred_check
          %p537 = pneg %p150
        $region70: #{tpu_custom_call.1} parent=59 // pred_check_branch
          %539 = sbr.rel (%p537) target = $region72
        $region71: #{tpu_custom_call.1} parent=59 // pred_region
          %540 = dma.done [#allocation6], 1024
        $region72: #{tpu_custom_call.1} parent=59 // pred_fallthru
          _
        // Predicated region
        $region73: #{tpu_custom_call.1} parent=59 // pred_check
          %p541 = pneg %p234
        $region74: #{tpu_custom_call.1} parent=59 // pred_check_branch
          %543 = sbr.rel (%p541) target = $region76
        $region75: #{tpu_custom_call.1} parent=59 // pred_region
          %544 = dma.done [#allocation9], 1024
        $region76: #{tpu_custom_call.1} parent=59 // pred_fallthru
          _
        // Predicated region
        $region77: #{tpu_custom_call.1} parent=59 // pred_check
          %p545 = pneg %p255
        $region78: #{tpu_custom_call.1} parent=59 // pred_check_branch
          %547 = sbr.rel (%p545) target = $region80
        $region79: #{tpu_custom_call.1} parent=59 // pred_region
          %548 = dma.done [#allocation9], 1024
        $region80: #{tpu_custom_call.1} parent=59 // pred_fallthru
          _
        // Predicated region
        $region81: #{tpu_custom_call.1} parent=59 // pred_check
          %p549 = pneg %p276
        $region82: #{tpu_custom_call.1} parent=59 // pred_check_branch
          %551 = sbr.rel (%p549) target = $region84
        $region83: #{tpu_custom_call.1} parent=59 // pred_region
          %552 = dma.done [#allocation12], 1024
        $region84: #{tpu_custom_call.1} parent=59 // pred_fallthru
          _
        %s553 = sand.u32 %s64, 1
        %s554 = scalar_lea.sflag [#allocation3], %s553
        %s555 = sand.u32 %s64, 1
        %s556 = smul.addr %s555, 128
        %s557 = scalar_lea.vmem [#allocation2], %s556
        %p558 = pneg %p77
        %p559 = pneg %p74
        %s560 = sand.u32 %s42, 1
        %s561 = scalar_lea.sflag [#allocation6], %s560
        %s562 = sand.u32 %s90, 1
        %s563 = scalar_lea.vmem [#allocation5], %s562
        %p564 = pneg %p103
        %p565 = pneg %p100
        %p566 = scmp.lt.s32.totalorder %s46, 1
        %s567 = scalar_select %p566, %s46, 1
        %s568 = scalar_lea.vmem %s2, %s567
        %p569 = pneg %p129
        %p570 = pneg %p126
        %p571 = pneg %p150
        %p572 = pneg %p147
        %p573 = pneg %p171
        %p574 = pneg %p168
        %p575 = pneg %p192
        %p576 = pneg %p189
        %p577 = pneg %p213
        %p578 = pneg %p210
        %p579 = pneg %p234
        %p580 = pneg %p231
        %p581 = pneg %p255
        %p582 = pneg %p252
        %p583 = pneg %p276
        %p584 = pneg %p273
        %p585 = pneg %p304
        %p586 = pneg %p301
        %s587 = sand.u32 %s291, 1
        %s588 = scalar_lea.sflag [#allocation4], %s587
        %s589 = sand.u32 %s291, 1
        %s590 = smul.addr %s589, 64
        %s591 = scalar_lea.vmem [#allocation13], %s590
        %p592 = pneg %p332
        %p593 = pneg %p329
        %s594 = sand.u32 %s42, 1
        %s595 = scalar_lea.sflag [#allocation15], %s594
        %s596 = sand.u32 %s319, 1
        %s597 = smul.addr %s596, 64
        %s598 = scalar_lea.vmem [#allocation14], %s597
        %p599 = pneg %p360
        %p600 = pneg %p357
        %s601 = sand.u32 %s42, 1
        %s602 = scalar_lea.sflag [#allocation15], %s601
        %s603 = sand.u32 %s347, 1
        %s604 = smul.addr %s603, 64
        %s605 = scalar_lea.vmem [#allocation16], %s604
        %p606 = pneg %p388
        %p607 = pneg %p385
        %s608 = sand.u32 %s375, 1
        %s609 = scalar_lea.sflag [#allocation18], %s608
        %s610 = sand.u32 %s375, 1
        %s611 = smul.addr %s610, 64
        %s612 = scalar_lea.vmem [#allocation17], %s611
        %p613 = scmp.lt.s32.totalorder %s46, 1
        %s614 = scalar_select %p613, %s46, 1
        %s615 = scalar_lea.vmem %s2, %s614
        %s616 = smul.u32 16, %s47
        %s617 = smul.u32 16, %s47
        %s618 = smul.u32 16, %s47
        %s619 = smul.u32 16, %s47
        %v621 = vld [vmem:[%s524] sm:$0xff]
        %v622 = vld [vmem:[%s524 + $0x8] sm:$0xff]
        %v623 = vld [vmem:[%s524 + $0x10] sm:$0xff]
        %v624 = vld [vmem:[%s524 + $0x18] sm:$0xff]
        %v625 = vld [vmem:[%s524 + $0x20] sm:$0xff]
        %v626 = vld [vmem:[%s524 + $0x28] sm:$0xff]
        %v627 = vld [vmem:[%s524 + $0x30] sm:$0xff]
        %v628 = vld [vmem:[%s524 + $0x38] sm:$0xff]
        %v629 = vld [vmem:[%s524 + $0x40] sm:$0xff]
        %v630 = vld [vmem:[%s524 + $0x48] sm:$0xff]
        %v631 = vld [vmem:[%s524 + $0x50] sm:$0xff]
        %v632 = vld [vmem:[%s524 + $0x58] sm:$0xff]
        %v633 = vld [vmem:[%s524 + $0x60] sm:$0xff]
        %v634 = vld [vmem:[%s524 + $0x68] sm:$0xff]
        %v635 = vld [vmem:[%s524 + $0x70] sm:$0xff]
        %v636 = vld [vmem:[%s524 + $0x78] sm:$0xff]
        %637 = vxpose.xlu0.b32.start [1/16] %v621, 128
        %638 = vxpose.xlu0.b32.cont [2/16] %v622, 128
        %639 = vxpose.xlu0.b32.cont [3/16] %v623, 128
        %640 = vxpose.xlu0.b32.cont [4/16] %v624, 128
        %641 = vxpose.xlu0.b32.cont [5/16] %v625, 128
        %642 = vxpose.xlu0.b32.cont [6/16] %v626, 128
        %643 = vxpose.xlu0.b32.cont [7/16] %v627, 128
        %644 = vxpose.xlu0.b32.cont [8/16] %v628, 128
        %645 = vxpose.xlu0.b32.cont [9/16] %v629, 128
        %646 = vxpose.xlu0.b32.cont [10/16] %v630, 128
        %647 = vxpose.xlu0.b32.cont [11/16] %v631, 128
        %648 = vxpose.xlu0.b32.cont [12/16] %v632, 128
        %649 = vxpose.xlu0.b32.cont [13/16] %v633, 128
        %650 = vxpose.xlu0.b32.cont [14/16] %v634, 128
        %651 = vxpose.xlu0.b32.cont [15/16] %v635, 128
        %652 = vxpose.xlu0.b32.end [16/16] %v636, 128
        %v653 = vpop.trf.xlu0
        %v654 = vpop.trf.xlu0
        %v655 = vpop.trf.xlu0
        %v656 = vpop.trf.xlu0
        %v657 = vpop.trf.xlu0
        %v658 = vpop.trf.xlu0
        %v659 = vpop.trf.xlu0
        %v660 = vpop.trf.xlu0
        %v661 = vpop.trf.xlu0
        %v662 = vpop.trf.xlu0
        %v663 = vpop.trf.xlu0
        %v664 = vpop.trf.xlu0
        %v665 = vpop.trf.xlu0
        %v666 = vpop.trf.xlu0
        %v667 = vpop.trf.xlu0
        %v668 = vpop.trf.xlu0
        %v669 = vld [vmem:[%s532] sm:$0x1]
        %v671 = vlaneseq
        %v672 = vshrl.u32 %v671, 7
        %v673 = vsub.s32 0, %v672
        %v674 = vrot.slane %v669, %v673
        %v676 = vmul.f32 %v653, %v674
        %v677 = vmul.f32 %v654, %v674
        %v678 = vmul.f32 %v655, %v674
        %v679 = vmul.f32 %v656, %v674
        %v680 = vmul.f32 %v657, %v674
        %v681 = vmul.f32 %v658, %v674
        %v682 = vmul.f32 %v659, %v674
        %v683 = vmul.f32 %v660, %v674
        %v684 = vmul.f32 %v661, %v674
        %v685 = vmul.f32 %v662, %v674
        %v686 = vmul.f32 %v663, %v674
        %v687 = vmul.f32 %v664, %v674
        %v688 = vmul.f32 %v665, %v674
        %v689 = vmul.f32 %v666, %v674
        %v690 = vmul.f32 %v667, %v674
        %v691 = vmul.f32 %v668, %v674
        %v692 = vld [vmem:[%s615] sm:$0x1]
        %v694 = vlaneseq
        %v695 = vshrl.u32 %v694, 7
        %v696 = vsub.s32 0, %v695
        %v697 = vrot.slane %v692, %v696
        %v699 = vadd.f32 %v676, %v697
        %v700 = vadd.f32 %v677, %v697
        %v701 = vadd.f32 %v678, %v697
        %v702 = vadd.f32 %v679, %v697
        %v703 = vadd.f32 %v680, %v697
        %v704 = vadd.f32 %v681, %v697
        %v705 = vadd.f32 %v682, %v697
        %v706 = vadd.f32 %v683, %v697
        %v707 = vadd.f32 %v684, %v697
        %v708 = vadd.f32 %v685, %v697
        %v709 = vadd.f32 %v686, %v697
        %v710 = vadd.f32 %v687, %v697
        %v711 = vadd.f32 %v688, %v697
        %v712 = vadd.f32 %v689, %v697
        %v713 = vadd.f32 %v690, %v697
        %v714 = vadd.f32 %v691, %v697
        %v715 = vpack.c.bf16 %v700, %v699
        %v716 = vpack.c.bf16 %v702, %v701
        %v717 = vpack.c.bf16 %v704, %v703
        %v718 = vpack.c.bf16 %v706, %v705
        %v719 = vpack.c.bf16 %v708, %v707
        %v720 = vpack.c.bf16 %v710, %v709
        %v721 = vpack.c.bf16 %v712, %v711
        %v722 = vpack.c.bf16 %v714, %v713
        %v723 = vld [vmem:[#allocation7] sm:$0xf]
        %v724 = vld [vmem:[#allocation7 + $0x4] sm:$0xf]
        %v725 = vld [vmem:[#allocation7 + $0x8] sm:$0xf]
        %v726 = vld [vmem:[#allocation7 + $0xc] sm:$0xf]
        %v727 = vld [vmem:[#allocation7 + $0x10] sm:$0xf]
        %v728 = vld [vmem:[#allocation7 + $0x14] sm:$0xf]
        %v729 = vld [vmem:[#allocation7 + $0x18] sm:$0xf]
        %v730 = vld [vmem:[#allocation7 + $0x1c] sm:$0xf]
        %v731 = vld [vmem:[#allocation7 + $0x20] sm:$0xf]
        %v732 = vld [vmem:[#allocation7 + $0x24] sm:$0xf]
        %v733 = vld [vmem:[#allocation7 + $0x28] sm:$0xf]
        %v734 = vld [vmem:[#allocation7 + $0x2c] sm:$0xf]
        %v735 = vld [vmem:[#allocation7 + $0x30] sm:$0xf]
        %v736 = vld [vmem:[#allocation7 + $0x34] sm:$0xf]
        %v737 = vld [vmem:[#allocation7 + $0x38] sm:$0xf]
        %v738 = vld [vmem:[#allocation7 + $0x3c] sm:$0xf]
        %v739 = vld [vmem:[%s4] sm:$0x1]
        %v741 = vlaneseq
        %v742 = vshrl.u32 %v741, 7
        %v743 = vsub.s32 0, %v742
        %v744 = vrot.slane %v739, %v743
        %v762 = vunpack.c.l.b16 %v723
        %v763 = vunpack.c.l.b16 %v724
        %v764 = vunpack.c.l.b16 %v725
        %v765 = vunpack.c.l.b16 %v726
        %v766 = vunpack.c.l.b16 %v727
        %v767 = vunpack.c.l.b16 %v728
        %v768 = vunpack.c.l.b16 %v729
        %v769 = vunpack.c.l.b16 %v730
        %v770 = vunpack.c.l.b16 %v731
        %v771 = vunpack.c.l.b16 %v732
        %v772 = vunpack.c.l.b16 %v733
        %v773 = vunpack.c.l.b16 %v734
        %v774 = vunpack.c.l.b16 %v735
        %v775 = vunpack.c.l.b16 %v736
        %v776 = vunpack.c.l.b16 %v737
        %v777 = vunpack.c.l.b16 %v738
        %v778 = vpack.c.b16 %v763, %v762
        %v779 = vpack.c.b16 %v765, %v764
        %v780 = vpack.c.b16 %v767, %v766
        %v781 = vpack.c.b16 %v769, %v768
        %v782 = vpack.c.b16 %v771, %v770
        %v783 = vpack.c.b16 %v773, %v772
        %v784 = vpack.c.b16 %v775, %v774
        %v785 = vpack.c.b16 %v777, %v776
        %794 = vmatprep.subr.bf16.mxu0 0
        %795 = vmatpush1.bf16.msra.mxu0 %v785
        %796 = vmatprep.subr.bf16.mxu0 0
        %797 = vmatpush1.bf16.msra.mxu0 %v784
        %798 = vmatprep.subr.bf16.mxu0 0
        %799 = vmatpush1.bf16.msra.mxu0 %v783
        %800 = vmatprep.subr.bf16.mxu0 0
        %801 = vmatpush1.bf16.msra.mxu0 %v782
        %802 = vmatprep.subr.bf16.mxu0 0
        %803 = vmatpush1.bf16.msra.mxu0 %v781
        %804 = vmatprep.subr.bf16.mxu0 0
        %805 = vmatpush1.bf16.msra.mxu0 %v780
        %806 = vmatprep.subr.bf16.mxu0 0
        %807 = vmatpush1.bf16.msra.mxu0 %v779
        %808 = vmatprep.subr.bf16.mxu0 0
        %809 = vmatpush1.bf16.msra.mxu0 %v778
        %810 = vmatprep.subr.bf16.mxu0 0
        %811 = vmatpush2.bf16.msra.mxu0 0
        %812 = vmatprep.subr.bf16.mxu0 0
        %813 = vmatpush2.bf16.msra.mxu0 0
        %814 = vmatprep.subr.bf16.mxu0 0
        %815 = vmatpush2.bf16.msra.mxu0 0
        %816 = vmatprep.subr.bf16.mxu0 0
        %817 = vmatpush2.bf16.msra.mxu0 0
        %818 = vmatprep.subr.bf16.mxu0 0
        %819 = vmatpush2.bf16.msra.mxu0 0
        %820 = vmatprep.subr.bf16.mxu0 0
        %821 = vmatpush2.bf16.msra.mxu0 0
        %822 = vmatprep.subr.bf16.mxu0 0
        %823 = vmatpush2.bf16.msra.mxu0 0
        %824 = vmatprep.subr.bf16.mxu0 0
        %825 = vmatpush2.bf16.msra.mxu0 0
        %826 = vmatprep.mubr.bf16.mxu0 0
        %827 = vmatmul.mubr.bf16.gmra.mxu0 %v715
        %v828 = vpop.f32.mrf.mxu0
        %v829 = vadd.f32 %v744, %v828
        %v830 = vpop.f32.mrf.mxu0
        %v831 = vpop.f32.mrf.mxu0
        %v832 = vadd.f32 %v744, %v831
        %v833 = vpop.f32.mrf.mxu0
        %834 = vmatprep.mubr.bf16.mxu0 0
        %835 = vmatmul.mubr.bf16.gmra.mxu0 %v716
        %v836 = vpop.f32.mrf.mxu0
        %v837 = vadd.f32 %v744, %v836
        %v838 = vpop.f32.mrf.mxu0
        %v839 = vpop.f32.mrf.mxu0
        %v840 = vadd.f32 %v744, %v839
        %v841 = vpop.f32.mrf.mxu0
        %842 = vmatprep.mubr.bf16.mxu0 0
        %843 = vmatmul.mubr.bf16.gmra.mxu0 %v717
        %v844 = vpop.f32.mrf.mxu0
        %v845 = vadd.f32 %v744, %v844
        %v846 = vpop.f32.mrf.mxu0
        %v847 = vpop.f32.mrf.mxu0
        %v848 = vadd.f32 %v744, %v847
        %v849 = vpop.f32.mrf.mxu0
        %850 = vmatprep.mubr.bf16.mxu0 0
        %851 = vmatmul.mubr.bf16.gmra.mxu0 %v718
        %v852 = vpop.f32.mrf.mxu0
        %v853 = vadd.f32 %v744, %v852
        %v854 = vpop.f32.mrf.mxu0
        %v855 = vpop.f32.mrf.mxu0
        %v856 = vadd.f32 %v744, %v855
        %v857 = vpop.f32.mrf.mxu0
        %858 = vmatprep.mubr.bf16.mxu0 0
        %859 = vmatmul.mubr.bf16.gmra.mxu0 %v719
        %v860 = vpop.f32.mrf.mxu0
        %v861 = vadd.f32 %v744, %v860
        %v862 = vpop.f32.mrf.mxu0
        %v863 = vpop.f32.mrf.mxu0
        %v864 = vadd.f32 %v744, %v863
        %v865 = vpop.f32.mrf.mxu0
        %866 = vmatprep.mubr.bf16.mxu0 0
        %867 = vmatmul.mubr.bf16.gmra.mxu0 %v720
        %v868 = vpop.f32.mrf.mxu0
        %v869 = vadd.f32 %v744, %v868
        %v870 = vpop.f32.mrf.mxu0
        %v871 = vpop.f32.mrf.mxu0
        %v872 = vadd.f32 %v744, %v871
        %v873 = vpop.f32.mrf.mxu0
        %874 = vmatprep.mubr.bf16.mxu0 0
        %875 = vmatmul.mubr.bf16.gmra.mxu0 %v721
        %v876 = vpop.f32.mrf.mxu0
        %v877 = vadd.f32 %v744, %v876
        %v878 = vpop.f32.mrf.mxu0
        %v879 = vpop.f32.mrf.mxu0
        %v880 = vadd.f32 %v744, %v879
        %v881 = vpop.f32.mrf.mxu0
        %882 = vmatprep.mubr.bf16.mxu0 0
        %883 = vmatmul.mubr.bf16.gmra.mxu0 %v722
        %v884 = vpop.f32.mrf.mxu0
        %v885 = vadd.f32 %v744, %v884
        %v886 = vpop.f32.mrf.mxu0
        %v887 = vpop.f32.mrf.mxu0
        %v888 = vadd.f32 %v744, %v887
        %v889 = vpop.f32.mrf.mxu0
        %890 = vdwg.mxu0
        %v891 = vpack.c.bf16 %v832, %v829
        %v892 = vpack.c.bf16 %v840, %v837
        %v893 = vpack.c.bf16 %v848, %v845
        %v894 = vpack.c.bf16 %v856, %v853
        %v895 = vpack.c.bf16 %v864, %v861
        %v896 = vpack.c.bf16 %v872, %v869
        %v897 = vpack.c.bf16 %v880, %v877
        %v898 = vpack.c.bf16 %v888, %v885
        %v907 = vunpack.c.l.b16 %v891
        %v908 = vunpack.c.h.b16 %v891
        %v909 = vunpack.c.l.b16 %v892
        %v910 = vunpack.c.h.b16 %v892
        %v911 = vunpack.c.l.b16 %v893
        %v912 = vunpack.c.h.b16 %v893
        %v913 = vunpack.c.l.b16 %v894
        %v914 = vunpack.c.h.b16 %v894
        %v915 = vunpack.c.l.b16 %v895
        %v916 = vunpack.c.h.b16 %v895
        %v917 = vunpack.c.l.b16 %v896
        %v918 = vunpack.c.h.b16 %v896
        %v919 = vunpack.c.l.b16 %v897
        %v920 = vunpack.c.h.b16 %v897
        %v921 = vunpack.c.l.b16 %v898
        %v922 = vunpack.c.h.b16 %v898
        %v923 = vpack.c.b16 %v907, %v907
        %v924 = vpack.c.b16 %v908, %v908
        %v925 = vpack.c.b16 %v909, %v909
        %v926 = vpack.c.b16 %v910, %v910
        %v927 = vpack.c.b16 %v911, %v911
        %v928 = vpack.c.b16 %v912, %v912
        %v929 = vpack.c.b16 %v913, %v913
        %v930 = vpack.c.b16 %v914, %v914
        %v931 = vpack.c.b16 %v915, %v915
        %v932 = vpack.c.b16 %v916, %v916
        %v933 = vpack.c.b16 %v917, %v917
        %v934 = vpack.c.b16 %v918, %v918
        %v935 = vpack.c.b16 %v919, %v919
        %v936 = vpack.c.b16 %v920, %v920
        %v937 = vpack.c.b16 %v921, %v921
        %v938 = vpack.c.b16 %v922, %v922
        %955 = vst [vmem:[%s591] sm:$0xf] %v923
        %956 = vst [vmem:[%s591 + $0x4] sm:$0xf] %v924
        %957 = vst [vmem:[%s591 + $0x8] sm:$0xf] %v925
        %958 = vst [vmem:[%s591 + $0xc] sm:$0xf] %v926
        %959 = vst [vmem:[%s591 + $0x10] sm:$0xf] %v927
        %960 = vst [vmem:[%s591 + $0x14] sm:$0xf] %v928
        %961 = vst [vmem:[%s591 + $0x18] sm:$0xf] %v929
        %962 = vst [vmem:[%s591 + $0x1c] sm:$0xf] %v930
        %963 = vst [vmem:[%s591 + $0x20] sm:$0xf] %v931
        %964 = vst [vmem:[%s591 + $0x24] sm:$0xf] %v932
        %965 = vst [vmem:[%s591 + $0x28] sm:$0xf] %v933
        %966 = vst [vmem:[%s591 + $0x2c] sm:$0xf] %v934
        %967 = vst [vmem:[%s591 + $0x30] sm:$0xf] %v935
        %968 = vst [vmem:[%s591 + $0x34] sm:$0xf] %v936
        %969 = vst [vmem:[%s591 + $0x38] sm:$0xf] %v937
        %970 = vst [vmem:[%s591 + $0x3c] sm:$0xf] %v938
        %v971 = vld [vmem:[%s5] sm:$0x1]
        %v972 = vld [vmem:[%s6] sm:$0x1]
        %973 = vadd.xlane.f32.xlu0 %v829
        %v974 = vpop.xlane.xlu0 %973
        %975 = vadd.xlane.f32.xlu0 %v832
        %v976 = vpop.xlane.xlu0 %975
        %977 = vadd.xlane.f32.xlu0 %v837
        %v978 = vpop.xlane.xlu0 %977
        %979 = vadd.xlane.f32.xlu0 %v840
        %v980 = vpop.xlane.xlu0 %979
        %981 = vadd.xlane.f32.xlu0 %v845
        %v982 = vpop.xlane.xlu0 %981
        %983 = vadd.xlane.f32.xlu0 %v848
        %v984 = vpop.xlane.xlu0 %983
        %985 = vadd.xlane.f32.xlu0 %v853
        %v986 = vpop.xlane.xlu0 %985
        %987 = vadd.xlane.f32.xlu0 %v856
        %v988 = vpop.xlane.xlu0 %987
        %989 = vadd.xlane.f32.xlu0 %v861
        %v990 = vpop.xlane.xlu0 %989
        %991 = vadd.xlane.f32.xlu0 %v864
        %v992 = vpop.xlane.xlu0 %991
        %993 = vadd.xlane.f32.xlu0 %v869
        %v994 = vpop.xlane.xlu0 %993
        %995 = vadd.xlane.f32.xlu0 %v872
        %v996 = vpop.xlane.xlu0 %995
        %997 = vadd.xlane.f32.xlu0 %v877
        %v998 = vpop.xlane.xlu0 %997
        %999 = vadd.xlane.f32.xlu0 %v880
        %v1000 = vpop.xlane.xlu0 %999
        %1001 = vadd.xlane.f32.xlu0 %v885
        %v1002 = vpop.xlane.xlu0 %1001
        %1003 = vadd.xlane.f32.xlu0 %v888
        %v1004 = vpop.xlane.xlu0 %1003
        %v1005 = vrcp.pop 128.0
        %v1006 = vmul.f32 %v974, %v1005
        %v1007 = vmul.f32 %v976, %v1005
        %v1008 = vmul.f32 %v978, %v1005
        %v1009 = vmul.f32 %v980, %v1005
        %v1010 = vmul.f32 %v982, %v1005
        %v1011 = vmul.f32 %v984, %v1005
        %v1012 = vmul.f32 %v986, %v1005
        %v1013 = vmul.f32 %v988, %v1005
        %v1014 = vmul.f32 %v990, %v1005
        %v1015 = vmul.f32 %v992, %v1005
        %v1016 = vmul.f32 %v994, %v1005
        %v1017 = vmul.f32 %v996, %v1005
        %v1018 = vmul.f32 %v998, %v1005
        %v1019 = vmul.f32 %v1000, %v1005
        %v1020 = vmul.f32 %v1002, %v1005
        %v1021 = vmul.f32 %v1004, %v1005
        %v1022 = vsub.f32 %v829, %v1006
        %v1023 = vsub.f32 %v832, %v1007
        %v1024 = vsub.f32 %v837, %v1008
        %v1025 = vsub.f32 %v840, %v1009
        %v1026 = vsub.f32 %v845, %v1010
        %v1027 = vsub.f32 %v848, %v1011
        %v1028 = vsub.f32 %v853, %v1012
        %v1029 = vsub.f32 %v856, %v1013
        %v1030 = vsub.f32 %v861, %v1014
        %v1031 = vsub.f32 %v864, %v1015
        %v1032 = vsub.f32 %v869, %v1016
        %v1033 = vsub.f32 %v872, %v1017
        %v1034 = vsub.f32 %v877, %v1018
        %v1035 = vsub.f32 %v880, %v1019
        %v1036 = vsub.f32 %v885, %v1020
        %v1037 = vsub.f32 %v888, %v1021
        %v1038 = vmul.f32 %v1022, %v1022
        %v1039 = vmul.f32 %v1023, %v1023
        %v1040 = vmul.f32 %v1024, %v1024
        %v1041 = vmul.f32 %v1025, %v1025
        %v1042 = vmul.f32 %v1026, %v1026
        %v1043 = vmul.f32 %v1027, %v1027
        %v1044 = vmul.f32 %v1028, %v1028
        %v1045 = vmul.f32 %v1029, %v1029
        %v1046 = vmul.f32 %v1030, %v1030
        %v1047 = vmul.f32 %v1031, %v1031
        %v1048 = vmul.f32 %v1032, %v1032
        %v1049 = vmul.f32 %v1033, %v1033
        %v1050 = vmul.f32 %v1034, %v1034
        %v1051 = vmul.f32 %v1035, %v1035
        %v1052 = vmul.f32 %v1036, %v1036
        %v1053 = vmul.f32 %v1037, %v1037
        %1054 = vadd.xlane.f32.xlu0 %v1038
        %v1055 = vpop.xlane.xlu0 %1054
        %1056 = vadd.xlane.f32.xlu0 %v1039
        %v1057 = vpop.xlane.xlu0 %1056
        %1058 = vadd.xlane.f32.xlu0 %v1040
        %v1059 = vpop.xlane.xlu0 %1058
        %1060 = vadd.xlane.f32.xlu0 %v1041
        %v1061 = vpop.xlane.xlu0 %1060
        %1062 = vadd.xlane.f32.xlu0 %v1042
        %v1063 = vpop.xlane.xlu0 %1062
        %1064 = vadd.xlane.f32.xlu0 %v1043
        %v1065 = vpop.xlane.xlu0 %1064
        %1066 = vadd.xlane.f32.xlu0 %v1044
        %v1067 = vpop.xlane.xlu0 %1066
        %1068 = vadd.xlane.f32.xlu0 %v1045
        %v1069 = vpop.xlane.xlu0 %1068
        %1070 = vadd.xlane.f32.xlu0 %v1046
        %v1071 = vpop.xlane.xlu0 %1070
        %1072 = vadd.xlane.f32.xlu0 %v1047
        %v1073 = vpop.xlane.xlu0 %1072
        %1074 = vadd.xlane.f32.xlu0 %v1048
        %v1075 = vpop.xlane.xlu0 %1074
        %1076 = vadd.xlane.f32.xlu0 %v1049
        %v1077 = vpop.xlane.xlu0 %1076
        %1078 = vadd.xlane.f32.xlu0 %v1050
        %v1079 = vpop.xlane.xlu0 %1078
        %1080 = vadd.xlane.f32.xlu0 %v1051
        %v1081 = vpop.xlane.xlu0 %1080
        %1082 = vadd.xlane.f32.xlu0 %v1052
        %v1083 = vpop.xlane.xlu0 %1082
        %1084 = vadd.xlane.f32.xlu0 %v1053
        %v1085 = vpop.xlane.xlu0 %1084
        %v1086 = vmul.f32 %v1055, %v1005
        %v1087 = vmul.f32 %v1057, %v1005
        %v1088 = vmul.f32 %v1059, %v1005
        %v1089 = vmul.f32 %v1061, %v1005
        %v1090 = vmul.f32 %v1063, %v1005
        %v1091 = vmul.f32 %v1065, %v1005
        %v1092 = vmul.f32 %v1067, %v1005
        %v1093 = vmul.f32 %v1069, %v1005
        %v1094 = vmul.f32 %v1071, %v1005
        %v1095 = vmul.f32 %v1073, %v1005
        %v1096 = vmul.f32 %v1075, %v1005
        %v1097 = vmul.f32 %v1077, %v1005
        %v1098 = vmul.f32 %v1079, %v1005
        %v1099 = vmul.f32 %v1081, %v1005
        %v1100 = vmul.f32 %v1083, %v1005
        %v1101 = vmul.f32 %v1085, %v1005
        %v1102 = vadd.f32 %v1086, 1e-05
        %v1103 = vadd.f32 %v1087, 1e-05
        %v1104 = vadd.f32 %v1088, 1e-05
        %v1105 = vadd.f32 %v1089, 1e-05
        %v1106 = vadd.f32 %v1090, 1e-05
        %v1107 = vadd.f32 %v1091, 1e-05
        %v1108 = vadd.f32 %v1092, 1e-05
        %v1109 = vadd.f32 %v1093, 1e-05
        %v1110 = vadd.f32 %v1094, 1e-05
        %v1111 = vadd.f32 %v1095, 1e-05
        %v1112 = vadd.f32 %v1096, 1e-05
        %v1113 = vadd.f32 %v1097, 1e-05
        %v1114 = vadd.f32 %v1098, 1e-05
        %v1115 = vadd.f32 %v1099, 1e-05
        %v1116 = vadd.f32 %v1100, 1e-05
        %v1117 = vadd.f32 %v1101, 1e-05
        %v1118 = vrsqrt.pop %v1102
        %v1119 = vrsqrt.pop %v1103
        %v1120 = vrsqrt.pop %v1104
        %v1121 = vrsqrt.pop %v1105
        %v1122 = vrsqrt.pop %v1106
        %v1123 = vrsqrt.pop %v1107
        %v1124 = vrsqrt.pop %v1108
        %v1125 = vrsqrt.pop %v1109
        %v1126 = vrsqrt.pop %v1110
        %v1127 = vrsqrt.pop %v1111
        %v1128 = vrsqrt.pop %v1112
        %v1129 = vrsqrt.pop %v1113
        %v1130 = vrsqrt.pop %v1114
        %v1131 = vrsqrt.pop %v1115
        %v1132 = vrsqrt.pop %v1116
        %v1133 = vrsqrt.pop %v1117
        %v1134 = vmul.f32 %v1022, %v1118
        %v1135 = vmul.f32 %v1023, %v1119
        %v1136 = vmul.f32 %v1024, %v1120
        %v1137 = vmul.f32 %v1025, %v1121
        %v1138 = vmul.f32 %v1026, %v1122
        %v1139 = vmul.f32 %v1027, %v1123
        %v1140 = vmul.f32 %v1028, %v1124
        %v1141 = vmul.f32 %v1029, %v1125
        %v1142 = vmul.f32 %v1030, %v1126
        %v1143 = vmul.f32 %v1031, %v1127
        %v1144 = vmul.f32 %v1032, %v1128
        %v1145 = vmul.f32 %v1033, %v1129
        %v1146 = vmul.f32 %v1034, %v1130
        %v1147 = vmul.f32 %v1035, %v1131
        %v1148 = vmul.f32 %v1036, %v1132
        %v1149 = vmul.f32 %v1037, %v1133
        %v1151 = vlaneseq
        %v1152 = vshrl.u32 %v1151, 7
        %v1153 = vsub.s32 0, %v1152
        %v1154 = vrot.slane %v971, %v1153
        %v1156 = vmul.f32 %v1134, %v1154
        %v1157 = vmul.f32 %v1135, %v1154
        %v1158 = vmul.f32 %v1136, %v1154
        %v1159 = vmul.f32 %v1137, %v1154
        %v1160 = vmul.f32 %v1138, %v1154
        %v1161 = vmul.f32 %v1139, %v1154
        %v1162 = vmul.f32 %v1140, %v1154
        %v1163 = vmul.f32 %v1141, %v1154
        %v1164 = vmul.f32 %v1142, %v1154
        %v1165 = vmul.f32 %v1143, %v1154
        %v1166 = vmul.f32 %v1144, %v1154
        %v1167 = vmul.f32 %v1145, %v1154
        %v1168 = vmul.f32 %v1146, %v1154
        %v1169 = vmul.f32 %v1147, %v1154
        %v1170 = vmul.f32 %v1148, %v1154
        %v1171 = vmul.f32 %v1149, %v1154
        %v1173 = vlaneseq
        %v1174 = vshrl.u32 %v1173, 7
        %v1175 = vsub.s32 0, %v1174
        %v1176 = vrot.slane %v972, %v1175
        %v1178 = vadd.f32 %v1156, %v1176
        %v1179 = vadd.f32 %v1157, %v1176
        %v1180 = vadd.f32 %v1158, %v1176
        %v1181 = vadd.f32 %v1159, %v1176
        %v1182 = vadd.f32 %v1160, %v1176
        %v1183 = vadd.f32 %v1161, %v1176
        %v1184 = vadd.f32 %v1162, %v1176
        %v1185 = vadd.f32 %v1163, %v1176
        %v1186 = vadd.f32 %v1164, %v1176
        %v1187 = vadd.f32 %v1165, %v1176
        %v1188 = vadd.f32 %v1166, %v1176
        %v1189 = vadd.f32 %v1167, %v1176
        %v1190 = vadd.f32 %v1168, %v1176
        %v1191 = vadd.f32 %v1169, %v1176
        %v1192 = vadd.f32 %v1170, %v1176
        %v1193 = vadd.f32 %v1171, %v1176
        %v1194 = vpack.c.bf16 %v1179, %v1178
        %v1195 = vpack.c.bf16 %v1181, %v1180
        %v1196 = vpack.c.bf16 %v1183, %v1182
        %v1197 = vpack.c.bf16 %v1185, %v1184
        %v1198 = vpack.c.bf16 %v1187, %v1186
        %v1199 = vpack.c.bf16 %v1189, %v1188
        %v1200 = vpack.c.bf16 %v1191, %v1190
        %v1201 = vpack.c.bf16 %v1193, %v1192
        %v1202 = vld [vmem:[#allocation8] sm:$0xf]
        %v1203 = vld [vmem:[#allocation8 + $0x4] sm:$0xf]
        %v1204 = vld [vmem:[#allocation8 + $0x8] sm:$0xf]
        %v1205 = vld [vmem:[#allocation8 + $0xc] sm:$0xf]
        %v1206 = vld [vmem:[#allocation8 + $0x10] sm:$0xf]
        %v1207 = vld [vmem:[#allocation8 + $0x14] sm:$0xf]
        %v1208 = vld [vmem:[#allocation8 + $0x18] sm:$0xf]
        %v1209 = vld [vmem:[#allocation8 + $0x1c] sm:$0xf]
        %v1210 = vld [vmem:[#allocation8 + $0x20] sm:$0xf]
        %v1211 = vld [vmem:[#allocation8 + $0x24] sm:$0xf]
        %v1212 = vld [vmem:[#allocation8 + $0x28] sm:$0xf]
        %v1213 = vld [vmem:[#allocation8 + $0x2c] sm:$0xf]
        %v1214 = vld [vmem:[#allocation8 + $0x30] sm:$0xf]
        %v1215 = vld [vmem:[#allocation8 + $0x34] sm:$0xf]
        %v1216 = vld [vmem:[#allocation8 + $0x38] sm:$0xf]
        %v1217 = vld [vmem:[#allocation8 + $0x3c] sm:$0xf]
        %v1234 = vunpack.c.l.b16 %v1202
        %v1235 = vunpack.c.l.b16 %v1203
        %v1236 = vunpack.c.l.b16 %v1204
        %v1237 = vunpack.c.l.b16 %v1205
        %v1238 = vunpack.c.l.b16 %v1206
        %v1239 = vunpack.c.l.b16 %v1207
        %v1240 = vunpack.c.l.b16 %v1208
        %v1241 = vunpack.c.l.b16 %v1209
        %v1242 = vunpack.c.l.b16 %v1210
        %v1243 = vunpack.c.l.b16 %v1211
        %v1244 = vunpack.c.l.b16 %v1212
        %v1245 = vunpack.c.l.b16 %v1213
        %v1246 = vunpack.c.l.b16 %v1214
        %v1247 = vunpack.c.l.b16 %v1215
        %v1248 = vunpack.c.l.b16 %v1216
        %v1249 = vunpack.c.l.b16 %v1217
        %v1250 = vpack.c.b16 %v1235, %v1234
        %v1251 = vpack.c.b16 %v1237, %v1236
        %v1252 = vpack.c.b16 %v1239, %v1238
        %v1253 = vpack.c.b16 %v1241, %v1240
        %v1254 = vpack.c.b16 %v1243, %v1242
        %v1255 = vpack.c.b16 %v1245, %v1244
        %v1256 = vpack.c.b16 %v1247, %v1246
        %v1257 = vpack.c.b16 %v1249, %v1248
        %1266 = vmatprep.subr.bf16.mxu0 0
        %1267 = vmatpush1.bf16.msra.mxu0 %v1257
        %1268 = vmatprep.subr.bf16.mxu0 0
        %1269 = vmatpush1.bf16.msra.mxu0 %v1256
        %1270 = vmatprep.subr.bf16.mxu0 0
        %1271 = vmatpush1.bf16.msra.mxu0 %v1255
        %1272 = vmatprep.subr.bf16.mxu0 0
        %1273 = vmatpush1.bf16.msra.mxu0 %v1254
        %1274 = vmatprep.subr.bf16.mxu0 0
        %1275 = vmatpush1.bf16.msra.mxu0 %v1253
        %1276 = vmatprep.subr.bf16.mxu0 0
        %1277 = vmatpush1.bf16.msra.mxu0 %v1252
        %1278 = vmatprep.subr.bf16.mxu0 0
        %1279 = vmatpush1.bf16.msra.mxu0 %v1251
        %1280 = vmatprep.subr.bf16.mxu0 0
        %1281 = vmatpush1.bf16.msra.mxu0 %v1250
        %1282 = vmatprep.subr.bf16.mxu0 0
        %1283 = vmatpush2.bf16.msra.mxu0 0
        %1284 = vmatprep.subr.bf16.mxu0 0
        %1285 = vmatpush2.bf16.msra.mxu0 0
        %1286 = vmatprep.subr.bf16.mxu0 0
        %1287 = vmatpush2.bf16.msra.mxu0 0
        %1288 = vmatprep.subr.bf16.mxu0 0
        %1289 = vmatpush2.bf16.msra.mxu0 0
        %1290 = vmatprep.subr.bf16.mxu0 0
        %1291 = vmatpush2.bf16.msra.mxu0 0
        %1292 = vmatprep.subr.bf16.mxu0 0
        %1293 = vmatpush2.bf16.msra.mxu0 0
        %1294 = vmatprep.subr.bf16.mxu0 0
        %1295 = vmatpush2.bf16.msra.mxu0 0
        %1296 = vmatprep.subr.bf16.mxu0 0
        %1297 = vmatpush2.bf16.msra.mxu0 0
        %1298 = vmatprep.mubr.bf16.mxu0 0
        %1299 = vmatmul.mubr.bf16.gmra.mxu0 %v1194
        %v1300 = vpop.f32.mrf.mxu0
        %v1301 = vadd.f32 0.0, %v1300
        %v1302 = vpop.f32.mrf.mxu0
        %v1303 = vpop.f32.mrf.mxu0
        %v1304 = vadd.f32 0.0, %v1303
        %v1305 = vpop.f32.mrf.mxu0
        %1306 = vmatprep.mubr.bf16.mxu0 0
        %1307 = vmatmul.mubr.bf16.gmra.mxu0 %v1195
        %v1308 = vpop.f32.mrf.mxu0
        %v1309 = vadd.f32 0.0, %v1308
        %v1310 = vpop.f32.mrf.mxu0
        %v1311 = vpop.f32.mrf.mxu0
        %v1312 = vadd.f32 0.0, %v1311
        %v1313 = vpop.f32.mrf.mxu0
        %1314 = vmatprep.mubr.bf16.mxu0 0
        %1315 = vmatmul.mubr.bf16.gmra.mxu0 %v1196
        %v1316 = vpop.f32.mrf.mxu0
        %v1317 = vadd.f32 0.0, %v1316
        %v1318 = vpop.f32.mrf.mxu0
        %v1319 = vpop.f32.mrf.mxu0
        %v1320 = vadd.f32 0.0, %v1319
        %v1321 = vpop.f32.mrf.mxu0
        %1322 = vmatprep.mubr.bf16.mxu0 0
        %1323 = vmatmul.mubr.bf16.gmra.mxu0 %v1197
        %v1324 = vpop.f32.mrf.mxu0
        %v1325 = vadd.f32 0.0, %v1324
        %v1326 = vpop.f32.mrf.mxu0
        %v1327 = vpop.f32.mrf.mxu0
        %v1328 = vadd.f32 0.0, %v1327
        %v1329 = vpop.f32.mrf.mxu0
        %1330 = vmatprep.mubr.bf16.mxu0 0
        %1331 = vmatmul.mubr.bf16.gmra.mxu0 %v1198
        %v1332 = vpop.f32.mrf.mxu0
        %v1333 = vadd.f32 0.0, %v1332
        %v1334 = vpop.f32.mrf.mxu0
        %v1335 = vpop.f32.mrf.mxu0
        %v1336 = vadd.f32 0.0, %v1335
        %v1337 = vpop.f32.mrf.mxu0
        %1338 = vmatprep.mubr.bf16.mxu0 0
        %1339 = vmatmul.mubr.bf16.gmra.mxu0 %v1199
        %v1340 = vpop.f32.mrf.mxu0
        %v1341 = vadd.f32 0.0, %v1340
        %v1342 = vpop.f32.mrf.mxu0
        %v1343 = vpop.f32.mrf.mxu0
        %v1344 = vadd.f32 0.0, %v1343
        %v1345 = vpop.f32.mrf.mxu0
        %1346 = vmatprep.mubr.bf16.mxu0 0
        %1347 = vmatmul.mubr.bf16.gmra.mxu0 %v1200
        %v1348 = vpop.f32.mrf.mxu0
        %v1349 = vadd.f32 0.0, %v1348
        %v1350 = vpop.f32.mrf.mxu0
        %v1351 = vpop.f32.mrf.mxu0
        %v1352 = vadd.f32 0.0, %v1351
        %v1353 = vpop.f32.mrf.mxu0
        %1354 = vmatprep.mubr.bf16.mxu0 0
        %1355 = vmatmul.mubr.bf16.gmra.mxu0 %v1201
        %v1356 = vpop.f32.mrf.mxu0
        %v1357 = vadd.f32 0.0, %v1356
        %v1358 = vpop.f32.mrf.mxu0
        %v1359 = vpop.f32.mrf.mxu0
        %v1360 = vadd.f32 0.0, %v1359
        %v1361 = vpop.f32.mrf.mxu0
        %1362 = vdwg.mxu0
        %v1363 = vpack.c.bf16 %v1304, %v1301
        %v1364 = vpack.c.bf16 %v1312, %v1309
        %v1365 = vpack.c.bf16 %v1320, %v1317
        %v1366 = vpack.c.bf16 %v1328, %v1325
        %v1367 = vpack.c.bf16 %v1336, %v1333
        %v1368 = vpack.c.bf16 %v1344, %v1341
        %v1369 = vpack.c.bf16 %v1352, %v1349
        %v1370 = vpack.c.bf16 %v1360, %v1357
        %v1379 = vunpack.c.l.b16 %v1363
        %v1380 = vunpack.c.h.b16 %v1363
        %v1381 = vunpack.c.l.b16 %v1364
        %v1382 = vunpack.c.h.b16 %v1364
        %v1383 = vunpack.c.l.b16 %v1365
        %v1384 = vunpack.c.h.b16 %v1365
        %v1385 = vunpack.c.l.b16 %v1366
        %v1386 = vunpack.c.h.b16 %v1366
        %v1387 = vunpack.c.l.b16 %v1367
        %v1388 = vunpack.c.h.b16 %v1367
        %v1389 = vunpack.c.l.b16 %v1368
        %v1390 = vunpack.c.h.b16 %v1368
        %v1391 = vunpack.c.l.b16 %v1369
        %v1392 = vunpack.c.h.b16 %v1369
        %v1393 = vunpack.c.l.b16 %v1370
        %v1394 = vunpack.c.h.b16 %v1370
        %v1395 = vpack.c.b16 %v1379, %v1379
        %v1396 = vpack.c.b16 %v1380, %v1380
        %v1397 = vpack.c.b16 %v1381, %v1381
        %v1398 = vpack.c.b16 %v1382, %v1382
        %v1399 = vpack.c.b16 %v1383, %v1383
        %v1400 = vpack.c.b16 %v1384, %v1384
        %v1401 = vpack.c.b16 %v1385, %v1385
        %v1402 = vpack.c.b16 %v1386, %v1386
        %v1403 = vpack.c.b16 %v1387, %v1387
        %v1404 = vpack.c.b16 %v1388, %v1388
        %v1405 = vpack.c.b16 %v1389, %v1389
        %v1406 = vpack.c.b16 %v1390, %v1390
        %v1407 = vpack.c.b16 %v1391, %v1391
        %v1408 = vpack.c.b16 %v1392, %v1392
        %v1409 = vpack.c.b16 %v1393, %v1393
        %v1410 = vpack.c.b16 %v1394, %v1394
        %1427 = vst [vmem:[%s598] sm:$0xf] %v1395
        %1428 = vst [vmem:[%s598 + $0x4] sm:$0xf] %v1396
        %1429 = vst [vmem:[%s598 + $0x8] sm:$0xf] %v1397
        %1430 = vst [vmem:[%s598 + $0xc] sm:$0xf] %v1398
        %1431 = vst [vmem:[%s598 + $0x10] sm:$0xf] %v1399
        %1432 = vst [vmem:[%s598 + $0x14] sm:$0xf] %v1400
        %1433 = vst [vmem:[%s598 + $0x18] sm:$0xf] %v1401
        %1434 = vst [vmem:[%s598 + $0x1c] sm:$0xf] %v1402
        %1435 = vst [vmem:[%s598 + $0x20] sm:$0xf] %v1403
        %1436 = vst [vmem:[%s598 + $0x24] sm:$0xf] %v1404
        %1437 = vst [vmem:[%s598 + $0x28] sm:$0xf] %v1405
        %1438 = vst [vmem:[%s598 + $0x2c] sm:$0xf] %v1406
        %1439 = vst [vmem:[%s598 + $0x30] sm:$0xf] %v1407
        %1440 = vst [vmem:[%s598 + $0x34] sm:$0xf] %v1408
        %1441 = vst [vmem:[%s598 + $0x38] sm:$0xf] %v1409
        %1442 = vst [vmem:[%s598 + $0x3c] sm:$0xf] %v1410
        %v1443 = vld [vmem:[#allocation10] sm:$0xf]
        %v1444 = vld [vmem:[#allocation10 + $0x4] sm:$0xf]
        %v1445 = vld [vmem:[#allocation10 + $0x8] sm:$0xf]
        %v1446 = vld [vmem:[#allocation10 + $0xc] sm:$0xf]
        %v1447 = vld [vmem:[#allocation10 + $0x10] sm:$0xf]
        %v1448 = vld [vmem:[#allocation10 + $0x14] sm:$0xf]
        %v1449 = vld [vmem:[#allocation10 + $0x18] sm:$0xf]
        %v1450 = vld [vmem:[#allocation10 + $0x1c] sm:$0xf]
        %v1451 = vld [vmem:[#allocation10 + $0x20] sm:$0xf]
        %v1452 = vld [vmem:[#allocation10 + $0x24] sm:$0xf]
        %v1453 = vld [vmem:[#allocation10 + $0x28] sm:$0xf]
        %v1454 = vld [vmem:[#allocation10 + $0x2c] sm:$0xf]
        %v1455 = vld [vmem:[#allocation10 + $0x30] sm:$0xf]
        %v1456 = vld [vmem:[#allocation10 + $0x34] sm:$0xf]
        %v1457 = vld [vmem:[#allocation10 + $0x38] sm:$0xf]
        %v1458 = vld [vmem:[#allocation10 + $0x3c] sm:$0xf]
        %v1475 = vunpack.c.l.b16 %v1443
        %v1476 = vunpack.c.l.b16 %v1444
        %v1477 = vunpack.c.l.b16 %v1445
        %v1478 = vunpack.c.l.b16 %v1446
        %v1479 = vunpack.c.l.b16 %v1447
        %v1480 = vunpack.c.l.b16 %v1448
        %v1481 = vunpack.c.l.b16 %v1449
        %v1482 = vunpack.c.l.b16 %v1450
        %v1483 = vunpack.c.l.b16 %v1451
        %v1484 = vunpack.c.l.b16 %v1452
        %v1485 = vunpack.c.l.b16 %v1453
        %v1486 = vunpack.c.l.b16 %v1454
        %v1487 = vunpack.c.l.b16 %v1455
        %v1488 = vunpack.c.l.b16 %v1456
        %v1489 = vunpack.c.l.b16 %v1457
        %v1490 = vunpack.c.l.b16 %v1458
        %v1491 = vpack.c.b16 %v1476, %v1475
        %v1492 = vpack.c.b16 %v1478, %v1477
        %v1493 = vpack.c.b16 %v1480, %v1479
        %v1494 = vpack.c.b16 %v1482, %v1481
        %v1495 = vpack.c.b16 %v1484, %v1483
        %v1496 = vpack.c.b16 %v1486, %v1485
        %v1497 = vpack.c.b16 %v1488, %v1487
        %v1498 = vpack.c.b16 %v1490, %v1489
        %1507 = vmatprep.subr.bf16.mxu0 0
        %1508 = vmatpush1.bf16.msra.mxu0 %v1498
        %1509 = vmatprep.subr.bf16.mxu0 0
        %1510 = vmatpush1.bf16.msra.mxu0 %v1497
        %1511 = vmatprep.subr.bf16.mxu0 0
        %1512 = vmatpush1.bf16.msra.mxu0 %v1496
        %1513 = vmatprep.subr.bf16.mxu0 0
        %1514 = vmatpush1.bf16.msra.mxu0 %v1495
        %1515 = vmatprep.subr.bf16.mxu0 0
        %1516 = vmatpush1.bf16.msra.mxu0 %v1494
        %1517 = vmatprep.subr.bf16.mxu0 0
        %1518 = vmatpush1.bf16.msra.mxu0 %v1493
        %1519 = vmatprep.subr.bf16.mxu0 0
        %1520 = vmatpush1.bf16.msra.mxu0 %v1492
        %1521 = vmatprep.subr.bf16.mxu0 0
        %1522 = vmatpush1.bf16.msra.mxu0 %v1491
        %1523 = vmatprep.subr.bf16.mxu0 0
        %1524 = vmatpush2.bf16.msra.mxu0 0
        %1525 = vmatprep.subr.bf16.mxu0 0
        %1526 = vmatpush2.bf16.msra.mxu0 0
        %1527 = vmatprep.subr.bf16.mxu0 0
        %1528 = vmatpush2.bf16.msra.mxu0 0
        %1529 = vmatprep.subr.bf16.mxu0 0
        %1530 = vmatpush2.bf16.msra.mxu0 0
        %1531 = vmatprep.subr.bf16.mxu0 0
        %1532 = vmatpush2.bf16.msra.mxu0 0
        %1533 = vmatprep.subr.bf16.mxu0 0
        %1534 = vmatpush2.bf16.msra.mxu0 0
        %1535 = vmatprep.subr.bf16.mxu0 0
        %1536 = vmatpush2.bf16.msra.mxu0 0
        %1537 = vmatprep.subr.bf16.mxu0 0
        %1538 = vmatpush2.bf16.msra.mxu0 0
        %1539 = vmatprep.mubr.bf16.mxu0 0
        %1540 = vmatmul.mubr.bf16.gmra.mxu0 %v1194
        %v1541 = vpop.f32.mrf.mxu0
        %v1542 = vadd.f32 0.0, %v1541
        %v1543 = vpop.f32.mrf.mxu0
        %v1544 = vpop.f32.mrf.mxu0
        %v1545 = vadd.f32 0.0, %v1544
        %v1546 = vpop.f32.mrf.mxu0
        %1547 = vmatprep.mubr.bf16.mxu0 0
        %1548 = vmatmul.mubr.bf16.gmra.mxu0 %v1195
        %v1549 = vpop.f32.mrf.mxu0
        %v1550 = vadd.f32 0.0, %v1549
        %v1551 = vpop.f32.mrf.mxu0
        %v1552 = vpop.f32.mrf.mxu0
        %v1553 = vadd.f32 0.0, %v1552
        %v1554 = vpop.f32.mrf.mxu0
        %1555 = vmatprep.mubr.bf16.mxu0 0
        %1556 = vmatmul.mubr.bf16.gmra.mxu0 %v1196
        %v1557 = vpop.f32.mrf.mxu0
        %v1558 = vadd.f32 0.0, %v1557
        %v1559 = vpop.f32.mrf.mxu0
        %v1560 = vpop.f32.mrf.mxu0
        %v1561 = vadd.f32 0.0, %v1560
        %v1562 = vpop.f32.mrf.mxu0
        %1563 = vmatprep.mubr.bf16.mxu0 0
        %1564 = vmatmul.mubr.bf16.gmra.mxu0 %v1197
        %v1565 = vpop.f32.mrf.mxu0
        %v1566 = vadd.f32 0.0, %v1565
        %v1567 = vpop.f32.mrf.mxu0
        %v1568 = vpop.f32.mrf.mxu0
        %v1569 = vadd.f32 0.0, %v1568
        %v1570 = vpop.f32.mrf.mxu0
        %1571 = vmatprep.mubr.bf16.mxu0 0
        %1572 = vmatmul.mubr.bf16.gmra.mxu0 %v1198
        %v1573 = vpop.f32.mrf.mxu0
        %v1574 = vadd.f32 0.0, %v1573
        %v1575 = vpop.f32.mrf.mxu0
        %v1576 = vpop.f32.mrf.mxu0
        %v1577 = vadd.f32 0.0, %v1576
        %v1578 = vpop.f32.mrf.mxu0
        %1579 = vmatprep.mubr.bf16.mxu0 0
        %1580 = vmatmul.mubr.bf16.gmra.mxu0 %v1199
        %v1581 = vpop.f32.mrf.mxu0
        %v1582 = vadd.f32 0.0, %v1581
        %v1583 = vpop.f32.mrf.mxu0
        %v1584 = vpop.f32.mrf.mxu0
        %v1585 = vadd.f32 0.0, %v1584
        %v1586 = vpop.f32.mrf.mxu0
        %1587 = vmatprep.mubr.bf16.mxu0 0
        %1588 = vmatmul.mubr.bf16.gmra.mxu0 %v1200
        %v1589 = vpop.f32.mrf.mxu0
        %v1590 = vadd.f32 0.0, %v1589
        %v1591 = vpop.f32.mrf.mxu0
        %v1592 = vpop.f32.mrf.mxu0
        %v1593 = vadd.f32 0.0, %v1592
        %v1594 = vpop.f32.mrf.mxu0
        %1595 = vmatprep.mubr.bf16.mxu0 0
        %1596 = vmatmul.mubr.bf16.gmra.mxu0 %v1201
        %v1597 = vpop.f32.mrf.mxu0
        %v1598 = vadd.f32 0.0, %v1597
        %v1599 = vpop.f32.mrf.mxu0
        %v1600 = vpop.f32.mrf.mxu0
        %v1601 = vadd.f32 0.0, %v1600
        %v1602 = vpop.f32.mrf.mxu0
        %1603 = vdwg.mxu0
        %v1604 = vpack.c.bf16 %v1545, %v1542
        %v1605 = vpack.c.bf16 %v1553, %v1550
        %v1606 = vpack.c.bf16 %v1561, %v1558
        %v1607 = vpack.c.bf16 %v1569, %v1566
        %v1608 = vpack.c.bf16 %v1577, %v1574
        %v1609 = vpack.c.bf16 %v1585, %v1582
        %v1610 = vpack.c.bf16 %v1593, %v1590
        %v1611 = vpack.c.bf16 %v1601, %v1598
        %v1620 = vunpack.c.l.b16 %v1604
        %v1621 = vunpack.c.h.b16 %v1604
        %v1622 = vunpack.c.l.b16 %v1605
        %v1623 = vunpack.c.h.b16 %v1605
        %v1624 = vunpack.c.l.b16 %v1606
        %v1625 = vunpack.c.h.b16 %v1606
        %v1626 = vunpack.c.l.b16 %v1607
        %v1627 = vunpack.c.h.b16 %v1607
        %v1628 = vunpack.c.l.b16 %v1608
        %v1629 = vunpack.c.h.b16 %v1608
        %v1630 = vunpack.c.l.b16 %v1609
        %v1631 = vunpack.c.h.b16 %v1609
        %v1632 = vunpack.c.l.b16 %v1610
        %v1633 = vunpack.c.h.b16 %v1610
        %v1634 = vunpack.c.l.b16 %v1611
        %v1635 = vunpack.c.h.b16 %v1611
        %v1636 = vpack.c.b16 %v1620, %v1620
        %v1637 = vpack.c.b16 %v1621, %v1621
        %v1638 = vpack.c.b16 %v1622, %v1622
        %v1639 = vpack.c.b16 %v1623, %v1623
        %v1640 = vpack.c.b16 %v1624, %v1624
        %v1641 = vpack.c.b16 %v1625, %v1625
        %v1642 = vpack.c.b16 %v1626, %v1626
        %v1643 = vpack.c.b16 %v1627, %v1627
        %v1644 = vpack.c.b16 %v1628, %v1628
        %v1645 = vpack.c.b16 %v1629, %v1629
        %v1646 = vpack.c.b16 %v1630, %v1630
        %v1647 = vpack.c.b16 %v1631, %v1631
        %v1648 = vpack.c.b16 %v1632, %v1632
        %v1649 = vpack.c.b16 %v1633, %v1633
        %v1650 = vpack.c.b16 %v1634, %v1634
        %v1651 = vpack.c.b16 %v1635, %v1635
        %1668 = vst [vmem:[%s605] sm:$0xf] %v1636
        %1669 = vst [vmem:[%s605 + $0x4] sm:$0xf] %v1637
        %1670 = vst [vmem:[%s605 + $0x8] sm:$0xf] %v1638
        %1671 = vst [vmem:[%s605 + $0xc] sm:$0xf] %v1639
        %1672 = vst [vmem:[%s605 + $0x10] sm:$0xf] %v1640
        %1673 = vst [vmem:[%s605 + $0x14] sm:$0xf] %v1641
        %1674 = vst [vmem:[%s605 + $0x18] sm:$0xf] %v1642
        %1675 = vst [vmem:[%s605 + $0x1c] sm:$0xf] %v1643
        %1676 = vst [vmem:[%s605 + $0x20] sm:$0xf] %v1644
        %1677 = vst [vmem:[%s605 + $0x24] sm:$0xf] %v1645
        %1678 = vst [vmem:[%s605 + $0x28] sm:$0xf] %v1646
        %1679 = vst [vmem:[%s605 + $0x2c] sm:$0xf] %v1647
        %1680 = vst [vmem:[%s605 + $0x30] sm:$0xf] %v1648
        %1681 = vst [vmem:[%s605 + $0x34] sm:$0xf] %v1649
        %1682 = vst [vmem:[%s605 + $0x38] sm:$0xf] %v1650
        %1683 = vst [vmem:[%s605 + $0x3c] sm:$0xf] %v1651
        %v1684 = vld [vmem:[#allocation11] sm:$0xf]
        %v1685 = vld [vmem:[#allocation11 + $0x4] sm:$0xf]
        %v1686 = vld [vmem:[#allocation11 + $0x8] sm:$0xf]
        %v1687 = vld [vmem:[#allocation11 + $0xc] sm:$0xf]
        %v1688 = vld [vmem:[#allocation11 + $0x10] sm:$0xf]
        %v1689 = vld [vmem:[#allocation11 + $0x14] sm:$0xf]
        %v1690 = vld [vmem:[#allocation11 + $0x18] sm:$0xf]
        %v1691 = vld [vmem:[#allocation11 + $0x1c] sm:$0xf]
        %v1692 = vld [vmem:[#allocation11 + $0x20] sm:$0xf]
        %v1693 = vld [vmem:[#allocation11 + $0x24] sm:$0xf]
        %v1694 = vld [vmem:[#allocation11 + $0x28] sm:$0xf]
        %v1695 = vld [vmem:[#allocation11 + $0x2c] sm:$0xf]
        %v1696 = vld [vmem:[#allocation11 + $0x30] sm:$0xf]
        %v1697 = vld [vmem:[#allocation11 + $0x34] sm:$0xf]
        %v1698 = vld [vmem:[#allocation11 + $0x38] sm:$0xf]
        %v1699 = vld [vmem:[#allocation11 + $0x3c] sm:$0xf]
        %v1716 = vunpack.c.l.b16 %v1684
        %v1717 = vunpack.c.l.b16 %v1685
        %v1718 = vunpack.c.l.b16 %v1686
        %v1719 = vunpack.c.l.b16 %v1687
        %v1720 = vunpack.c.l.b16 %v1688
        %v1721 = vunpack.c.l.b16 %v1689
        %v1722 = vunpack.c.l.b16 %v1690
        %v1723 = vunpack.c.l.b16 %v1691
        %v1724 = vunpack.c.l.b16 %v1692
        %v1725 = vunpack.c.l.b16 %v1693
        %v1726 = vunpack.c.l.b16 %v1694
        %v1727 = vunpack.c.l.b16 %v1695
        %v1728 = vunpack.c.l.b16 %v1696
        %v1729 = vunpack.c.l.b16 %v1697
        %v1730 = vunpack.c.l.b16 %v1698
        %v1731 = vunpack.c.l.b16 %v1699
        %v1732 = vpack.c.b16 %v1717, %v1716
        %v1733 = vpack.c.b16 %v1719, %v1718
        %v1734 = vpack.c.b16 %v1721, %v1720
        %v1735 = vpack.c.b16 %v1723, %v1722
        %v1736 = vpack.c.b16 %v1725, %v1724
        %v1737 = vpack.c.b16 %v1727, %v1726
        %v1738 = vpack.c.b16 %v1729, %v1728
        %v1739 = vpack.c.b16 %v1731, %v1730
        %1748 = vmatprep.subr.bf16.mxu0 0
        %1749 = vmatpush1.bf16.msra.mxu0 %v1739
        %1750 = vmatprep.subr.bf16.mxu0 0
        %1751 = vmatpush1.bf16.msra.mxu0 %v1738
        %1752 = vmatprep.subr.bf16.mxu0 0
        %1753 = vmatpush1.bf16.msra.mxu0 %v1737
        %1754 = vmatprep.subr.bf16.mxu0 0
        %1755 = vmatpush1.bf16.msra.mxu0 %v1736
        %1756 = vmatprep.subr.bf16.mxu0 0
        %1757 = vmatpush1.bf16.msra.mxu0 %v1735
        %1758 = vmatprep.subr.bf16.mxu0 0
        %1759 = vmatpush1.bf16.msra.mxu0 %v1734
        %1760 = vmatprep.subr.bf16.mxu0 0
        %1761 = vmatpush1.bf16.msra.mxu0 %v1733
        %1762 = vmatprep.subr.bf16.mxu0 0
        %1763 = vmatpush1.bf16.msra.mxu0 %v1732
        %1764 = vmatprep.subr.bf16.mxu0 0
        %1765 = vmatpush2.bf16.msra.mxu0 0
        %1766 = vmatprep.subr.bf16.mxu0 0
        %1767 = vmatpush2.bf16.msra.mxu0 0
        %1768 = vmatprep.subr.bf16.mxu0 0
        %1769 = vmatpush2.bf16.msra.mxu0 0
        %1770 = vmatprep.subr.bf16.mxu0 0
        %1771 = vmatpush2.bf16.msra.mxu0 0
        %1772 = vmatprep.subr.bf16.mxu0 0
        %1773 = vmatpush2.bf16.msra.mxu0 0
        %1774 = vmatprep.subr.bf16.mxu0 0
        %1775 = vmatpush2.bf16.msra.mxu0 0
        %1776 = vmatprep.subr.bf16.mxu0 0
        %1777 = vmatpush2.bf16.msra.mxu0 0
        %1778 = vmatprep.subr.bf16.mxu0 0
        %1779 = vmatpush2.bf16.msra.mxu0 0
        %1780 = vmatprep.mubr.bf16.mxu0 0
        %1781 = vmatmul.mubr.bf16.gmra.mxu0 %v1194
        %v1782 = vpop.f32.mrf.mxu0
        %v1783 = vadd.f32 0.0, %v1782
        %v1784 = vpop.f32.mrf.mxu0
        %v1785 = vpop.f32.mrf.mxu0
        %v1786 = vadd.f32 0.0, %v1785
        %v1787 = vpop.f32.mrf.mxu0
        %1788 = vmatprep.mubr.bf16.mxu0 0
        %1789 = vmatmul.mubr.bf16.gmra.mxu0 %v1195
        %v1790 = vpop.f32.mrf.mxu0
        %v1791 = vadd.f32 0.0, %v1790
        %v1792 = vpop.f32.mrf.mxu0
        %v1793 = vpop.f32.mrf.mxu0
        %v1794 = vadd.f32 0.0, %v1793
        %v1795 = vpop.f32.mrf.mxu0
        %1796 = vmatprep.mubr.bf16.mxu0 0
        %1797 = vmatmul.mubr.bf16.gmra.mxu0 %v1196
        %v1798 = vpop.f32.mrf.mxu0
        %v1799 = vadd.f32 0.0, %v1798
        %v1800 = vpop.f32.mrf.mxu0
        %v1801 = vpop.f32.mrf.mxu0
        %v1802 = vadd.f32 0.0, %v1801
        %v1803 = vpop.f32.mrf.mxu0
        %1804 = vmatprep.mubr.bf16.mxu0 0
        %1805 = vmatmul.mubr.bf16.gmra.mxu0 %v1197
        %v1806 = vpop.f32.mrf.mxu0
        %v1807 = vadd.f32 0.0, %v1806
        %v1808 = vpop.f32.mrf.mxu0
        %v1809 = vpop.f32.mrf.mxu0
        %v1810 = vadd.f32 0.0, %v1809
        %v1811 = vpop.f32.mrf.mxu0
        %1812 = vmatprep.mubr.bf16.mxu0 0
        %1813 = vmatmul.mubr.bf16.gmra.mxu0 %v1198
        %v1814 = vpop.f32.mrf.mxu0
        %v1815 = vadd.f32 0.0, %v1814
        %v1816 = vpop.f32.mrf.mxu0
        %v1817 = vpop.f32.mrf.mxu0
        %v1818 = vadd.f32 0.0, %v1817
        %v1819 = vpop.f32.mrf.mxu0
        %1820 = vmatprep.mubr.bf16.mxu0 0
        %1821 = vmatmul.mubr.bf16.gmra.mxu0 %v1199
        %v1822 = vpop.f32.mrf.mxu0
        %v1823 = vadd.f32 0.0, %v1822
        %v1824 = vpop.f32.mrf.mxu0
        %v1825 = vpop.f32.mrf.mxu0
        %v1826 = vadd.f32 0.0, %v1825
        %v1827 = vpop.f32.mrf.mxu0
        %1828 = vmatprep.mubr.bf16.mxu0 0
        %1829 = vmatmul.mubr.bf16.gmra.mxu0 %v1200
        %v1830 = vpop.f32.mrf.mxu0
        %v1831 = vadd.f32 0.0, %v1830
        %v1832 = vpop.f32.mrf.mxu0
        %v1833 = vpop.f32.mrf.mxu0
        %v1834 = vadd.f32 0.0, %v1833
        %v1835 = vpop.f32.mrf.mxu0
        %1836 = vmatprep.mubr.bf16.mxu0 0
        %1837 = vmatmul.mubr.bf16.gmra.mxu0 %v1201
        %v1838 = vpop.f32.mrf.mxu0
        %v1839 = vadd.f32 0.0, %v1838
        %v1840 = vpop.f32.mrf.mxu0
        %v1841 = vpop.f32.mrf.mxu0
        %v1842 = vadd.f32 0.0, %v1841
        %v1843 = vpop.f32.mrf.mxu0
        %1844 = vdwg.mxu0
        %v1845 = vpack.c.bf16 %v1786, %v1783
        %v1846 = vpack.c.bf16 %v1794, %v1791
        %v1847 = vpack.c.bf16 %v1802, %v1799
        %v1848 = vpack.c.bf16 %v1810, %v1807
        %v1849 = vpack.c.bf16 %v1818, %v1815
        %v1850 = vpack.c.bf16 %v1826, %v1823
        %v1851 = vpack.c.bf16 %v1834, %v1831
        %v1852 = vpack.c.bf16 %v1842, %v1839
        %v1861 = vunpack.c.l.b16 %v1845
        %v1862 = vunpack.c.h.b16 %v1845
        %v1863 = vunpack.c.l.b16 %v1846
        %v1864 = vunpack.c.h.b16 %v1846
        %v1865 = vunpack.c.l.b16 %v1847
        %v1866 = vunpack.c.h.b16 %v1847
        %v1867 = vunpack.c.l.b16 %v1848
        %v1868 = vunpack.c.h.b16 %v1848
        %v1869 = vunpack.c.l.b16 %v1849
        %v1870 = vunpack.c.h.b16 %v1849
        %v1871 = vunpack.c.l.b16 %v1850
        %v1872 = vunpack.c.h.b16 %v1850
        %v1873 = vunpack.c.l.b16 %v1851
        %v1874 = vunpack.c.h.b16 %v1851
        %v1875 = vunpack.c.l.b16 %v1852
        %v1876 = vunpack.c.h.b16 %v1852
        %v1877 = vpack.c.b16 %v1861, %v1861
        %v1878 = vpack.c.b16 %v1862, %v1862
        %v1879 = vpack.c.b16 %v1863, %v1863
        %v1880 = vpack.c.b16 %v1864, %v1864
        %v1881 = vpack.c.b16 %v1865, %v1865
        %v1882 = vpack.c.b16 %v1866, %v1866
        %v1883 = vpack.c.b16 %v1867, %v1867
        %v1884 = vpack.c.b16 %v1868, %v1868
        %v1885 = vpack.c.b16 %v1869, %v1869
        %v1886 = vpack.c.b16 %v1870, %v1870
        %v1887 = vpack.c.b16 %v1871, %v1871
        %v1888 = vpack.c.b16 %v1872, %v1872
        %v1889 = vpack.c.b16 %v1873, %v1873
        %v1890 = vpack.c.b16 %v1874, %v1874
        %v1891 = vpack.c.b16 %v1875, %v1875
        %v1892 = vpack.c.b16 %v1876, %v1876
        %1909 = vst [vmem:[%s612] sm:$0xf] %v1877
        %1910 = vst [vmem:[%s612 + $0x4] sm:$0xf] %v1878
        %1911 = vst [vmem:[%s612 + $0x8] sm:$0xf] %v1879
        %1912 = vst [vmem:[%s612 + $0xc] sm:$0xf] %v1880
        %1913 = vst [vmem:[%s612 + $0x10] sm:$0xf] %v1881
        %1914 = vst [vmem:[%s612 + $0x14] sm:$0xf] %v1882
        %1915 = vst [vmem:[%s612 + $0x18] sm:$0xf] %v1883
        %1916 = vst [vmem:[%s612 + $0x1c] sm:$0xf] %v1884
        %1917 = vst [vmem:[%s612 + $0x20] sm:$0xf] %v1885
        %1918 = vst [vmem:[%s612 + $0x24] sm:$0xf] %v1886
        %1919 = vst [vmem:[%s612 + $0x28] sm:$0xf] %v1887
        %1920 = vst [vmem:[%s612 + $0x2c] sm:$0xf] %v1888
        %1921 = vst [vmem:[%s612 + $0x30] sm:$0xf] %v1889
        %1922 = vst [vmem:[%s612 + $0x34] sm:$0xf] %v1890
        %1923 = vst [vmem:[%s612 + $0x38] sm:$0xf] %v1891
        %1924 = vst [vmem:[%s612 + $0x3c] sm:$0xf] %v1892
        %s1925 = sand.u32 %s291, 1
        %s1926 = scalar_lea.sflag [#allocation4], %s1925
        %s1927 = sand.u32 %s291, 1
        %s1928 = smul.addr %s1927, 64
        %s1929 = scalar_lea.vmem [#allocation13], %s1928
        %s1930 = sand.u32 %s42, 1
        %s1931 = scalar_lea.sflag [#allocation15], %s1930
        %s1932 = sand.u32 %s319, 1
        %s1933 = smul.addr %s1932, 64
        %s1934 = scalar_lea.vmem [#allocation14], %s1933
        %s1935 = sand.u32 %s42, 1
        %s1936 = scalar_lea.sflag [#allocation15], %s1935
        %s1937 = sand.u32 %s347, 1
        %s1938 = smul.addr %s1937, 64
        %s1939 = scalar_lea.vmem [#allocation16], %s1938
        %s1940 = sand.u32 %s375, 1
        %s1941 = scalar_lea.sflag [#allocation18], %s1940
        %s1942 = sand.u32 %s375, 1
        %s1943 = smul.addr %s1942, 64
        %s1944 = scalar_lea.vmem [#allocation17], %s1943
        // Predicated region
        $region85: #{tpu_custom_call.1} parent=59 // pred_check
          %p1945 = pneg %p301
        $region86: #{tpu_custom_call.1} parent=59 // pred_check_branch
          %1947 = sbr.rel (%p1945) target = $region88
        $region87: #{tpu_custom_call.1} parent=59 // pred_region
          %s1948 = smul.u32 16, %s47
          %s1950 = ssub.s32 1024, 1024
          %1951 = vsyncadd %s1926, %s1950
          %s1952 = smul.addr %s46, 32
          %s1953 = sadd.s32 %s1948, %s1952
          %s1954 = smul.addr %s1953, 64
          %s1955 = scalar_lea.hbm %s10, %s1954
          %s1956 = sshll.u32 %s1929, 4
          %s1957 = int_to_ptr.vmem [resolvable:$true] %s1956
          %1962 = dma.vmem_to_hbm [thread:$0]  %s1957, 1024, %s1955, %s1926, 64, 64, 4
        $region88: #{tpu_custom_call.1} parent=59 // pred_fallthru
          _
        // Predicated region
        $region89: #{tpu_custom_call.1} parent=59 // pred_check
          %p1963 = pneg %p329
        $region90: #{tpu_custom_call.1} parent=59 // pred_check_branch
          %1965 = sbr.rel (%p1963) target = $region92
        $region91: #{tpu_custom_call.1} parent=59 // pred_region
          %s1966 = smul.u32 16, %s47
          %s1968 = ssub.s32 1024, 1024
          %1969 = vsyncadd %s1931, %s1968
          %s1970 = smul.addr %s46, 32
          %s1971 = sadd.s32 %s1966, %s1970
          %s1972 = smul.addr %s1971, 64
          %s1973 = scalar_lea.hbm %s11, %s1972
          %s1974 = sshll.u32 %s1934, 4
          %s1975 = int_to_ptr.vmem [resolvable:$true] %s1974
          %1980 = dma.vmem_to_hbm [thread:$0]  %s1975, 1024, %s1973, %s1931, 64, 64, 4
        $region92: #{tpu_custom_call.1} parent=59 // pred_fallthru
          _
        // Predicated region
        $region93: #{tpu_custom_call.1} parent=59 // pred_check
          %p1981 = pneg %p357
        $region94: #{tpu_custom_call.1} parent=59 // pred_check_branch
          %1983 = sbr.rel (%p1981) target = $region96
        $region95: #{tpu_custom_call.1} parent=59 // pred_region
          %s1984 = smul.u32 16, %s47
          %s1986 = ssub.s32 1024, 1024
          %1987 = vsyncadd %s1936, %s1986
          %s1988 = smul.addr %s46, 32
          %s1989 = sadd.s32 %s1984, %s1988
          %s1990 = smul.addr %s1989, 64
          %s1991 = scalar_lea.hbm %s12, %s1990
          %s1992 = sshll.u32 %s1939, 4
          %s1993 = int_to_ptr.vmem [resolvable:$true] %s1992
          %1998 = dma.vmem_to_hbm [thread:$0]  %s1993, 1024, %s1991, %s1936, 64, 64, 4
        $region96: #{tpu_custom_call.1} parent=59 // pred_fallthru
          _
        // Predicated region
        $region97: #{tpu_custom_call.1} parent=59 // pred_check
          %p1999 = pneg %p385
        $region98: #{tpu_custom_call.1} parent=59 // pred_check_branch
          %2001 = sbr.rel (%p1999) target = $region100
        $region99: #{tpu_custom_call.1} parent=59 // pred_region
          %s2002 = smul.u32 16, %s47
          %s2004 = ssub.s32 1024, 1024
          %2005 = vsyncadd %s1941, %s2004
          %s2006 = smul.addr %s46, 32
          %s2007 = sadd.s32 %s2002, %s2006
          %s2008 = smul.addr %s2007, 64
          %s2009 = scalar_lea.hbm %s13, %s2008
          %s2010 = sshll.u32 %s1944, 4
          %s2011 = int_to_ptr.vmem [resolvable:$true] %s2010
          %2016 = dma.vmem_to_hbm [thread:$0]  %s2011, 1024, %s2009, %s1941, 64, 64, 4
        $region100: #{tpu_custom_call.1} parent=59 // pred_fallthru
          _
      $region60: #{tpu_custom_call.1} parent=5 // pred_fallthru
        _
      %p2017 = scmp.le.s32.totalorder 2, %s37
      // Predicated region
      $region101: #{tpu_custom_call.1} parent=5 // pred_check
        %p2018 = pneg %p2017
      $region102: #{tpu_custom_call.1} parent=5 // pred_check_branch
        %2020 = sbr.rel (%p2018) target = $region104
      $region103: #{tpu_custom_call.1} parent=5 // pred_region
        %s2021 = ssub.s32 %s37, 2
        // Predicated region
        $region105: #{tpu_custom_call.1} parent=103 // pred_check
          %p2022 = pneg %p307
        $region106: #{tpu_custom_call.1} parent=103 // pred_check_branch
          %2024 = sbr.rel (%p2022) target = $region108
        $region107: #{tpu_custom_call.1} parent=103 // pred_region
          %s2025 = sand.u32 %s292, 1
          %s2026 = scalar_lea.sflag [#allocation4], %s2025
          %s2027 = sand.u32 %s292, 1
          %s2028 = smul.addr %s2027, 64
          %s2029 = scalar_lea.vmem [#allocation13], %s2028
          %2030 = dma.done %s2026, 1024
        $region108: #{tpu_custom_call.1} parent=103 // pred_fallthru
          _
        // Predicated region
        $region109: #{tpu_custom_call.1} parent=103 // pred_check
          %p2031 = pneg %p335
        $region110: #{tpu_custom_call.1} parent=103 // pred_check_branch
          %2033 = sbr.rel (%p2031) target = $region112
        $region111: #{tpu_custom_call.1} parent=103 // pred_region
          %s2034 = sand.u32 %s43, 1
          %s2035 = scalar_lea.sflag [#allocation15], %s2034
          %s2036 = sand.u32 %s320, 1
          %s2037 = smul.addr %s2036, 64
          %s2038 = scalar_lea.vmem [#allocation14], %s2037
          %2039 = dma.done %s2035, 1024
        $region112: #{tpu_custom_call.1} parent=103 // pred_fallthru
          _
        // Predicated region
        $region113: #{tpu_custom_call.1} parent=103 // pred_check
          %p2040 = pneg %p363
        $region114: #{tpu_custom_call.1} parent=103 // pred_check_branch
          %2042 = sbr.rel (%p2040) target = $region116
        $region115: #{tpu_custom_call.1} parent=103 // pred_region
          %s2043 = sand.u32 %s43, 1
          %s2044 = scalar_lea.sflag [#allocation15], %s2043
          %s2045 = sand.u32 %s348, 1
          %s2046 = smul.addr %s2045, 64
          %s2047 = scalar_lea.vmem [#allocation16], %s2046
          %2048 = dma.done %s2044, 1024
        $region116: #{tpu_custom_call.1} parent=103 // pred_fallthru
          _
        // Predicated region
        $region117: #{tpu_custom_call.1} parent=103 // pred_check
          %p2049 = pneg %p391
        $region118: #{tpu_custom_call.1} parent=103 // pred_check_branch
          %2051 = sbr.rel (%p2049) target = $region120
        $region119: #{tpu_custom_call.1} parent=103 // pred_region
          %s2052 = sand.u32 %s376, 1
          %s2053 = scalar_lea.sflag [#allocation18], %s2052
          %s2054 = sand.u32 %s376, 1
          %s2055 = smul.addr %s2054, 64
          %s2056 = scalar_lea.vmem [#allocation17], %s2055
          %2057 = dma.done %s2053, 1024
        $region120: #{tpu_custom_call.1} parent=103 // pred_fallthru
          _
      $region104: #{tpu_custom_call.1} parent=5 // pred_fallthru
        _
    $region6: #{tpu_custom_call.1} parent=1 // loop_footer
      %s41 = sadd.s32 1, %s37
    $region7: #{tpu_custom_call.1} parent=1 // loop_footer_branch
      %36 = sbr.rel target = $region3
    $region8: #{tpu_custom_call.1} parent=1 // loop_exit
      _
    %2058 = vsyncpa [#allocation3], 1
    %s2059 = scalar_lea.sflag [#allocation3], 1
    %2060 = vsyncpa %s2059, 1
    %2061 = vsyncpa [#allocation6], 1
    %s2062 = scalar_lea.sflag [#allocation6], 1
    %2063 = vsyncpa %s2062, 1
    %2064 = vsyncpa [#allocation9], 1
    %2065 = vsyncpa [#allocation12], 1
    %2066 = vsyncpa [#allocation4], 1
    %s2067 = scalar_lea.sflag [#allocation4], 1
    %2068 = vsyncpa %s2067, 1
    %2069 = vsyncpa [#allocation15], 1
    %s2070 = scalar_lea.sflag [#allocation15], 1
    %2071 = vsyncpa %s2070, 1
    %2072 = vsyncpa [#allocation18], 1
    %s2073 = scalar_lea.sflag [#allocation18], 1
    %2074 = vsyncpa %s2073, 1

// kernel: tpu_custom_call.1
$region0: #{tpu_custom_call.1}
  #allocation0 [shape = 'u32[]', space=smem, size = 0x4, offset = 0x4, fixed_abs, tag = 'smem constant byte address 0x4 - core index']
  #allocation1 [shape = 'u32[144,128]{1,0:T(1,128)}', space=vmem, size = 0x12000, scoped, tag = 'internal scratch']
  %s0 = inlined_call_operand.hbm [shape: f32[2,128,256], index: 0, kind: input, shape index: {}]
  %s1 = inlined_call_operand.hbm [shape: f32[2,1,128], index: 1, kind: input, shape index: {}]
  %s2 = inlined_call_operand.vmem [shape: f32[2,1,128], index: 2, kind: input, shape index: {}]
  %s3 = inlined_call_operand.hbm [shape: bf16[128,128], index: 3, kind: input, shape index: {}]
  %s4 = inlined_call_operand.vmem [shape: f32[1,128], index: 4, kind: input, shape index: {}]
  %s5 = inlined_call_operand.vmem [shape: f32[1,128], index: 5, kind: input, shape index: {}]
  %s6 = inlined_call_operand.vmem [shape: f32[1,128], index: 6, kind: input, shape index: {}]
  %s7 = inlined_call_operand.hbm [shape: bf16[128,128], index: 7, kind: input, shape index: {}]
  %s8 = inlined_call_operand.hbm [shape: bf16[128,128], index: 8, kind: input, shape index: {}]
  %s9 = inlined_call_operand.hbm [shape: bf16[128,128], index: 9, kind: input, shape index: {}]
  %s10 = inlined_call_operand.hbm [shape: bf16[2,256,128], index: 10, kind: output, shape index: {0}]
  %s11 = inlined_call_operand.hbm [shape: bf16[2,256,128], index: 11, kind: output, shape index: {1}]
  %s12 = inlined_call_operand.hbm [shape: bf16[2,256,128], index: 12, kind: output, shape index: {2}]
  %s13 = inlined_call_operand.hbm [shape: bf16[2,256,128], index: 13, kind: output, shape index: {3}]
  %14 = xla_tuple %s10, %s11, %s12, %s13
  %s15 = sld [smem:[#allocation0]]
  $region121: #{tpu_custom_call.1} parent=0
    _
  %s17 = ssub.s32 1, %s15
  %s18 = scalar_select 0, %s17, %s15
  $region1: #{tpu_custom_call.1} parent=0
    #allocation2 [shape = 'u8[131072]{0}', space=vmem, size = 0x20000, scoped, tag = 'input window, operand 0']
    #allocation3 [shape = 's32[2]{0}', space=sflag, size = 0x8, scoped, tag = 'scoped memory for tpu_custom_call.1']
    #allocation4 [shape = 's32[2]{0}', space=sflag, size = 0x8, scoped, tag = 'scoped memory for tpu_custom_call.1']
    #allocation5 [shape = 'u8[1024]{0}', space=vmem, size = 0x400, scoped, tag = 'input window, operand 1']
    #allocation6 [shape = 's32[2]{0}', space=sflag, size = 0x8, scoped, tag = 'scoped memory for tpu_custom_call.1']
    #allocation7 [shape = 'u8[32768]{0}', space=vmem, size = 0x8000, scoped, tag = 'input window, operand 3, single buffered']
    #allocation8 [shape = 'u8[32768]{0}', space=vmem, size = 0x8000, scoped, tag = 'input window, operand 7, single buffered']
    #allocation9 [shape = 's32[1]{0}', space=sflag, size = 0x4, scoped, tag = 'scoped memory for tpu_custom_call.1']
    #allocation10 [shape = 'u8[32768]{0}', space=vmem, size = 0x8000, scoped, tag = 'input window, operand 8, single buffered']
    #allocation11 [shape = 'u8[32768]{0}', space=vmem, size = 0x8000, scoped, tag = 'input window, operand 9, single buffered']
    #allocation12 [shape = 's32[1]{0}', space=sflag, size = 0x4, scoped, tag = 'scoped memory for tpu_custom_call.1']
    #allocation13 [shape = 'u8[65536]{0}', space=vmem, size = 0x10000, scoped, tag = 'output window, operand 0']
    #allocation14 [shape = 'u8[65536]{0}', space=vmem, size = 0x10000, scoped, tag = 'output window, operand 1']
    #allocation15 [shape = 's32[2]{0}', space=sflag, size = 0x8, scoped, tag = 'scoped memory for tpu_custom_call.1']
    #allocation16 [shape = 'u8[65536]{0}', space=vmem, size = 0x10000, scoped, tag = 'output window, operand 2']
    #allocation17 [shape = 'u8[65536]{0}', space=vmem, size = 0x10000, scoped, tag = 'output window, operand 3']
    #allocation18 [shape = 's32[2]{0}', space=sflag, size = 0x8, scoped, tag = 'scoped memory for tpu_custom_call.1']
    %19 = vsyncpa [#allocation3], 0
    %s20 = scalar_lea.sflag [#allocation3], 1
    %21 = vsyncpa %s20, 0
    %22 = vsyncpa [#allocation6], 0
    %s23 = scalar_lea.sflag [#allocation6], 1
    %24 = vsyncpa %s23, 0
    %25 = vsyncpa [#allocation9], 0
    %26 = vsyncpa [#allocation12], 0
    %27 = vsyncpa [#allocation4], 0
    %s28 = scalar_lea.sflag [#allocation4], 1
    %29 = vsyncpa %s28, 0
    %30 = vsyncpa [#allocation15], 0
    %s31 = scalar_lea.sflag [#allocation15], 1
    %32 = vsyncpa %s31, 0
    %33 = vsyncpa [#allocation18], 0
    %s34 = scalar_lea.sflag [#allocation18], 1
    %35 = vsyncpa %s34, 0
    loop: start=0, step=1, limit=6
    $region2: #{tpu_custom_call.1} parent=1 // loop_pre_header
      _
    $region3: #{tpu_custom_call.1} parent=1 // loop_header
      %s37 = sphi 0, %s41
      %p38 = scmp.ge.s32.totalorder %s37, 6
      %s44 = sphi 0, %s56
      %s45 = sphi 0, %s52
      %s46 = sphi 0, %s44
      %s47 = sphi 0, %s45
      %s48 = sphi 0, %s46
      %s49 = sphi 0, %s47
      %s61 = sphi 0, %s63
      %s64 = sphi 0, %s61
      %s65 = sphi 0, %s64
      %s81 = sphi 0, %s65
      %s87 = sphi 0, %s89
      %s90 = sphi 0, %s87
      %s91 = sphi 0, %s90
      %s107 = sphi 0, %s91
      %s113 = sphi 0, %s115
      %s116 = sphi 0, %s113
      %s117 = sphi 0, %s116
      %s133 = sphi 0, %s117
      %s137 = sphi 0, %s137
      %s139 = sphi 0, %s137
      %s140 = sphi 0, %s139
      %s154 = sphi 0, %s140
      %s158 = sphi 0, %s158
      %s160 = sphi 0, %s158
      %s161 = sphi 0, %s160
      %s175 = sphi 0, %s161
      %s179 = sphi 0, %s179
      %s181 = sphi 0, %s179
      %s182 = sphi 0, %s181
      %s196 = sphi 0, %s182
      %s200 = sphi 0, %s200
      %s202 = sphi 0, %s200
      %s203 = sphi 0, %s202
      %s217 = sphi 0, %s203
      %s221 = sphi 0, %s221
      %s223 = sphi 0, %s221
      %s224 = sphi 0, %s223
      %s238 = sphi 0, %s224
      %s242 = sphi 0, %s242
      %s244 = sphi 0, %s242
      %s245 = sphi 0, %s244
      %s259 = sphi 0, %s245
      %s263 = sphi 0, %s263
      %s265 = sphi 0, %s263
      %s266 = sphi 0, %s265
      %s280 = sphi 0, %s266
      %s288 = sphi 0, %s290
      %s291 = sphi 0, %s288
      %s292 = sphi 0, %s291
      %s308 = sphi 0, %s292
      %s316 = sphi 0, %s318
      %s319 = sphi 0, %s316
      %s320 = sphi 0, %s319
      %s336 = sphi 0, %s320
      %s344 = sphi 0, %s346
      %s347 = sphi 0, %s344
      %s348 = sphi 0, %s347
      %s364 = sphi 0, %s348
      %s372 = sphi 0, %s374
      %s375 = sphi 0, %s372
      %s376 = sphi 0, %s375
      %s392 = sphi 0, %s376
    $region4: #{tpu_custom_call.1} parent=1 // loop_header_branch
      %40 = sbr.rel (%p38) target = $region8
    $region5: #{tpu_custom_call.1} parent=1 // loop_body
      %s42 = ssub.s32 %s37, 1
      %s43 = ssub.s32 %s37, 2
      %s50 = sadd.s32 1, %s45
      %p51 = scmp.ge.s32.totalorder %s50, 2
      %s52 = scalar_select %p51, 0, %s50
      %s53 = sadd.s32 1, %s44
      %s54 = scalar_select %p51, %s53, %s44
      %p55 = scmp.ge.s32.totalorder %s54, 2
      %s56 = scalar_select %p55, 0, %s54
      %s57 = ssub.s32 %s44, %s56
      %s58 = ssub.s32 %s45, %s52
      %s59 = sor.u32 %s57, %s58
      %p60 = scmp.eq.s32.totalorder %s59, 0
      %s62 = sadd.s32 %s61, 1
      %s63 = scalar_select %p60, %s61, %s62
      %p66 = pneg %p60
      %p67 = scmp.eq.s32.totalorder %s37, 3
      %p68 = por %p66, %p67
      %p69 = scmp.ne.s32.totalorder %s61, %s64
      %p70 = scmp.eq.s32.totalorder %s37, 0
      %p71 = por %p69, %p70
      %p72 = scmp.ne.s32.totalorder %s61, %s64
      %p73 = scmp.eq.s32.totalorder %s42, 3
      %p74 = por %p72, %p73
      %p75 = scmp.ne.s32.totalorder %s64, %s65
      %p76 = scmp.eq.s32.totalorder %s42, 0
      %p77 = por %p75, %p76
      %p78 = scmp.ne.s32.totalorder %s64, %s65
      %p79 = scmp.eq.s32.totalorder %s43, 3
      %p80 = por %p78, %p79
      %p82 = scmp.ne.s32.totalorder %s65, %s81
      %p83 = scmp.eq.s32.totalorder %s43, 0
      %p84 = por %p82, %p83
      %s85 = ssub.s32 %s44, %s56
      %p86 = scmp.eq.s32.totalorder %s85, 0
      %s88 = sadd.s32 %s87, 1
      %s89 = scalar_select %p86, %s87, %s88
      %p92 = pneg %p86
      %p93 = scmp.eq.s32.totalorder %s37, 3
      %p94 = por %p92, %p93
      %p95 = scmp.ne.s32.totalorder %s87, %s90
      %p96 = scmp.eq.s32.totalorder %s37, 0
      %p97 = por %p95, %p96
      %p98 = scmp.ne.s32.totalorder %s87, %s90
      %p99 = scmp.eq.s32.totalorder %s42, 3
      %p100 = por %p98, %p99
      %p101 = scmp.ne.s32.totalorder %s90, %s91
      %p102 = scmp.eq.s32.totalorder %s42, 0
      %p103 = por %p101, %p102
      %p104 = scmp.ne.s32.totalorder %s90, %s91
      %p105 = scmp.eq.s32.totalorder %s43, 3
      %p106 = por %p104, %p105
      %p108 = scmp.ne.s32.totalorder %s91, %s107
      %p109 = scmp.eq.s32.totalorder %s43, 0
      %p110 = por %p108, %p109
      %s111 = ssub.s32 %s44, %s56
      %p112 = scmp.eq.s32.totalorder %s111, 0
      %s114 = sadd.s32 %s113, 1
      %s115 = scalar_select %p112, %s113, %s114
      %p118 = pneg %p112
      %p119 = scmp.eq.s32.totalorder %s37, 3
      %p120 = por %p118, %p119
      %p121 = scmp.ne.s32.totalorder %s113, %s116
      %p122 = scmp.eq.s32.totalorder %s37, 0
      %p123 = por %p121, %p122
      %p124 = scmp.ne.s32.totalorder %s113, %s116
      %p125 = scmp.eq.s32.totalorder %s42, 3
      %p126 = por %p124, %p125
      %p127 = scmp.ne.s32.totalorder %s116, %s117
      %p128 = scmp.eq.s32.totalorder %s42, 0
      %p129 = por %p127, %p128
      %p130 = scmp.ne.s32.totalorder %s116, %s117
      %p131 = scmp.eq.s32.totalorder %s43, 3
      %p132 = por %p130, %p131
      %p134 = scmp.ne.s32.totalorder %s117, %s133
      %p135 = scmp.eq.s32.totalorder %s43, 0
      %p136 = por %p134, %p135
      %s138 = sadd.s32 %s137, 1
      %p141 = scmp.eq.s32.totalorder %s37, 3
      %p142 = scmp.ne.s32.totalorder %s137, %s139
      %p143 = scmp.eq.s32.totalorder %s37, 0
      %p144 = por %p142, %p143
      %p145 = scmp.ne.s32.totalorder %s137, %s139
      %p146 = scmp.eq.s32.totalorder %s42, 3
      %p147 = por %p145, %p146
      %p148 = scmp.ne.s32.totalorder %s139, %s140
      %p149 = scmp.eq.s32.totalorder %s42, 0
      %p150 = por %p148, %p149
      %p151 = scmp.ne.s32.totalorder %s139, %s140
      %p152 = scmp.eq.s32.totalorder %s43, 3
      %p153 = por %p151, %p152
      %p155 = scmp.ne.s32.totalorder %s140, %s154
      %p156 = scmp.eq.s32.totalorder %s43, 0
      %p157 = por %p155, %p156
      %s159 = sadd.s32 %s158, 1
      %p162 = scmp.eq.s32.totalorder %s37, 3
      %p163 = scmp.ne.s32.totalorder %s158, %s160
      %p164 = scmp.eq.s32.totalorder %s37, 0
      %p165 = por %p163, %p164
      %p166 = scmp.ne.s32.totalorder %s158, %s160
      %p167 = scmp.eq.s32.totalorder %s42, 3
      %p168 = por %p166, %p167
      %p169 = scmp.ne.s32.totalorder %s160, %s161
      %p170 = scmp.eq.s32.totalorder %s42, 0
      %p171 = por %p169, %p170
      %p172 = scmp.ne.s32.totalorder %s160, %s161
      %p173 = scmp.eq.s32.totalorder %s43, 3
      %p174 = por %p172, %p173
      %p176 = scmp.ne.s32.totalorder %s161, %s175
      %p177 = scmp.eq.s32.totalorder %s43, 0
      %p178 = por %p176, %p177
      %s180 = sadd.s32 %s179, 1
      %p183 = scmp.eq.s32.totalorder %s37, 3
      %p184 = scmp.ne.s32.totalorder %s179, %s181
      %p185 = scmp.eq.s32.totalorder %s37, 0
      %p186 = por %p184, %p185
      %p187 = scmp.ne.s32.totalorder %s179, %s181
      %p188 = scmp.eq.s32.totalorder %s42, 3
      %p189 = por %p187, %p188
      %p190 = scmp.ne.s32.totalorder %s181, %s182
      %p191 = scmp.eq.s32.totalorder %s42, 0
      %p192 = por %p190, %p191
      %p193 = scmp.ne.s32.totalorder %s181, %s182
      %p194 = scmp.eq.s32.totalorder %s43, 3
      %p195 = por %p193, %p194
      %p197 = scmp.ne.s32.totalorder %s182, %s196
      %p198 = scmp.eq.s32.totalorder %s43, 0
      %p199 = por %p197, %p198
      %s201 = sadd.s32 %s200, 1
      %p204 = scmp.eq.s32.totalorder %s37, 3
      %p205 = scmp.ne.s32.totalorder %s200, %s202
      %p206 = scmp.eq.s32.totalorder %s37, 0
      %p207 = por %p205, %p206
      %p208 = scmp.ne.s32.totalorder %s200, %s202
      %p209 = scmp.eq.s32.totalorder %s42, 3
      %p210 = por %p208, %p209
      %p211 = scmp.ne.s32.totalorder %s202, %s203
      %p212 = scmp.eq.s32.totalorder %s42, 0
      %p213 = por %p211, %p212
      %p214 = scmp.ne.s32.totalorder %s202, %s203
      %p215 = scmp.eq.s32.totalorder %s43, 3
      %p216 = por %p214, %p215
      %p218 = scmp.ne.s32.totalorder %s203, %s217
      %p219 = scmp.eq.s32.totalorder %s43, 0
      %p220 = por %p218, %p219
      %s222 = sadd.s32 %s221, 1
      %p225 = scmp.eq.s32.totalorder %s37, 3
      %p226 = scmp.ne.s32.totalorder %s221, %s223
      %p227 = scmp.eq.s32.totalorder %s37, 0
      %p228 = por %p226, %p227
      %p229 = scmp.ne.s32.totalorder %s221, %s223
      %p230 = scmp.eq.s32.totalorder %s42, 3
      %p231 = por %p229, %p230
      %p232 = scmp.ne.s32.totalorder %s223, %s224
      %p233 = scmp.eq.s32.totalorder %s42, 0
      %p234 = por %p232, %p233
      %p235 = scmp.ne.s32.totalorder %s223, %s224
      %p236 = scmp.eq.s32.totalorder %s43, 3
      %p237 = por %p235, %p236
      %p239 = scmp.ne.s32.totalorder %s224, %s238
      %p240 = scmp.eq.s32.totalorder %s43, 0
      %p241 = por %p239, %p240
      %s243 = sadd.s32 %s242, 1
      %p246 = scmp.eq.s32.totalorder %s37, 3
      %p247 = scmp.ne.s32.totalorder %s242, %s244
      %p248 = scmp.eq.s32.totalorder %s37, 0
      %p249 = por %p247, %p248
      %p250 = scmp.ne.s32.totalorder %s242, %s244
      %p251 = scmp.eq.s32.totalorder %s42, 3
      %p252 = por %p250, %p251
      %p253 = scmp.ne.s32.totalorder %s244, %s245
      %p254 = scmp.eq.s32.totalorder %s42, 0
      %p255 = por %p253, %p254
      %p256 = scmp.ne.s32.totalorder %s244, %s245
      %p257 = scmp.eq.s32.totalorder %s43, 3
      %p258 = por %p256, %p257
      %p260 = scmp.ne.s32.totalorder %s245, %s259
      %p261 = scmp.eq.s32.totalorder %s43, 0
      %p262 = por %p260, %p261
      %s264 = sadd.s32 %s263, 1
      %p267 = scmp.eq.s32.totalorder %s37, 3
      %p268 = scmp.ne.s32.totalorder %s263, %s265
      %p269 = scmp.eq.s32.totalorder %s37, 0
      %p270 = por %p268, %p269
      %p271 = scmp.ne.s32.totalorder %s263, %s265
      %p272 = scmp.eq.s32.totalorder %s42, 3
      %p273 = por %p271, %p272
      %p274 = scmp.ne.s32.totalorder %s265, %s266
      %p275 = scmp.eq.s32.totalorder %s42, 0
      %p276 = por %p274, %p275
      %p277 = scmp.ne.s32.totalorder %s265, %s266
      %p278 = scmp.eq.s32.totalorder %s43, 3
      %p279 = por %p277, %p278
      %p281 = scmp.ne.s32.totalorder %s266, %s280
      %p282 = scmp.eq.s32.totalorder %s43, 0
      %p283 = por %p281, %p282
      %s284 = ssub.s32 %s44, %s56
      %s285 = ssub.s32 %s45, %s52
      %s286 = sor.u32 %s284, %s285
      %p287 = scmp.eq.s32.totalorder %s286, 0
      %s289 = sadd.s32 %s288, 1
      %s290 = scalar_select %p287, %s288, %s289
      %p293 = pneg %p287
      %p294 = scmp.eq.s32.totalorder %s37, 3
      %p295 = por %p293, %p294
      %p296 = scmp.ne.s32.totalorder %s288, %s291
      %p297 = scmp.eq.s32.totalorder %s37, 0
      %p298 = por %p296, %p297
      %p299 = scmp.ne.s32.totalorder %s288, %s291
      %p300 = scmp.eq.s32.totalorder %s42, 3
      %p301 = por %p299, %p300
      %p302 = scmp.ne.s32.totalorder %s291, %s292
      %p303 = scmp.eq.s32.totalorder %s42, 0
      %p304 = por %p302, %p303
      %p305 = scmp.ne.s32.totalorder %s291, %s292
      %p306 = scmp.eq.s32.totalorder %s43, 3
      %p307 = por %p305, %p306
      %p309 = scmp.ne.s32.totalorder %s292, %s308
      %p310 = scmp.eq.s32.totalorder %s43, 0
      %p311 = por %p309, %p310
      %s312 = ssub.s32 %s44, %s56
      %s313 = ssub.s32 %s45, %s52
      %s314 = sor.u32 %s312, %s313
      %p315 = scmp.eq.s32.totalorder %s314, 0
      %s317 = sadd.s32 %s316, 1
      %s318 = scalar_select %p315, %s316, %s317
      %p321 = pneg %p315
      %p322 = scmp.eq.s32.totalorder %s37, 3
      %p323 = por %p321, %p322
      %p324 = scmp.ne.s32.totalorder %s316, %s319
      %p325 = scmp.eq.s32.totalorder %s37, 0
      %p326 = por %p324, %p325
      %p327 = scmp.ne.s32.totalorder %s316, %s319
      %p328 = scmp.eq.s32.totalorder %s42, 3
      %p329 = por %p327, %p328
      %p330 = scmp.ne.s32.totalorder %s319, %s320
      %p331 = scmp.eq.s32.totalorder %s42, 0
      %p332 = por %p330, %p331
      %p333 = scmp.ne.s32.totalorder %s319, %s320
      %p334 = scmp.eq.s32.totalorder %s43, 3
      %p335 = por %p333, %p334
      %p337 = scmp.ne.s32.totalorder %s320, %s336
      %p338 = scmp.eq.s32.totalorder %s43, 0
      %p339 = por %p337, %p338
      %s340 = ssub.s32 %s44, %s56
      %s341 = ssub.s32 %s45, %s52
      %s342 = sor.u32 %s340, %s341
      %p343 = scmp.eq.s32.totalorder %s342, 0
      %s345 = sadd.s32 %s344, 1
      %s346 = scalar_select %p343, %s344, %s345
      %p349 = pneg %p343
      %p350 = scmp.eq.s32.totalorder %s37, 3
      %p351 = por %p349, %p350
      %p352 = scmp.ne.s32.totalorder %s344, %s347
      %p353 = scmp.eq.s32.totalorder %s37, 0
      %p354 = por %p352, %p353
      %p355 = scmp.ne.s32.totalorder %s344, %s347
      %p356 = scmp.eq.s32.totalorder %s42, 3
      %p357 = por %p355, %p356
      %p358 = scmp.ne.s32.totalorder %s347, %s348
      %p359 = scmp.eq.s32.totalorder %s42, 0
      %p360 = por %p358, %p359
      %p361 = scmp.ne.s32.totalorder %s347, %s348
      %p362 = scmp.eq.s32.totalorder %s43, 3
      %p363 = por %p361, %p362
      %p365 = scmp.ne.s32.totalorder %s348, %s364
      %p366 = scmp.eq.s32.totalorder %s43, 0
      %p367 = por %p365, %p366
      %s368 = ssub.s32 %s44, %s56
      %s369 = ssub.s32 %s45, %s52
      %s370 = sor.u32 %s368, %s369
      %p371 = scmp.eq.s32.totalorder %s370, 0
      %s373 = sadd.s32 %s372, 1
      %s374 = scalar_select %p371, %s372, %s373
      %p377 = pneg %p371
      %p378 = scmp.eq.s32.totalorder %s37, 3
      %p379 = por %p377, %p378
      %p380 = scmp.ne.s32.totalorder %s372, %s375
      %p381 = scmp.eq.s32.totalorder %s37, 0
      %p382 = por %p380, %p381
      %p383 = scmp.ne.s32.totalorder %s372, %s375
      %p384 = scmp.eq.s32.totalorder %s42, 3
      %p385 = por %p383, %p384
      %p386 = scmp.ne.s32.totalorder %s375, %s376
      %p387 = scmp.eq.s32.totalorder %s42, 0
      %p388 = por %p386, %p387
      %p389 = scmp.ne.s32.totalorder %s375, %s376
      %p390 = scmp.eq.s32.totalorder %s43, 3
      %p391 = por %p389, %p390
      %p393 = scmp.ne.s32.totalorder %s376, %s392
      %p394 = scmp.eq.s32.totalorder %s43, 0
      %p395 = por %p393, %p394
      %p396 = scmp.le.s32.totalorder 1, %s37
      %p397 = scmp.lt.s32.totalorder %s37, 5
      %p398 = pnand %p396, %p397
      %p399 = pneg %p398
      // Predicated region
      $region9: #{tpu_custom_call.1} parent=5 // pred_check
        _
      $region10: #{tpu_custom_call.1} parent=5 // pred_check_branch
        %401 = sbr.rel (%p398) target = $region12
      $region11: #{tpu_custom_call.1} parent=5 // pred_region
        %s402 = ssub.s32 %s37, 1
        // Predicated region
        $region13: #{tpu_custom_call.1} parent=11 // pred_check
          %p403 = pneg %p150
        $region14: #{tpu_custom_call.1} parent=11 // pred_check_branch
          %405 = sbr.rel (%p403) target = $region16
        $region15: #{tpu_custom_call.1} parent=11 // pred_region
          %s407 = ssub.s32 1024, 1024
          %408 = vsyncadd [#allocation6], %s407
          %s409 = sshll.u32 [#allocation7], 4
          %s410 = int_to_ptr.vmem [resolvable:$true] %s409
          %415 = dma.hbm_to_vmem [thread:$0]  %s3, 1024, %s410, [#allocation6], 64, 64, 4
        $region16: #{tpu_custom_call.1} parent=11 // pred_fallthru
          _
        // Predicated region
        $region17: #{tpu_custom_call.1} parent=11 // pred_check
          %p416 = pneg %p171
        $region18: #{tpu_custom_call.1} parent=11 // pred_check_branch
          %418 = sbr.rel (%p416) target = $region20
        $region19: #{tpu_custom_call.1} parent=11 // pred_region
          _
        $region20: #{tpu_custom_call.1} parent=11 // pred_fallthru
          _
        // Predicated region
        $region21: #{tpu_custom_call.1} parent=11 // pred_check
          %p419 = pneg %p192
        $region22: #{tpu_custom_call.1} parent=11 // pred_check_branch
          %421 = sbr.rel (%p419) target = $region24
        $region23: #{tpu_custom_call.1} parent=11 // pred_region
          _
        $region24: #{tpu_custom_call.1} parent=11 // pred_fallthru
          _
        // Predicated region
        $region25: #{tpu_custom_call.1} parent=11 // pred_check
          %p422 = pneg %p213
        $region26: #{tpu_custom_call.1} parent=11 // pred_check_branch
          %424 = sbr.rel (%p422) target = $region28
        $region27: #{tpu_custom_call.1} parent=11 // pred_region
          _
        $region28: #{tpu_custom_call.1} parent=11 // pred_fallthru
          _
        // Predicated region
        $region29: #{tpu_custom_call.1} parent=11 // pred_check
          %p425 = pneg %p234
        $region30: #{tpu_custom_call.1} parent=11 // pred_check_branch
          %427 = sbr.rel (%p425) target = $region32
        $region31: #{tpu_custom_call.1} parent=11 // pred_region
          %s429 = ssub.s32 1024, 1024
          %430 = vsyncadd [#allocation9], %s429
          %s431 = sshll.u32 [#allocation8], 4
          %s432 = int_to_ptr.vmem [resolvable:$true] %s431
          %437 = dma.hbm_to_vmem [thread:$0]  %s7, 1024, %s432, [#allocation9], 64, 64, 4
        $region32: #{tpu_custom_call.1} parent=11 // pred_fallthru
          _
        // Predicated region
        $region33: #{tpu_custom_call.1} parent=11 // pred_check
          %p438 = pneg %p255
        $region34: #{tpu_custom_call.1} parent=11 // pred_check_branch
          %440 = sbr.rel (%p438) target = $region36
        $region35: #{tpu_custom_call.1} parent=11 // pred_region
          %s442 = ssub.s32 1024, 1024
          %443 = vsyncadd [#allocation9], %s442
          %s444 = sshll.u32 [#allocation10], 4
          %s445 = int_to_ptr.vmem [resolvable:$true] %s444
          %450 = dma.hbm_to_vmem [thread:$0]  %s8, 1024, %s445, [#allocation9], 64, 64, 4
        $region36: #{tpu_custom_call.1} parent=11 // pred_fallthru
          _
        // Predicated region
        $region37: #{tpu_custom_call.1} parent=11 // pred_check
          %p451 = pneg %p276
        $region38: #{tpu_custom_call.1} parent=11 // pred_check_branch
          %453 = sbr.rel (%p451) target = $region40
        $region39: #{tpu_custom_call.1} parent=11 // pred_region
          %s455 = ssub.s32 1024, 1024
          %456 = vsyncadd [#allocation12], %s455
          %s457 = sshll.u32 [#allocation11], 4
          %s458 = int_to_ptr.vmem [resolvable:$true] %s457
          %463 = dma.hbm_to_vmem [thread:$0]  %s9, 1024, %s458, [#allocation12], 64, 64, 4
        $region40: #{tpu_custom_call.1} parent=11 // pred_fallthru
          _
      $region12: #{tpu_custom_call.1} parent=5 // pred_fallthru
        _
      %p464 = scmp.lt.s32.totalorder %s37, 4
      // Predicated region
      $region41: #{tpu_custom_call.1} parent=5 // pred_check
        %p465 = pneg %p464
      $region42: #{tpu_custom_call.1} parent=5 // pred_check_branch
        %467 = sbr.rel (%p465) target = $region44
      $region43: #{tpu_custom_call.1} parent=5 // pred_region
        // Predicated region
        $region45: #{tpu_custom_call.1} parent=43 // pred_check
          %p468 = pneg %p71
        $region46: #{tpu_custom_call.1} parent=43 // pred_check_branch
          %470 = sbr.rel (%p468) target = $region48
        $region47: #{tpu_custom_call.1} parent=43 // pred_region
          %s471 = sand.u32 %s61, 1
          %s472 = scalar_lea.sflag [#allocation3], %s471
          %s473 = sand.u32 %s61, 1
          %s474 = smul.addr %s473, 128
          %s475 = scalar_lea.vmem [#allocation2], %s474
          %s477 = ssub.s32 2048, 2048
          %478 = vsyncadd %s472, %s477
          %s479 = smul.addr %s44, 32
          %s480 = sadd.s32 %s45, %s479
          %s481 = smul.addr %s480, 128
          %s482 = scalar_lea.hbm %s0, %s481
          %s483 = sshll.u32 %s475, 4
          %s484 = int_to_ptr.vmem [resolvable:$true] %s483
          %489 = dma.hbm_to_vmem [thread:$0]  %s482, 2048, %s484, %s472, 256, 128, 8
        $region48: #{tpu_custom_call.1} parent=43 // pred_fallthru
          _
        // Predicated region
        $region49: #{tpu_custom_call.1} parent=43 // pred_check
          %p490 = pneg %p97
        $region50: #{tpu_custom_call.1} parent=43 // pred_check_branch
          %492 = sbr.rel (%p490) target = $region52
        $region51: #{tpu_custom_call.1} parent=43 // pred_region
          %s493 = sand.u32 %s37, 1
          %s494 = scalar_lea.sflag [#allocation6], %s493
          %s495 = sand.u32 %s87, 1
          %s496 = scalar_lea.vmem [#allocation5], %s495
          %s498 = ssub.s32 16, 16
          %499 = vsyncadd %s494, %s498
          %s500 = smul.addr %s44, 16
          %s501 = scalar_lea.hbm %s1, %s500
          %s503 = sshll.u32 %s496, 4
          %s504 = int_to_ptr.vmem [resolvable:$true] %s503
          %506 = dma.hbm_to_vmem [thread:$0]  %s501, 16, %s504, %s494
        $region52: #{tpu_custom_call.1} parent=43 // pred_fallthru
          _
        // Predicated region
        $region53: #{tpu_custom_call.1} parent=43 // pred_check
          %p507 = pneg %p123
        $region54: #{tpu_custom_call.1} parent=43 // pred_check_branch
          %509 = sbr.rel (%p507) target = $region56
        $region55: #{tpu_custom_call.1} parent=43 // pred_region
          %p510 = scmp.lt.s32.totalorder %s44, 1
          %s511 = scalar_select %p510, %s44, 1
          %s512 = scalar_lea.vmem %s2, %s511
        $region56: #{tpu_custom_call.1} parent=43 // pred_fallthru
          _
      $region44: #{tpu_custom_call.1} parent=5 // pred_fallthru
        _
      %p513 = scmp.le.s32.totalorder 1, %s37
      %p514 = scmp.lt.s32.totalorder %s37, 5
      %p515 = pnand %p513, %p514
      %p516 = pneg %p515
      // Predicated region
      $region57: #{tpu_custom_call.1} parent=5 // pred_check
        _
      $region58: #{tpu_custom_call.1} parent=5 // pred_check_branch
        %518 = sbr.rel (%p515) target = $region60
      $region59: #{tpu_custom_call.1} parent=5 // pred_region
        %s519 = ssub.s32 %s37, 1
        %s520 = sand.u32 %s64, 1
        %s521 = scalar_lea.sflag [#allocation3], %s520
        %s522 = sand.u32 %s64, 1
        %s523 = smul.addr %s522, 128
        %s524 = scalar_lea.vmem [#allocation2], %s523
        // Predicated region
        $region61: #{tpu_custom_call.1} parent=59 // pred_check
          %p525 = pneg %p77
        $region62: #{tpu_custom_call.1} parent=59 // pred_check_branch
          %527 = sbr.rel (%p525) target = $region64
        $region63: #{tpu_custom_call.1} parent=59 // pred_region
          %528 = dma.done %s521, 2048
        $region64: #{tpu_custom_call.1} parent=59 // pred_fallthru
          _
        %s529 = sand.u32 %s42, 1
        %s530 = scalar_lea.sflag [#allocation6], %s529
        %s531 = sand.u32 %s90, 1
        %s532 = scalar_lea.vmem [#allocation5], %s531
        // Predicated region
        $region65: #{tpu_custom_call.1} parent=59 // pred_check
          %p533 = pneg %p103
        $region66: #{tpu_custom_call.1} parent=59 // pred_check_branch
          %535 = sbr.rel (%p533) target = $region68
        $region67: #{tpu_custom_call.1} parent=59 // pred_region
          %536 = dma.done %s530, 16
        $region68: #{tpu_custom_call.1} parent=59 // pred_fallthru
          _
        // Predicated region
        $region69: #{tpu_custom_call.1} parent=59 // pred_check
          %p537 = pneg %p150
        $region70: #{tpu_custom_call.1} parent=59 // pred_check_branch
          %539 = sbr.rel (%p537) target = $region72
        $region71: #{tpu_custom_call.1} parent=59 // pred_region
          %540 = dma.done [#allocation6], 1024
        $region72: #{tpu_custom_call.1} parent=59 // pred_fallthru
          _
        // Predicated region
        $region73: #{tpu_custom_call.1} parent=59 // pred_check
          %p541 = pneg %p234
        $region74: #{tpu_custom_call.1} parent=59 // pred_check_branch
          %543 = sbr.rel (%p541) target = $region76
        $region75: #{tpu_custom_call.1} parent=59 // pred_region
          %544 = dma.done [#allocation9], 1024
        $region76: #{tpu_custom_call.1} parent=59 // pred_fallthru
          _
        // Predicated region
        $region77: #{tpu_custom_call.1} parent=59 // pred_check
          %p545 = pneg %p255
        $region78: #{tpu_custom_call.1} parent=59 // pred_check_branch
          %547 = sbr.rel (%p545) target = $region80
        $region79: #{tpu_custom_call.1} parent=59 // pred_region
          %548 = dma.done [#allocation9], 1024
        $region80: #{tpu_custom_call.1} parent=59 // pred_fallthru
          _
        // Predicated region
        $region81: #{tpu_custom_call.1} parent=59 // pred_check
          %p549 = pneg %p276
        $region82: #{tpu_custom_call.1} parent=59 // pred_check_branch
          %551 = sbr.rel (%p549) target = $region84
        $region83: #{tpu_custom_call.1} parent=59 // pred_region
          %552 = dma.done [#allocation12], 1024
        $region84: #{tpu_custom_call.1} parent=59 // pred_fallthru
          _
        %s553 = sand.u32 %s64, 1
        %s554 = scalar_lea.sflag [#allocation3], %s553
        %s555 = sand.u32 %s64, 1
        %s556 = smul.addr %s555, 128
        %s557 = scalar_lea.vmem [#allocation2], %s556
        %p558 = pneg %p77
        %p559 = pneg %p74
        %s560 = sand.u32 %s42, 1
        %s561 = scalar_lea.sflag [#allocation6], %s560
        %s562 = sand.u32 %s90, 1
        %s563 = scalar_lea.vmem [#allocation5], %s562
        %p564 = pneg %p103
        %p565 = pneg %p100
        %p566 = scmp.lt.s32.totalorder %s46, 1
        %s567 = scalar_select %p566, %s46, 1
        %s568 = scalar_lea.vmem %s2, %s567
        %p569 = pneg %p129
        %p570 = pneg %p126
        %p571 = pneg %p150
        %p572 = pneg %p147
        %p573 = pneg %p171
        %p574 = pneg %p168
        %p575 = pneg %p192
        %p576 = pneg %p189
        %p577 = pneg %p213
        %p578 = pneg %p210
        %p579 = pneg %p234
        %p580 = pneg %p231
        %p581 = pneg %p255
        %p582 = pneg %p252
        %p583 = pneg %p276
        %p584 = pneg %p273
        %p585 = pneg %p304
        %p586 = pneg %p301
        %s587 = sand.u32 %s291, 1
        %s588 = scalar_lea.sflag [#allocation4], %s587
        %s589 = sand.u32 %s291, 1
        %s590 = smul.addr %s589, 64
        %s591 = scalar_lea.vmem [#allocation13], %s590
        %p592 = pneg %p332
        %p593 = pneg %p329
        %s594 = sand.u32 %s42, 1
        %s595 = scalar_lea.sflag [#allocation15], %s594
        %s596 = sand.u32 %s319, 1
        %s597 = smul.addr %s596, 64
        %s598 = scalar_lea.vmem [#allocation14], %s597
        %p599 = pneg %p360
        %p600 = pneg %p357
        %s601 = sand.u32 %s42, 1
        %s602 = scalar_lea.sflag [#allocation15], %s601
        %s603 = sand.u32 %s347, 1
        %s604 = smul.addr %s603, 64
        %s605 = scalar_lea.vmem [#allocation16], %s604
        %p606 = pneg %p388
        %p607 = pneg %p385
        %s608 = sand.u32 %s375, 1
        %s609 = scalar_lea.sflag [#allocation18], %s608
        %s610 = sand.u32 %s375, 1
        %s611 = smul.addr %s610, 64
        %s612 = scalar_lea.vmem [#allocation17], %s611
        %p613 = scmp.lt.s32.totalorder %s46, 1
        %s614 = scalar_select %p613, %s46, 1
        %s615 = scalar_lea.vmem %s2, %s614
        %s616 = smul.u32 16, %s47
        %s617 = smul.u32 16, %s47
        %s618 = smul.u32 16, %s47
        %s619 = smul.u32 16, %s47
        %v621 = vld [vmem:[%s524] sm:$0xff]
        %v622 = vld [vmem:[%s524 + $0x8] sm:$0xff]
        %v623 = vld [vmem:[%s524 + $0x10] sm:$0xff]
        %v624 = vld [vmem:[%s524 + $0x18] sm:$0xff]
        %v625 = vld [vmem:[%s524 + $0x20] sm:$0xff]
        %v626 = vld [vmem:[%s524 + $0x28] sm:$0xff]
        %v627 = vld [vmem:[%s524 + $0x30] sm:$0xff]
        %v628 = vld [vmem:[%s524 + $0x38] sm:$0xff]
        %v629 = vld [vmem:[%s524 + $0x40] sm:$0xff]
        %v630 = vld [vmem:[%s524 + $0x48] sm:$0xff]
        %v631 = vld [vmem:[%s524 + $0x50] sm:$0xff]
        %v632 = vld [vmem:[%s524 + $0x58] sm:$0xff]
        %v633 = vld [vmem:[%s524 + $0x60] sm:$0xff]
        %v634 = vld [vmem:[%s524 + $0x68] sm:$0xff]
        %v635 = vld [vmem:[%s524 + $0x70] sm:$0xff]
        %v636 = vld [vmem:[%s524 + $0x78] sm:$0xff]
        %637 = vxpose.xlu0.b32.start [1/16] %v621, 128
        %638 = vxpose.xlu0.b32.cont [2/16] %v622, 128
        %639 = vxpose.xlu0.b32.cont [3/16] %v623, 128
        %640 = vxpose.xlu0.b32.cont [4/16] %v624, 128
        %641 = vxpose.xlu0.b32.cont [5/16] %v625, 128
        %642 = vxpose.xlu0.b32.cont [6/16] %v626, 128
        %643 = vxpose.xlu0.b32.cont [7/16] %v627, 128
        %644 = vxpose.xlu0.b32.cont [8/16] %v628, 128
        %645 = vxpose.xlu0.b32.cont [9/16] %v629, 128
        %646 = vxpose.xlu0.b32.cont [10/16] %v630, 128
        %647 = vxpose.xlu0.b32.cont [11/16] %v631, 128
        %648 = vxpose.xlu0.b32.cont [12/16] %v632, 128
        %649 = vxpose.xlu0.b32.cont [13/16] %v633, 128
        %650 = vxpose.xlu0.b32.cont [14/16] %v634, 128
        %651 = vxpose.xlu0.b32.cont [15/16] %v635, 128
        %652 = vxpose.xlu0.b32.end [16/16] %v636, 128
        %v653 = vpop.trf.xlu0
        %v654 = vpop.trf.xlu0
        %v655 = vpop.trf.xlu0
        %v656 = vpop.trf.xlu0
        %v657 = vpop.trf.xlu0
        %v658 = vpop.trf.xlu0
        %v659 = vpop.trf.xlu0
        %v660 = vpop.trf.xlu0
        %v661 = vpop.trf.xlu0
        %v662 = vpop.trf.xlu0
        %v663 = vpop.trf.xlu0
        %v664 = vpop.trf.xlu0
        %v665 = vpop.trf.xlu0
        %v666 = vpop.trf.xlu0
        %v667 = vpop.trf.xlu0
        %v668 = vpop.trf.xlu0
        %v669 = vld [vmem:[%s532] sm:$0x1]
        %v671 = vlaneseq
        %v672 = vshrl.u32 %v671, 7
        %v673 = vsub.s32 0, %v672
        %v674 = vrot.slane %v669, %v673
        %v676 = vmul.f32 %v653, %v674
        %v677 = vmul.f32 %v654, %v674
        %v678 = vmul.f32 %v655, %v674
        %v679 = vmul.f32 %v656, %v674
        %v680 = vmul.f32 %v657, %v674
        %v681 = vmul.f32 %v658, %v674
        %v682 = vmul.f32 %v659, %v674
        %v683 = vmul.f32 %v660, %v674
        %v684 = vmul.f32 %v661, %v674
        %v685 = vmul.f32 %v662, %v674
        %v686 = vmul.f32 %v663, %v674
        %v687 = vmul.f32 %v664, %v674
        %v688 = vmul.f32 %v665, %v674
        %v689 = vmul.f32 %v666, %v674
        %v690 = vmul.f32 %v667, %v674
        %v691 = vmul.f32 %v668, %v674
        %v692 = vld [vmem:[%s615] sm:$0x1]
        %v694 = vlaneseq
        %v695 = vshrl.u32 %v694, 7
        %v696 = vsub.s32 0, %v695
        %v697 = vrot.slane %v692, %v696
        %v699 = vadd.f32 %v676, %v697
        %v700 = vadd.f32 %v677, %v697
        %v701 = vadd.f32 %v678, %v697
        %v702 = vadd.f32 %v679, %v697
        %v703 = vadd.f32 %v680, %v697
        %v704 = vadd.f32 %v681, %v697
        %v705 = vadd.f32 %v682, %v697
        %v706 = vadd.f32 %v683, %v697
        %v707 = vadd.f32 %v684, %v697
        %v708 = vadd.f32 %v685, %v697
        %v709 = vadd.f32 %v686, %v697
        %v710 = vadd.f32 %v687, %v697
        %v711 = vadd.f32 %v688, %v697
        %v712 = vadd.f32 %v689, %v697
        %v713 = vadd.f32 %v690, %v697
        %v714 = vadd.f32 %v691, %v697
        %v715 = vpack.c.bf16 %v700, %v699
        %v716 = vpack.c.bf16 %v702, %v701
        %v717 = vpack.c.bf16 %v704, %v703
        %v718 = vpack.c.bf16 %v706, %v705
        %v719 = vpack.c.bf16 %v708, %v707
        %v720 = vpack.c.bf16 %v710, %v709
        %v721 = vpack.c.bf16 %v712, %v711
        %v722 = vpack.c.bf16 %v714, %v713
        %v723 = vld [vmem:[#allocation7] sm:$0xf]
        %v724 = vld [vmem:[#allocation7 + $0x4] sm:$0xf]
        %v725 = vld [vmem:[#allocation7 + $0x8] sm:$0xf]
        %v726 = vld [vmem:[#allocation7 + $0xc] sm:$0xf]
        %v727 = vld [vmem:[#allocation7 + $0x10] sm:$0xf]
        %v728 = vld [vmem:[#allocation7 + $0x14] sm:$0xf]
        %v729 = vld [vmem:[#allocation7 + $0x18] sm:$0xf]
        %v730 = vld [vmem:[#allocation7 + $0x1c] sm:$0xf]
        %v731 = vld [vmem:[#allocation7 + $0x20] sm:$0xf]
        %v732 = vld [vmem:[#allocation7 + $0x24] sm:$0xf]
        %v733 = vld [vmem:[#allocation7 + $0x28] sm:$0xf]
        %v734 = vld [vmem:[#allocation7 + $0x2c] sm:$0xf]
        %v735 = vld [vmem:[#allocation7 + $0x30] sm:$0xf]
        %v736 = vld [vmem:[#allocation7 + $0x34] sm:$0xf]
        %v737 = vld [vmem:[#allocation7 + $0x38] sm:$0xf]
        %v738 = vld [vmem:[#allocation7 + $0x3c] sm:$0xf]
        %v739 = vld [vmem:[%s4] sm:$0x1]
        %v741 = vlaneseq
        %v742 = vshrl.u32 %v741, 7
        %v743 = vsub.s32 0, %v742
        %v744 = vrot.slane %v739, %v743
        %v762 = vunpack.c.l.b16 %v723
        %v763 = vunpack.c.l.b16 %v724
        %v764 = vunpack.c.l.b16 %v725
        %v765 = vunpack.c.l.b16 %v726
        %v766 = vunpack.c.l.b16 %v727
        %v767 = vunpack.c.l.b16 %v728
        %v768 = vunpack.c.l.b16 %v729
        %v769 = vunpack.c.l.b16 %v730
        %v770 = vunpack.c.l.b16 %v731
        %v771 = vunpack.c.l.b16 %v732
        %v772 = vunpack.c.l.b16 %v733
        %v773 = vunpack.c.l.b16 %v734
        %v774 = vunpack.c.l.b16 %v735
        %v775 = vunpack.c.l.b16 %v736
        %v776 = vunpack.c.l.b16 %v737
        %v777 = vunpack.c.l.b16 %v738
        %v778 = vpack.c.b16 %v763, %v762
        %v779 = vpack.c.b16 %v765, %v764
        %v780 = vpack.c.b16 %v767, %v766
        %v781 = vpack.c.b16 %v769, %v768
        %v782 = vpack.c.b16 %v771, %v770
        %v783 = vpack.c.b16 %v773, %v772
        %v784 = vpack.c.b16 %v775, %v774
        %v785 = vpack.c.b16 %v777, %v776
        %794 = vmatprep.subr.bf16.mxu0 0
        %795 = vmatpush1.bf16.msra.mxu0 %v785
        %796 = vmatprep.subr.bf16.mxu0 0
        %797 = vmatpush1.bf16.msra.mxu0 %v784
        %798 = vmatprep.subr.bf16.mxu0 0
        %799 = vmatpush1.bf16.msra.mxu0 %v783
        %800 = vmatprep.subr.bf16.mxu0 0
        %801 = vmatpush1.bf16.msra.mxu0 %v782
        %802 = vmatprep.subr.bf16.mxu0 0
        %803 = vmatpush1.bf16.msra.mxu0 %v781
        %804 = vmatprep.subr.bf16.mxu0 0
        %805 = vmatpush1.bf16.msra.mxu0 %v780
        %806 = vmatprep.subr.bf16.mxu0 0
        %807 = vmatpush1.bf16.msra.mxu0 %v779
        %808 = vmatprep.subr.bf16.mxu0 0
        %809 = vmatpush1.bf16.msra.mxu0 %v778
        %810 = vmatprep.subr.bf16.mxu0 0
        %811 = vmatpush2.bf16.msra.mxu0 0
        %812 = vmatprep.subr.bf16.mxu0 0
        %813 = vmatpush2.bf16.msra.mxu0 0
        %814 = vmatprep.subr.bf16.mxu0 0
        %815 = vmatpush2.bf16.msra.mxu0 0
        %816 = vmatprep.subr.bf16.mxu0 0
        %817 = vmatpush2.bf16.msra.mxu0 0
        %818 = vmatprep.subr.bf16.mxu0 0
        %819 = vmatpush2.bf16.msra.mxu0 0
        %820 = vmatprep.subr.bf16.mxu0 0
        %821 = vmatpush2.bf16.msra.mxu0 0
        %822 = vmatprep.subr.bf16.mxu0 0
        %823 = vmatpush2.bf16.msra.mxu0 0
        %824 = vmatprep.subr.bf16.mxu0 0
        %825 = vmatpush2.bf16.msra.mxu0 0
        %826 = vmatprep.mubr.bf16.mxu0 0
        %827 = vmatmul.mubr.bf16.gmra.mxu0 %v715
        %v828 = vpop.f32.mrf.mxu0
        %v829 = vadd.f32 %v744, %v828
        %v830 = vpop.f32.mrf.mxu0
        %v831 = vpop.f32.mrf.mxu0
        %v832 = vadd.f32 %v744, %v831
        %v833 = vpop.f32.mrf.mxu0
        %834 = vmatprep.mubr.bf16.mxu0 0
        %835 = vmatmul.mubr.bf16.gmra.mxu0 %v716
        %v836 = vpop.f32.mrf.mxu0
        %v837 = vadd.f32 %v744, %v836
        %v838 = vpop.f32.mrf.mxu0
        %v839 = vpop.f32.mrf.mxu0
        %v840 = vadd.f32 %v744, %v839
        %v841 = vpop.f32.mrf.mxu0
        %842 = vmatprep.mubr.bf16.mxu0 0
        %843 = vmatmul.mubr.bf16.gmra.mxu0 %v717
        %v844 = vpop.f32.mrf.mxu0
        %v845 = vadd.f32 %v744, %v844
        %v846 = vpop.f32.mrf.mxu0
        %v847 = vpop.f32.mrf.mxu0
        %v848 = vadd.f32 %v744, %v847
        %v849 = vpop.f32.mrf.mxu0
        %850 = vmatprep.mubr.bf16.mxu0 0
        %851 = vmatmul.mubr.bf16.gmra.mxu0 %v718
        %v852 = vpop.f32.mrf.mxu0
        %v853 = vadd.f32 %v744, %v852
        %v854 = vpop.f32.mrf.mxu0
        %v855 = vpop.f32.mrf.mxu0
        %v856 = vadd.f32 %v744, %v855
        %v857 = vpop.f32.mrf.mxu0
        %858 = vmatprep.mubr.bf16.mxu0 0
        %859 = vmatmul.mubr.bf16.gmra.mxu0 %v719
        %v860 = vpop.f32.mrf.mxu0
        %v861 = vadd.f32 %v744, %v860
        %v862 = vpop.f32.mrf.mxu0
        %v863 = vpop.f32.mrf.mxu0
        %v864 = vadd.f32 %v744, %v863
        %v865 = vpop.f32.mrf.mxu0
        %866 = vmatprep.mubr.bf16.mxu0 0
        %867 = vmatmul.mubr.bf16.gmra.mxu0 %v720
        %v868 = vpop.f32.mrf.mxu0
        %v869 = vadd.f32 %v744, %v868
        %v870 = vpop.f32.mrf.mxu0
        %v871 = vpop.f32.mrf.mxu0
        %v872 = vadd.f32 %v744, %v871
        %v873 = vpop.f32.mrf.mxu0
        %874 = vmatprep.mubr.bf16.mxu0 0
        %875 = vmatmul.mubr.bf16.gmra.mxu0 %v721
        %v876 = vpop.f32.mrf.mxu0
        %v877 = vadd.f32 %v744, %v876
        %v878 = vpop.f32.mrf.mxu0
        %v879 = vpop.f32.mrf.mxu0
        %v880 = vadd.f32 %v744, %v879
        %v881 = vpop.f32.mrf.mxu0
        %882 = vmatprep.mubr.bf16.mxu0 0
        %883 = vmatmul.mubr.bf16.gmra.mxu0 %v722
        %v884 = vpop.f32.mrf.mxu0
        %v885 = vadd.f32 %v744, %v884
        %v886 = vpop.f32.mrf.mxu0
        %v887 = vpop.f32.mrf.mxu0
        %v888 = vadd.f32 %v744, %v887
        %v889 = vpop.f32.mrf.mxu0
        %890 = vdwg.mxu0
        %v891 = vpack.c.bf16 %v832, %v829
        %v892 = vpack.c.bf16 %v840, %v837
        %v893 = vpack.c.bf16 %v848, %v845
        %v894 = vpack.c.bf16 %v856, %v853
        %v895 = vpack.c.bf16 %v864, %v861
        %v896 = vpack.c.bf16 %v872, %v869
        %v897 = vpack.c.bf16 %v880, %v877
        %v898 = vpack.c.bf16 %v888, %v885
        %v907 = vunpack.c.l.b16 %v891
        %v908 = vunpack.c.h.b16 %v891
        %v909 = vunpack.c.l.b16 %v892
        %v910 = vunpack.c.h.b16 %v892
        %v911 = vunpack.c.l.b16 %v893
        %v912 = vunpack.c.h.b16 %v893
        %v913 = vunpack.c.l.b16 %v894
        %v914 = vunpack.c.h.b16 %v894
        %v915 = vunpack.c.l.b16 %v895
        %v916 = vunpack.c.h.b16 %v895
        %v917 = vunpack.c.l.b16 %v896
        %v918 = vunpack.c.h.b16 %v896
        %v919 = vunpack.c.l.b16 %v897
        %v920 = vunpack.c.h.b16 %v897
        %v921 = vunpack.c.l.b16 %v898
        %v922 = vunpack.c.h.b16 %v898
        %v923 = vpack.c.b16 %v907, %v907
        %v924 = vpack.c.b16 %v908, %v908
        %v925 = vpack.c.b16 %v909, %v909
        %v926 = vpack.c.b16 %v910, %v910
        %v927 = vpack.c.b16 %v911, %v911
        %v928 = vpack.c.b16 %v912, %v912
        %v929 = vpack.c.b16 %v913, %v913
        %v930 = vpack.c.b16 %v914, %v914
        %v931 = vpack.c.b16 %v915, %v915
        %v932 = vpack.c.b16 %v916, %v916
        %v933 = vpack.c.b16 %v917, %v917
        %v934 = vpack.c.b16 %v918, %v918
        %v935 = vpack.c.b16 %v919, %v919
        %v936 = vpack.c.b16 %v920, %v920
        %v937 = vpack.c.b16 %v921, %v921
        %v938 = vpack.c.b16 %v922, %v922
        %955 = vst [vmem:[%s591] sm:$0xf] %v923
        %956 = vst [vmem:[%s591 + $0x4] sm:$0xf] %v924
        %957 = vst [vmem:[%s591 + $0x8] sm:$0xf] %v925
        %958 = vst [vmem:[%s591 + $0xc] sm:$0xf] %v926
        %959 = vst [vmem:[%s591 + $0x10] sm:$0xf] %v927
        %960 = vst [vmem:[%s591 + $0x14] sm:$0xf] %v928
        %961 = vst [vmem:[%s591 + $0x18] sm:$0xf] %v929
        %962 = vst [vmem:[%s591 + $0x1c] sm:$0xf] %v930
        %963 = vst [vmem:[%s591 + $0x20] sm:$0xf] %v931
        %964 = vst [vmem:[%s591 + $0x24] sm:$0xf] %v932
        %965 = vst [vmem:[%s591 + $0x28] sm:$0xf] %v933
        %966 = vst [vmem:[%s591 + $0x2c] sm:$0xf] %v934
        %967 = vst [vmem:[%s591 + $0x30] sm:$0xf] %v935
        %968 = vst [vmem:[%s591 + $0x34] sm:$0xf] %v936
        %969 = vst [vmem:[%s591 + $0x38] sm:$0xf] %v937
        %970 = vst [vmem:[%s591 + $0x3c] sm:$0xf] %v938
        %v971 = vld [vmem:[%s5] sm:$0x1]
        %v972 = vld [vmem:[%s6] sm:$0x1]
        %973 = vadd.xlane.f32.xlu0 %v829
        %v974 = vpop.xlane.xlu0 %973
        %975 = vadd.xlane.f32.xlu0 %v832
        %v976 = vpop.xlane.xlu0 %975
        %977 = vadd.xlane.f32.xlu0 %v837
        %v978 = vpop.xlane.xlu0 %977
        %979 = vadd.xlane.f32.xlu0 %v840
        %v980 = vpop.xlane.xlu0 %979
        %981 = vadd.xlane.f32.xlu0 %v845
        %v982 = vpop.xlane.xlu0 %981
        %983 = vadd.xlane.f32.xlu0 %v848
        %v984 = vpop.xlane.xlu0 %983
        %985 = vadd.xlane.f32.xlu0 %v853
        %v986 = vpop.xlane.xlu0 %985
        %987 = vadd.xlane.f32.xlu0 %v856
        %v988 = vpop.xlane.xlu0 %987
        %989 = vadd.xlane.f32.xlu0 %v861
        %v990 = vpop.xlane.xlu0 %989
        %991 = vadd.xlane.f32.xlu0 %v864
        %v992 = vpop.xlane.xlu0 %991
        %993 = vadd.xlane.f32.xlu0 %v869
        %v994 = vpop.xlane.xlu0 %993
        %995 = vadd.xlane.f32.xlu0 %v872
        %v996 = vpop.xlane.xlu0 %995
        %997 = vadd.xlane.f32.xlu0 %v877
        %v998 = vpop.xlane.xlu0 %997
        %999 = vadd.xlane.f32.xlu0 %v880
        %v1000 = vpop.xlane.xlu0 %999
        %1001 = vadd.xlane.f32.xlu0 %v885
        %v1002 = vpop.xlane.xlu0 %1001
        %1003 = vadd.xlane.f32.xlu0 %v888
        %v1004 = vpop.xlane.xlu0 %1003
        %v1005 = vrcp.pop 128.0
        %v1006 = vmul.f32 %v974, %v1005
        %v1007 = vmul.f32 %v976, %v1005
        %v1008 = vmul.f32 %v978, %v1005
        %v1009 = vmul.f32 %v980, %v1005
        %v1010 = vmul.f32 %v982, %v1005
        %v1011 = vmul.f32 %v984, %v1005
        %v1012 = vmul.f32 %v986, %v1005
        %v1013 = vmul.f32 %v988, %v1005
        %v1014 = vmul.f32 %v990, %v1005
        %v1015 = vmul.f32 %v992, %v1005
        %v1016 = vmul.f32 %v994, %v1005
        %v1017 = vmul.f32 %v996, %v1005
        %v1018 = vmul.f32 %v998, %v1005
        %v1019 = vmul.f32 %v1000, %v1005
        %v1020 = vmul.f32 %v1002, %v1005
        %v1021 = vmul.f32 %v1004, %v1005
        %v1022 = vsub.f32 %v829, %v1006
        %v1023 = vsub.f32 %v832, %v1007
        %v1024 = vsub.f32 %v837, %v1008
        %v1025 = vsub.f32 %v840, %v1009
        %v1026 = vsub.f32 %v845, %v1010
        %v1027 = vsub.f32 %v848, %v1011
        %v1028 = vsub.f32 %v853, %v1012
        %v1029 = vsub.f32 %v856, %v1013
        %v1030 = vsub.f32 %v861, %v1014
        %v1031 = vsub.f32 %v864, %v1015
        %v1032 = vsub.f32 %v869, %v1016
        %v1033 = vsub.f32 %v872, %v1017
        %v1034 = vsub.f32 %v877, %v1018
        %v1035 = vsub.f32 %v880, %v1019
        %v1036 = vsub.f32 %v885, %v1020
        %v1037 = vsub.f32 %v888, %v1021
        %v1038 = vmul.f32 %v1022, %v1022
        %v1039 = vmul.f32 %v1023, %v1023
        %v1040 = vmul.f32 %v1024, %v1024
        %v1041 = vmul.f32 %v1025, %v1025
        %v1042 = vmul.f32 %v1026, %v1026
        %v1043 = vmul.f32 %v1027, %v1027
        %v1044 = vmul.f32 %v1028, %v1028
        %v1045 = vmul.f32 %v1029, %v1029
        %v1046 = vmul.f32 %v1030, %v1030
        %v1047 = vmul.f32 %v1031, %v1031
        %v1048 = vmul.f32 %v1032, %v1032
        %v1049 = vmul.f32 %v1033, %v1033
        %v1050 = vmul.f32 %v1034, %v1034
        %v1051 = vmul.f32 %v1035, %v1035
        %v1052 = vmul.f32 %v1036, %v1036
        %v1053 = vmul.f32 %v1037, %v1037
        %1054 = vadd.xlane.f32.xlu0 %v1038
        %v1055 = vpop.xlane.xlu0 %1054
        %1056 = vadd.xlane.f32.xlu0 %v1039
        %v1057 = vpop.xlane.xlu0 %1056
        %1058 = vadd.xlane.f32.xlu0 %v1040
        %v1059 = vpop.xlane.xlu0 %1058
        %1060 = vadd.xlane.f32.xlu0 %v1041
        %v1061 = vpop.xlane.xlu0 %1060
        %1062 = vadd.xlane.f32.xlu0 %v1042
        %v1063 = vpop.xlane.xlu0 %1062
        %1064 = vadd.xlane.f32.xlu0 %v1043
        %v1065 = vpop.xlane.xlu0 %1064
        %1066 = vadd.xlane.f32.xlu0 %v1044
        %v1067 = vpop.xlane.xlu0 %1066
        %1068 = vadd.xlane.f32.xlu0 %v1045
        %v1069 = vpop.xlane.xlu0 %1068
        %1070 = vadd.xlane.f32.xlu0 %v1046
        %v1071 = vpop.xlane.xlu0 %1070
        %1072 = vadd.xlane.f32.xlu0 %v1047
        %v1073 = vpop.xlane.xlu0 %1072
        %1074 = vadd.xlane.f32.xlu0 %v1048
        %v1075 = vpop.xlane.xlu0 %1074
        %1076 = vadd.xlane.f32.xlu0 %v1049
        %v1077 = vpop.xlane.xlu0 %1076
        %1078 = vadd.xlane.f32.xlu0 %v1050
        %v1079 = vpop.xlane.xlu0 %1078
        %1080 = vadd.xlane.f32.xlu0 %v1051
        %v1081 = vpop.xlane.xlu0 %1080
        %1082 = vadd.xlane.f32.xlu0 %v1052
        %v1083 = vpop.xlane.xlu0 %1082
        %1084 = vadd.xlane.f32.xlu0 %v1053
        %v1085 = vpop.xlane.xlu0 %1084
        %v1086 = vmul.f32 %v1055, %v1005
        %v1087 = vmul.f32 %v1057, %v1005
        %v1088 = vmul.f32 %v1059, %v1005
        %v1089 = vmul.f32 %v1061, %v1005
        %v1090 = vmul.f32 %v1063, %v1005
        %v1091 = vmul.f32 %v1065, %v1005
        %v1092 = vmul.f32 %v1067, %v1005
        %v1093 = vmul.f32 %v1069, %v1005
        %v1094 = vmul.f32 %v1071, %v1005
        %v1095 = vmul.f32 %v1073, %v1005
        %v1096 = vmul.f32 %v1075, %v1005
        %v1097 = vmul.f32 %v1077, %v1005
        %v1098 = vmul.f32 %v1079, %v1005
        %v1099 = vmul.f32 %v1081, %v1005
        %v1100 = vmul.f32 %v1083, %v1005
        %v1101 = vmul.f32 %v1085, %v1005
        %v1102 = vadd.f32 %v1086, 1e-05
        %v1103 = vadd.f32 %v1087, 1e-05
        %v1104 = vadd.f32 %v1088, 1e-05
        %v1105 = vadd.f32 %v1089, 1e-05
        %v1106 = vadd.f32 %v1090, 1e-05
        %v1107 = vadd.f32 %v1091, 1e-05
        %v1108 = vadd.f32 %v1092, 1e-05
        %v1109 = vadd.f32 %v1093, 1e-05
        %v1110 = vadd.f32 %v1094, 1e-05
        %v1111 = vadd.f32 %v1095, 1e-05
        %v1112 = vadd.f32 %v1096, 1e-05
        %v1113 = vadd.f32 %v1097, 1e-05
        %v1114 = vadd.f32 %v1098, 1e-05
        %v1115 = vadd.f32 %v1099, 1e-05
        %v1116 = vadd.f32 %v1100, 1e-05
        %v1117 = vadd.f32 %v1101, 1e-05
        %v1118 = vrsqrt.pop %v1102
        %v1119 = vrsqrt.pop %v1103
        %v1120 = vrsqrt.pop %v1104
        %v1121 = vrsqrt.pop %v1105
        %v1122 = vrsqrt.pop %v1106
        %v1123 = vrsqrt.pop %v1107
        %v1124 = vrsqrt.pop %v1108
        %v1125 = vrsqrt.pop %v1109
        %v1126 = vrsqrt.pop %v1110
        %v1127 = vrsqrt.pop %v1111
        %v1128 = vrsqrt.pop %v1112
        %v1129 = vrsqrt.pop %v1113
        %v1130 = vrsqrt.pop %v1114
        %v1131 = vrsqrt.pop %v1115
        %v1132 = vrsqrt.pop %v1116
        %v1133 = vrsqrt.pop %v1117
        %v1134 = vmul.f32 %v1022, %v1118
        %v1135 = vmul.f32 %v1023, %v1119
        %v1136 = vmul.f32 %v1024, %v1120
        %v1137 = vmul.f32 %v1025, %v1121
        %v1138 = vmul.f32 %v1026, %v1122
        %v1139 = vmul.f32 %v1027, %v1123
        %v1140 = vmul.f32 %v1028, %v1124
        %v1141 = vmul.f32 %v1029, %v1125
        %v1142 = vmul.f32 %v1030, %v1126
        %v1143 = vmul.f32 %v1031, %v1127
        %v1144 = vmul.f32 %v1032, %v1128
        %v1145 = vmul.f32 %v1033, %v1129
        %v1146 = vmul.f32 %v1034, %v1130
        %v1147 = vmul.f32 %v1035, %v1131
        %v1148 = vmul.f32 %v1036, %v1132
        %v1149 = vmul.f32 %v1037, %v1133
        %v1151 = vlaneseq
        %v1152 = vshrl.u32 %v1151, 7
        %v1153 = vsub.s32 0, %v1152
        %v1154 = vrot.slane %v971, %v1153
        %v1156 = vmul.f32 %v1134, %v1154
        %v1157 = vmul.f32 %v1135, %v1154
        %v1158 = vmul.f32 %v1136, %v1154
        %v1159 = vmul.f32 %v1137, %v1154
        %v1160 = vmul.f32 %v1138, %v1154
        %v1161 = vmul.f32 %v1139, %v1154
        %v1162 = vmul.f32 %v1140, %v1154
        %v1163 = vmul.f32 %v1141, %v1154
        %v1164 = vmul.f32 %v1142, %v1154
        %v1165 = vmul.f32 %v1143, %v1154
        %v1166 = vmul.f32 %v1144, %v1154
        %v1167 = vmul.f32 %v1145, %v1154
        %v1168 = vmul.f32 %v1146, %v1154
        %v1169 = vmul.f32 %v1147, %v1154
        %v1170 = vmul.f32 %v1148, %v1154
        %v1171 = vmul.f32 %v1149, %v1154
        %v1173 = vlaneseq
        %v1174 = vshrl.u32 %v1173, 7
        %v1175 = vsub.s32 0, %v1174
        %v1176 = vrot.slane %v972, %v1175
        %v1178 = vadd.f32 %v1156, %v1176
        %v1179 = vadd.f32 %v1157, %v1176
        %v1180 = vadd.f32 %v1158, %v1176
        %v1181 = vadd.f32 %v1159, %v1176
        %v1182 = vadd.f32 %v1160, %v1176
        %v1183 = vadd.f32 %v1161, %v1176
        %v1184 = vadd.f32 %v1162, %v1176
        %v1185 = vadd.f32 %v1163, %v1176
        %v1186 = vadd.f32 %v1164, %v1176
        %v1187 = vadd.f32 %v1165, %v1176
        %v1188 = vadd.f32 %v1166, %v1176
        %v1189 = vadd.f32 %v1167, %v1176
        %v1190 = vadd.f32 %v1168, %v1176
        %v1191 = vadd.f32 %v1169, %v1176
        %v1192 = vadd.f32 %v1170, %v1176
        %v1193 = vadd.f32 %v1171, %v1176
        %v1194 = vpack.c.bf16 %v1179, %v1178
        %v1195 = vpack.c.bf16 %v1181, %v1180
        %v1196 = vpack.c.bf16 %v1183, %v1182
        %v1197 = vpack.c.bf16 %v1185, %v1184
        %v1198 = vpack.c.bf16 %v1187, %v1186
        %v1199 = vpack.c.bf16 %v1189, %v1188
        %v1200 = vpack.c.bf16 %v1191, %v1190
        %v1201 = vpack.c.bf16 %v1193, %v1192
        %v1202 = vld [vmem:[#allocation8] sm:$0xf]
        %v1203 = vld [vmem:[#allocation8 + $0x4] sm:$0xf]
        %v1204 = vld [vmem:[#allocation8 + $0x8] sm:$0xf]
        %v1205 = vld [vmem:[#allocation8 + $0xc] sm:$0xf]
        %v1206 = vld [vmem:[#allocation8 + $0x10] sm:$0xf]
        %v1207 = vld [vmem:[#allocation8 + $0x14] sm:$0xf]
        %v1208 = vld [vmem:[#allocation8 + $0x18] sm:$0xf]
        %v1209 = vld [vmem:[#allocation8 + $0x1c] sm:$0xf]
        %v1210 = vld [vmem:[#allocation8 + $0x20] sm:$0xf]
        %v1211 = vld [vmem:[#allocation8 + $0x24] sm:$0xf]
        %v1212 = vld [vmem:[#allocation8 + $0x28] sm:$0xf]
        %v1213 = vld [vmem:[#allocation8 + $0x2c] sm:$0xf]
        %v1214 = vld [vmem:[#allocation8 + $0x30] sm:$0xf]
        %v1215 = vld [vmem:[#allocation8 + $0x34] sm:$0xf]
        %v1216 = vld [vmem:[#allocation8 + $0x38] sm:$0xf]
        %v1217 = vld [vmem:[#allocation8 + $0x3c] sm:$0xf]
        %v1234 = vunpack.c.l.b16 %v1202
        %v1235 = vunpack.c.l.b16 %v1203
        %v1236 = vunpack.c.l.b16 %v1204
        %v1237 = vunpack.c.l.b16 %v1205
        %v1238 = vunpack.c.l.b16 %v1206
        %v1239 = vunpack.c.l.b16 %v1207
        %v1240 = vunpack.c.l.b16 %v1208
        %v1241 = vunpack.c.l.b16 %v1209
        %v1242 = vunpack.c.l.b16 %v1210
        %v1243 = vunpack.c.l.b16 %v1211
        %v1244 = vunpack.c.l.b16 %v1212
        %v1245 = vunpack.c.l.b16 %v1213
        %v1246 = vunpack.c.l.b16 %v1214
        %v1247 = vunpack.c.l.b16 %v1215
        %v1248 = vunpack.c.l.b16 %v1216
        %v1249 = vunpack.c.l.b16 %v1217
        %v1250 = vpack.c.b16 %v1235, %v1234
        %v1251 = vpack.c.b16 %v1237, %v1236
        %v1252 = vpack.c.b16 %v1239, %v1238
        %v1253 = vpack.c.b16 %v1241, %v1240
        %v1254 = vpack.c.b16 %v1243, %v1242
        %v1255 = vpack.c.b16 %v1245, %v1244
        %v1256 = vpack.c.b16 %v1247, %v1246
        %v1257 = vpack.c.b16 %v1249, %v1248
        %1266 = vmatprep.subr.bf16.mxu0 0
        %1267 = vmatpush1.bf16.msra.mxu0 %v1257
        %1268 = vmatprep.subr.bf16.mxu0 0
        %1269 = vmatpush1.bf16.msra.mxu0 %v1256
        %1270 = vmatprep.subr.bf16.mxu0 0
        %1271 = vmatpush1.bf16.msra.mxu0 %v1255
        %1272 = vmatprep.subr.bf16.mxu0 0
        %1273 = vmatpush1.bf16.msra.mxu0 %v1254
        %1274 = vmatprep.subr.bf16.mxu0 0
        %1275 = vmatpush1.bf16.msra.mxu0 %v1253
        %1276 = vmatprep.subr.bf16.mxu0 0
        %1277 = vmatpush1.bf16.msra.mxu0 %v1252
        %1278 = vmatprep.subr.bf16.mxu0 0
        %1279 = vmatpush1.bf16.msra.mxu0 %v1251
        %1280 = vmatprep.subr.bf16.mxu0 0
        %1281 = vmatpush1.bf16.msra.mxu0 %v1250
        %1282 = vmatprep.subr.bf16.mxu0 0
        %1283 = vmatpush2.bf16.msra.mxu0 0
        %1284 = vmatprep.subr.bf16.mxu0 0
        %1285 = vmatpush2.bf16.msra.mxu0 0
        %1286 = vmatprep.subr.bf16.mxu0 0
        %1287 = vmatpush2.bf16.msra.mxu0 0
        %1288 = vmatprep.subr.bf16.mxu0 0
        %1289 = vmatpush2.bf16.msra.mxu0 0
        %1290 = vmatprep.subr.bf16.mxu0 0
        %1291 = vmatpush2.bf16.msra.mxu0 0
        %1292 = vmatprep.subr.bf16.mxu0 0
        %1293 = vmatpush2.bf16.msra.mxu0 0
        %1294 = vmatprep.subr.bf16.mxu0 0
        %1295 = vmatpush2.bf16.msra.mxu0 0
        %1296 = vmatprep.subr.bf16.mxu0 0
        %1297 = vmatpush2.bf16.msra.mxu0 0
        %1298 = vmatprep.mubr.bf16.mxu0 0
        %1299 = vmatmul.mubr.bf16.gmra.mxu0 %v1194
        %v1300 = vpop.f32.mrf.mxu0
        %v1301 = vadd.f32 0.0, %v1300
        %v1302 = vpop.f32.mrf.mxu0
        %v1303 = vpop.f32.mrf.mxu0
        %v1304 = vadd.f32 0.0, %v1303
        %v1305 = vpop.f32.mrf.mxu0
        %1306 = vmatprep.mubr.bf16.mxu0 0
        %1307 = vmatmul.mubr.bf16.gmra.mxu0 %v1195
        %v1308 = vpop.f32.mrf.mxu0
        %v1309 = vadd.f32 0.0, %v1308
        %v1310 = vpop.f32.mrf.mxu0
        %v1311 = vpop.f32.mrf.mxu0
        %v1312 = vadd.f32 0.0, %v1311
        %v1313 = vpop.f32.mrf.mxu0
        %1314 = vmatprep.mubr.bf16.mxu0 0
        %1315 = vmatmul.mubr.bf16.gmra.mxu0 %v1196
        %v1316 = vpop.f32.mrf.mxu0
        %v1317 = vadd.f32 0.0, %v1316
        %v1318 = vpop.f32.mrf.mxu0
        %v1319 = vpop.f32.mrf.mxu0
        %v1320 = vadd.f32 0.0, %v1319
        %v1321 = vpop.f32.mrf.mxu0
        %1322 = vmatprep.mubr.bf16.mxu0 0
        %1323 = vmatmul.mubr.bf16.gmra.mxu0 %v1197
        %v1324 = vpop.f32.mrf.mxu0
        %v1325 = vadd.f32 0.0, %v1324
        %v1326 = vpop.f32.mrf.mxu0
        %v1327 = vpop.f32.mrf.mxu0
        %v1328 = vadd.f32 0.0, %v1327
        %v1329 = vpop.f32.mrf.mxu0
        %1330 = vmatprep.mubr.bf16.mxu0 0
        %1331 = vmatmul.mubr.bf16.gmra.mxu0 %v1198
        %v1332 = vpop.f32.mrf.mxu0
        %v1333 = vadd.f32 0.0, %v1332
        %v1334 = vpop.f32.mrf.mxu0
        %v1335 = vpop.f32.mrf.mxu0
        %v1336 = vadd.f32 0.0, %v1335
        %v1337 = vpop.f32.mrf.mxu0
        %1338 = vmatprep.mubr.bf16.mxu0 0
        %1339 = vmatmul.mubr.bf16.gmra.mxu0 %v1199
        %v1340 = vpop.f32.mrf.mxu0
        %v1341 = vadd.f32 0.0, %v1340
        %v1342 = vpop.f32.mrf.mxu0
        %v1343 = vpop.f32.mrf.mxu0
        %v1344 = vadd.f32 0.0, %v1343
        %v1345 = vpop.f32.mrf.mxu0
        %1346 = vmatprep.mubr.bf16.mxu0 0
        %1347 = vmatmul.mubr.bf16.gmra.mxu0 %v1200
        %v1348 = vpop.f32.mrf.mxu0
        %v1349 = vadd.f32 0.0, %v1348
        %v1350 = vpop.f32.mrf.mxu0
        %v1351 = vpop.f32.mrf.mxu0
        %v1352 = vadd.f32 0.0, %v1351
        %v1353 = vpop.f32.mrf.mxu0
        %1354 = vmatprep.mubr.bf16.mxu0 0
        %1355 = vmatmul.mubr.bf16.gmra.mxu0 %v1201
        %v1356 = vpop.f32.mrf.mxu0
        %v1357 = vadd.f32 0.0, %v1356
        %v1358 = vpop.f32.mrf.mxu0
        %v1359 = vpop.f32.mrf.mxu0
        %v1360 = vadd.f32 0.0, %v1359
        %v1361 = vpop.f32.mrf.mxu0
        %1362 = vdwg.mxu0
        %v1363 = vpack.c.bf16 %v1304, %v1301
        %v1364 = vpack.c.bf16 %v1312, %v1309
        %v1365 = vpack.c.bf16 %v1320, %v1317
        %v1366 = vpack.c.bf16 %v1328, %v1325
        %v1367 = vpack.c.bf16 %v1336, %v1333
        %v1368 = vpack.c.bf16 %v1344, %v1341
        %v1369 = vpack.c.bf16 %v1352, %v1349
        %v1370 = vpack.c.bf16 %v1360, %v1357
        %v1379 = vunpack.c.l.b16 %v1363
        %v1380 = vunpack.c.h.b16 %v1363
        %v1381 = vunpack.c.l.b16 %v1364
        %v1382 = vunpack.c.h.b16 %v1364
        %v1383 = vunpack.c.l.b16 %v1365
        %v1384 = vunpack.c.h.b16 %v1365
        %v1385 = vunpack.c.l.b16 %v1366
        %v1386 = vunpack.c.h.b16 %v1366
        %v1387 = vunpack.c.l.b16 %v1367
        %v1388 = vunpack.c.h.b16 %v1367
        %v1389 = vunpack.c.l.b16 %v1368
        %v1390 = vunpack.c.h.b16 %v1368
        %v1391 = vunpack.c.l.b16 %v1369
        %v1392 = vunpack.c.h.b16 %v1369
        %v1393 = vunpack.c.l.b16 %v1370
        %v1394 = vunpack.c.h.b16 %v1370
        %v1395 = vpack.c.b16 %v1379, %v1379
        %v1396 = vpack.c.b16 %v1380, %v1380
        %v1397 = vpack.c.b16 %v1381, %v1381
        %v1398 = vpack.c.b16 %v1382, %v1382
        %v1399 = vpack.c.b16 %v1383, %v1383
        %v1400 = vpack.c.b16 %v1384, %v1384
        %v1401 = vpack.c.b16 %v1385, %v1385
        %v1402 = vpack.c.b16 %v1386, %v1386
        %v1403 = vpack.c.b16 %v1387, %v1387
        %v1404 = vpack.c.b16 %v1388, %v1388
        %v1405 = vpack.c.b16 %v1389, %v1389
        %v1406 = vpack.c.b16 %v1390, %v1390
        %v1407 = vpack.c.b16 %v1391, %v1391
        %v1408 = vpack.c.b16 %v1392, %v1392
        %v1409 = vpack.c.b16 %v1393, %v1393
        %v1410 = vpack.c.b16 %v1394, %v1394
        %1427 = vst [vmem:[%s598] sm:$0xf] %v1395
        %1428 = vst [vmem:[%s598 + $0x4] sm:$0xf] %v1396
        %1429 = vst [vmem:[%s598 + $0x8] sm:$0xf] %v1397
        %1430 = vst [vmem:[%s598 + $0xc] sm:$0xf] %v1398
        %1431 = vst [vmem:[%s598 + $0x10] sm:$0xf] %v1399
        %1432 = vst [vmem:[%s598 + $0x14] sm:$0xf] %v1400
        %1433 = vst [vmem:[%s598 + $0x18] sm:$0xf] %v1401
        %1434 = vst [vmem:[%s598 + $0x1c] sm:$0xf] %v1402
        %1435 = vst [vmem:[%s598 + $0x20] sm:$0xf] %v1403
        %1436 = vst [vmem:[%s598 + $0x24] sm:$0xf] %v1404
        %1437 = vst [vmem:[%s598 + $0x28] sm:$0xf] %v1405
        %1438 = vst [vmem:[%s598 + $0x2c] sm:$0xf] %v1406
        %1439 = vst [vmem:[%s598 + $0x30] sm:$0xf] %v1407
        %1440 = vst [vmem:[%s598 + $0x34] sm:$0xf] %v1408
        %1441 = vst [vmem:[%s598 + $0x38] sm:$0xf] %v1409
        %1442 = vst [vmem:[%s598 + $0x3c] sm:$0xf] %v1410
        %v1443 = vld [vmem:[#allocation10] sm:$0xf]
        %v1444 = vld [vmem:[#allocation10 + $0x4] sm:$0xf]
        %v1445 = vld [vmem:[#allocation10 + $0x8] sm:$0xf]
        %v1446 = vld [vmem:[#allocation10 + $0xc] sm:$0xf]
        %v1447 = vld [vmem:[#allocation10 + $0x10] sm:$0xf]
        %v1448 = vld [vmem:[#allocation10 + $0x14] sm:$0xf]
        %v1449 = vld [vmem:[#allocation10 + $0x18] sm:$0xf]
        %v1450 = vld [vmem:[#allocation10 + $0x1c] sm:$0xf]
        %v1451 = vld [vmem:[#allocation10 + $0x20] sm:$0xf]
        %v1452 = vld [vmem:[#allocation10 + $0x24] sm:$0xf]
        %v1453 = vld [vmem:[#allocation10 + $0x28] sm:$0xf]
        %v1454 = vld [vmem:[#allocation10 + $0x2c] sm:$0xf]
        %v1455 = vld [vmem:[#allocation10 + $0x30] sm:$0xf]
        %v1456 = vld [vmem:[#allocation10 + $0x34] sm:$0xf]
        %v1457 = vld [vmem:[#allocation10 + $0x38] sm:$0xf]
        %v1458 = vld [vmem:[#allocation10 + $0x3c] sm:$0xf]
        %v1475 = vunpack.c.l.b16 %v1443
        %v1476 = vunpack.c.l.b16 %v1444
        %v1477 = vunpack.c.l.b16 %v1445
        %v1478 = vunpack.c.l.b16 %v1446
        %v1479 = vunpack.c.l.b16 %v1447
        %v1480 = vunpack.c.l.b16 %v1448
        %v1481 = vunpack.c.l.b16 %v1449
        %v1482 = vunpack.c.l.b16 %v1450
        %v1483 = vunpack.c.l.b16 %v1451
        %v1484 = vunpack.c.l.b16 %v1452
        %v1485 = vunpack.c.l.b16 %v1453
        %v1486 = vunpack.c.l.b16 %v1454
        %v1487 = vunpack.c.l.b16 %v1455
        %v1488 = vunpack.c.l.b16 %v1456
        %v1489 = vunpack.c.l.b16 %v1457
        %v1490 = vunpack.c.l.b16 %v1458
        %v1491 = vpack.c.b16 %v1476, %v1475
        %v1492 = vpack.c.b16 %v1478, %v1477
        %v1493 = vpack.c.b16 %v1480, %v1479
        %v1494 = vpack.c.b16 %v1482, %v1481
        %v1495 = vpack.c.b16 %v1484, %v1483
        %v1496 = vpack.c.b16 %v1486, %v1485
        %v1497 = vpack.c.b16 %v1488, %v1487
        %v1498 = vpack.c.b16 %v1490, %v1489
        %1507 = vmatprep.subr.bf16.mxu0 0
        %1508 = vmatpush1.bf16.msra.mxu0 %v1498
        %1509 = vmatprep.subr.bf16.mxu0 0
        %1510 = vmatpush1.bf16.msra.mxu0 %v1497
        %1511 = vmatprep.subr.bf16.mxu0 0
        %1512 = vmatpush1.bf16.msra.mxu0 %v1496
        %1513 = vmatprep.subr.bf16.mxu0 0
        %1514 = vmatpush1.bf16.msra.mxu0 %v1495
        %1515 = vmatprep.subr.bf16.mxu0 0
        %1516 = vmatpush1.bf16.msra.mxu0 %v1494
        %1517 = vmatprep.subr.bf16.mxu0 0
        %1518 = vmatpush1.bf16.msra.mxu0 %v1493
        %1519 = vmatprep.subr.bf16.mxu0 0
        %1520 = vmatpush1.bf16.msra.mxu0 %v1492
        %1521 = vmatprep.subr.bf16.mxu0 0
        %1522 = vmatpush1.bf16.msra.mxu0 %v1491
        %1523 = vmatprep.subr.bf16.mxu0 0
        %1524 = vmatpush2.bf16.msra.mxu0 0
        %1525 = vmatprep.subr.bf16.mxu0 0
        %1526 = vmatpush2.bf16.msra.mxu0 0
        %1527 = vmatprep.subr.bf16.mxu0 0
        %1528 = vmatpush2.bf16.msra.mxu0 0
        %1529 = vmatprep.subr.bf16.mxu0 0
        %1530 = vmatpush2.bf16.msra.mxu0 0
        %1531 = vmatprep.subr.bf16.mxu0 0
        %1532 = vmatpush2.bf16.msra.mxu0 0
        %1533 = vmatprep.subr.bf16.mxu0 0
        %1534 = vmatpush2.bf16.msra.mxu0 0
        %1535 = vmatprep.subr.bf16.mxu0 0
        %1536 = vmatpush2.bf16.msra.mxu0 0
        %1537 = vmatprep.subr.bf16.mxu0 0
        %1538 = vmatpush2.bf16.msra.mxu0 0
        %1539 = vmatprep.mubr.bf16.mxu0 0
        %1540 = vmatmul.mubr.bf16.gmra.mxu0 %v1194
        %v1541 = vpop.f32.mrf.mxu0
        %v1542 = vadd.f32 0.0, %v1541
        %v1543 = vpop.f32.mrf.mxu0
        %v1544 = vpop.f32.mrf.mxu0
        %v1545 = vadd.f32 0.0, %v1544
        %v1546 = vpop.f32.mrf.mxu0
        %1547 = vmatprep.mubr.bf16.mxu0 0
        %1548 = vmatmul.mubr.bf16.gmra.mxu0 %v1195
        %v1549 = vpop.f32.mrf.mxu0
        %v1550 = vadd.f32 0.0, %v1549
        %v1551 = vpop.f32.mrf.mxu0
        %v1552 = vpop.f32.mrf.mxu0
        %v1553 = vadd.f32 0.0, %v1552
        %v1554 = vpop.f32.mrf.mxu0
        %1555 = vmatprep.mubr.bf16.mxu0 0
        %1556 = vmatmul.mubr.bf16.gmra.mxu0 %v1196
        %v1557 = vpop.f32.mrf.mxu0
        %v1558 = vadd.f32 0.0, %v1557
        %v1559 = vpop.f32.mrf.mxu0
        %v1560 = vpop.f32.mrf.mxu0
        %v1561 = vadd.f32 0.0, %v1560
        %v1562 = vpop.f32.mrf.mxu0
        %1563 = vmatprep.mubr.bf16.mxu0 0
        %1564 = vmatmul.mubr.bf16.gmra.mxu0 %v1197
        %v1565 = vpop.f32.mrf.mxu0
        %v1566 = vadd.f32 0.0, %v1565
        %v1567 = vpop.f32.mrf.mxu0
        %v1568 = vpop.f32.mrf.mxu0
        %v1569 = vadd.f32 0.0, %v1568
        %v1570 = vpop.f32.mrf.mxu0
        %1571 = vmatprep.mubr.bf16.mxu0 0
        %1572 = vmatmul.mubr.bf16.gmra.mxu0 %v1198
        %v1573 = vpop.f32.mrf.mxu0
        %v1574 = vadd.f32 0.0, %v1573
        %v1575 = vpop.f32.mrf.mxu0
        %v1576 = vpop.f32.mrf.mxu0
        %v1577 = vadd.f32 0.0, %v1576
        %v1578 = vpop.f32.mrf.mxu0
        %1579 = vmatprep.mubr.bf16.mxu0 0
        %1580 = vmatmul.mubr.bf16.gmra.mxu0 %v1199
        %v1581 = vpop.f32.mrf.mxu0
        %v1582 = vadd.f32 0.0, %v1581
        %v1583 = vpop.f32.mrf.mxu0
        %v1584 = vpop.f32.mrf.mxu0
        %v1585 = vadd.f32 0.0, %v1584
        %v1586 = vpop.f32.mrf.mxu0
        %1587 = vmatprep.mubr.bf16.mxu0 0
        %1588 = vmatmul.mubr.bf16.gmra.mxu0 %v1200
        %v1589 = vpop.f32.mrf.mxu0
        %v1590 = vadd.f32 0.0, %v1589
        %v1591 = vpop.f32.mrf.mxu0
        %v1592 = vpop.f32.mrf.mxu0
        %v1593 = vadd.f32 0.0, %v1592
        %v1594 = vpop.f32.mrf.mxu0
        %1595 = vmatprep.mubr.bf16.mxu0 0
        %1596 = vmatmul.mubr.bf16.gmra.mxu0 %v1201
        %v1597 = vpop.f32.mrf.mxu0
        %v1598 = vadd.f32 0.0, %v1597
        %v1599 = vpop.f32.mrf.mxu0
        %v1600 = vpop.f32.mrf.mxu0
        %v1601 = vadd.f32 0.0, %v1600
        %v1602 = vpop.f32.mrf.mxu0
        %1603 = vdwg.mxu0
        %v1604 = vpack.c.bf16 %v1545, %v1542
        %v1605 = vpack.c.bf16 %v1553, %v1550
        %v1606 = vpack.c.bf16 %v1561, %v1558
        %v1607 = vpack.c.bf16 %v1569, %v1566
        %v1608 = vpack.c.bf16 %v1577, %v1574
        %v1609 = vpack.c.bf16 %v1585, %v1582
        %v1610 = vpack.c.bf16 %v1593, %v1590
        %v1611 = vpack.c.bf16 %v1601, %v1598
        %v1620 = vunpack.c.l.b16 %v1604
        %v1621 = vunpack.c.h.b16 %v1604
        %v1622 = vunpack.c.l.b16 %v1605
        %v1623 = vunpack.c.h.b16 %v1605
        %v1624 = vunpack.c.l.b16 %v1606
        %v1625 = vunpack.c.h.b16 %v1606
        %v1626 = vunpack.c.l.b16 %v1607
        %v1627 = vunpack.c.h.b16 %v1607
        %v1628 = vunpack.c.l.b16 %v1608
        %v1629 = vunpack.c.h.b16 %v1608
        %v1630 = vunpack.c.l.b16 %v1609
        %v1631 = vunpack.c.h.b16 %v1609
        %v1632 = vunpack.c.l.b16 %v1610
        %v1633 = vunpack.c.h.b16 %v1610
        %v1634 = vunpack.c.l.b16 %v1611
        %v1635 = vunpack.c.h.b16 %v1611
        %v1636 = vpack.c.b16 %v1620, %v1620
        %v1637 = vpack.c.b16 %v1621, %v1621
        %v1638 = vpack.c.b16 %v1622, %v1622
        %v1639 = vpack.c.b16 %v1623, %v1623
        %v1640 = vpack.c.b16 %v1624, %v1624
        %v1641 = vpack.c.b16 %v1625, %v1625
        %v1642 = vpack.c.b16 %v1626, %v1626
        %v1643 = vpack.c.b16 %v1627, %v1627
        %v1644 = vpack.c.b16 %v1628, %v1628
        %v1645 = vpack.c.b16 %v1629, %v1629
        %v1646 = vpack.c.b16 %v1630, %v1630
        %v1647 = vpack.c.b16 %v1631, %v1631
        %v1648 = vpack.c.b16 %v1632, %v1632
        %v1649 = vpack.c.b16 %v1633, %v1633
        %v1650 = vpack.c.b16 %v1634, %v1634
        %v1651 = vpack.c.b16 %v1635, %v1635
        %1668 = vst [vmem:[%s605] sm:$0xf] %v1636
        %1669 = vst [vmem:[%s605 + $0x4] sm:$0xf] %v1637
        %1670 = vst [vmem:[%s605 + $0x8] sm:$0xf] %v1638
        %1671 = vst [vmem:[%s605 + $0xc] sm:$0xf] %v1639
        %1672 = vst [vmem:[%s605 + $0x10] sm:$0xf] %v1640
        %1673 = vst [vmem:[%s605 + $0x14] sm:$0xf] %v1641
        %1674 = vst [vmem:[%s605 + $0x18] sm:$0xf] %v1642
        %1675 = vst [vmem:[%s605 + $0x1c] sm:$0xf] %v1643
        %1676 = vst [vmem:[%s605 + $0x20] sm:$0xf] %v1644
        %1677 = vst [vmem:[%s605 + $0x24] sm:$0xf] %v1645
        %1678 = vst [vmem:[%s605 + $0x28] sm:$0xf] %v1646
        %1679 = vst [vmem:[%s605 + $0x2c] sm:$0xf] %v1647
        %1680 = vst [vmem:[%s605 + $0x30] sm:$0xf] %v1648
        %1681 = vst [vmem:[%s605 + $0x34] sm:$0xf] %v1649
        %1682 = vst [vmem:[%s605 + $0x38] sm:$0xf] %v1650
        %1683 = vst [vmem:[%s605 + $0x3c] sm:$0xf] %v1651
        %v1684 = vld [vmem:[#allocation11] sm:$0xf]
        %v1685 = vld [vmem:[#allocation11 + $0x4] sm:$0xf]
        %v1686 = vld [vmem:[#allocation11 + $0x8] sm:$0xf]
        %v1687 = vld [vmem:[#allocation11 + $0xc] sm:$0xf]
        %v1688 = vld [vmem:[#allocation11 + $0x10] sm:$0xf]
        %v1689 = vld [vmem:[#allocation11 + $0x14] sm:$0xf]
        %v1690 = vld [vmem:[#allocation11 + $0x18] sm:$0xf]
        %v1691 = vld [vmem:[#allocation11 + $0x1c] sm:$0xf]
        %v1692 = vld [vmem:[#allocation11 + $0x20] sm:$0xf]
        %v1693 = vld [vmem:[#allocation11 + $0x24] sm:$0xf]
        %v1694 = vld [vmem:[#allocation11 + $0x28] sm:$0xf]
        %v1695 = vld [vmem:[#allocation11 + $0x2c] sm:$0xf]
        %v1696 = vld [vmem:[#allocation11 + $0x30] sm:$0xf]
        %v1697 = vld [vmem:[#allocation11 + $0x34] sm:$0xf]
        %v1698 = vld [vmem:[#allocation11 + $0x38] sm:$0xf]
        %v1699 = vld [vmem:[#allocation11 + $0x3c] sm:$0xf]
        %v1716 = vunpack.c.l.b16 %v1684
        %v1717 = vunpack.c.l.b16 %v1685
        %v1718 = vunpack.c.l.b16 %v1686
        %v1719 = vunpack.c.l.b16 %v1687
        %v1720 = vunpack.c.l.b16 %v1688
        %v1721 = vunpack.c.l.b16 %v1689
        %v1722 = vunpack.c.l.b16 %v1690
        %v1723 = vunpack.c.l.b16 %v1691
        %v1724 = vunpack.c.l.b16 %v1692
        %v1725 = vunpack.c.l.b16 %v1693
        %v1726 = vunpack.c.l.b16 %v1694
        %v1727 = vunpack.c.l.b16 %v1695
        %v1728 = vunpack.c.l.b16 %v1696
        %v1729 = vunpack.c.l.b16 %v1697
        %v1730 = vunpack.c.l.b16 %v1698
        %v1731 = vunpack.c.l.b16 %v1699
        %v1732 = vpack.c.b16 %v1717, %v1716
        %v1733 = vpack.c.b16 %v1719, %v1718
        %v1734 = vpack.c.b16 %v1721, %v1720
        %v1735 = vpack.c.b16 %v1723, %v1722
        %v1736 = vpack.c.b16 %v1725, %v1724
        %v1737 = vpack.c.b16 %v1727, %v1726
        %v1738 = vpack.c.b16 %v1729, %v1728
        %v1739 = vpack.c.b16 %v1731, %v1730
        %1748 = vmatprep.subr.bf16.mxu0 0
        %1749 = vmatpush1.bf16.msra.mxu0 %v1739
        %1750 = vmatprep.subr.bf16.mxu0 0
        %1751 = vmatpush1.bf16.msra.mxu0 %v1738
        %1752 = vmatprep.subr.bf16.mxu0 0
        %1753 = vmatpush1.bf16.msra.mxu0 %v1737
        %1754 = vmatprep.subr.bf16.mxu0 0
        %1755 = vmatpush1.bf16.msra.mxu0 %v1736
        %1756 = vmatprep.subr.bf16.mxu0 0
        %1757 = vmatpush1.bf16.msra.mxu0 %v1735
        %1758 = vmatprep.subr.bf16.mxu0 0
        %1759 = vmatpush1.bf16.msra.mxu0 %v1734
        %1760 = vmatprep.subr.bf16.mxu0 0
        %1761 = vmatpush1.bf16.msra.mxu0 %v1733
        %1762 = vmatprep.subr.bf16.mxu0 0
        %1763 = vmatpush1.bf16.msra.mxu0 %v1732
        %1764 = vmatprep.subr.bf16.mxu0 0
        %1765 = vmatpush2.bf16.msra.mxu0 0
        %1766 = vmatprep.subr.bf16.mxu0 0
        %1767 = vmatpush2.bf16.msra.mxu0 0
        %1768 = vmatprep.subr.bf16.mxu0 0
        %1769 = vmatpush2.bf16.msra.mxu0 0
        %1770 = vmatprep.subr.bf16.mxu0 0
        %1771 = vmatpush2.bf16.msra.mxu0 0
        %1772 = vmatprep.subr.bf16.mxu0 0
        %1773 = vmatpush2.bf16.msra.mxu0 0
        %1774 = vmatprep.subr.bf16.mxu0 0
        %1775 = vmatpush2.bf16.msra.mxu0 0
        %1776 = vmatprep.subr.bf16.mxu0 0
        %1777 = vmatpush2.bf16.msra.mxu0 0
        %1778 = vmatprep.subr.bf16.mxu0 0
        %1779 = vmatpush2.bf16.msra.mxu0 0
        %1780 = vmatprep.mubr.bf16.mxu0 0
        %1781 = vmatmul.mubr.bf16.gmra.mxu0 %v1194
        %v1782 = vpop.f32.mrf.mxu0
        %v1783 = vadd.f32 0.0, %v1782
        %v1784 = vpop.f32.mrf.mxu0
        %v1785 = vpop.f32.mrf.mxu0
        %v1786 = vadd.f32 0.0, %v1785
        %v1787 = vpop.f32.mrf.mxu0
        %1788 = vmatprep.mubr.bf16.mxu0 0
        %1789 = vmatmul.mubr.bf16.gmra.mxu0 %v1195
        %v1790 = vpop.f32.mrf.mxu0
        %v1791 = vadd.f32 0.0, %v1790
        %v1792 = vpop.f32.mrf.mxu0
        %v1793 = vpop.f32.mrf.mxu0
        %v1794 = vadd.f32 0.0, %v1793
        %v1795 = vpop.f32.mrf.mxu0
        %1796 = vmatprep.mubr.bf16.mxu0 0
        %1797 = vmatmul.mubr.bf16.gmra.mxu0 %v1196
        %v1798 = vpop.f32.mrf.mxu0
        %v1799 = vadd.f32 0.0, %v1798
        %v1800 = vpop.f32.mrf.mxu0
        %v1801 = vpop.f32.mrf.mxu0
        %v1802 = vadd.f32 0.0, %v1801
        %v1803 = vpop.f32.mrf.mxu0
        %1804 = vmatprep.mubr.bf16.mxu0 0
        %1805 = vmatmul.mubr.bf16.gmra.mxu0 %v1197
        %v1806 = vpop.f32.mrf.mxu0
        %v1807 = vadd.f32 0.0, %v1806
        %v1808 = vpop.f32.mrf.mxu0
        %v1809 = vpop.f32.mrf.mxu0
        %v1810 = vadd.f32 0.0, %v1809
        %v1811 = vpop.f32.mrf.mxu0
        %1812 = vmatprep.mubr.bf16.mxu0 0
        %1813 = vmatmul.mubr.bf16.gmra.mxu0 %v1198
        %v1814 = vpop.f32.mrf.mxu0
        %v1815 = vadd.f32 0.0, %v1814
        %v1816 = vpop.f32.mrf.mxu0
        %v1817 = vpop.f32.mrf.mxu0
        %v1818 = vadd.f32 0.0, %v1817
        %v1819 = vpop.f32.mrf.mxu0
        %1820 = vmatprep.mubr.bf16.mxu0 0
        %1821 = vmatmul.mubr.bf16.gmra.mxu0 %v1199
        %v1822 = vpop.f32.mrf.mxu0
        %v1823 = vadd.f32 0.0, %v1822
        %v1824 = vpop.f32.mrf.mxu0
        %v1825 = vpop.f32.mrf.mxu0
        %v1826 = vadd.f32 0.0, %v1825
        %v1827 = vpop.f32.mrf.mxu0
        %1828 = vmatprep.mubr.bf16.mxu0 0
        %1829 = vmatmul.mubr.bf16.gmra.mxu0 %v1200
        %v1830 = vpop.f32.mrf.mxu0
        %v1831 = vadd.f32 0.0, %v1830
        %v1832 = vpop.f32.mrf.mxu0
        %v1833 = vpop.f32.mrf.mxu0
        %v1834 = vadd.f32 0.0, %v1833
        %v1835 = vpop.f32.mrf.mxu0
        %1836 = vmatprep.mubr.bf16.mxu0 0
        %1837 = vmatmul.mubr.bf16.gmra.mxu0 %v1201
        %v1838 = vpop.f32.mrf.mxu0
        %v1839 = vadd.f32 0.0, %v1838
        %v1840 = vpop.f32.mrf.mxu0
        %v1841 = vpop.f32.mrf.mxu0
        %v1842 = vadd.f32 0.0, %v1841
        %v1843 = vpop.f32.mrf.mxu0
        %1844 = vdwg.mxu0
        %v1845 = vpack.c.bf16 %v1786, %v1783
        %v1846 = vpack.c.bf16 %v1794, %v1791
        %v1847 = vpack.c.bf16 %v1802, %v1799
        %v1848 = vpack.c.bf16 %v1810, %v1807
        %v1849 = vpack.c.bf16 %v1818, %v1815
        %v1850 = vpack.c.bf16 %v1826, %v1823
        %v1851 = vpack.c.bf16 %v1834, %v1831
        %v1852 = vpack.c.bf16 %v1842, %v1839
        %v1861 = vunpack.c.l.b16 %v1845
        %v1862 = vunpack.c.h.b16 %v1845
        %v1863 = vunpack.c.l.b16 %v1846
        %v1864 = vunpack.c.h.b16 %v1846
        %v1865 = vunpack.c.l.b16 %v1847
        %v1866 = vunpack.c.h.b16 %v1847
        %v1867 = vunpack.c.l.b16 %v1848
        %v1868 = vunpack.c.h.b16 %v1848
        %v1869 = vunpack.c.l.b16 %v1849
        %v1870 = vunpack.c.h.b16 %v1849
        %v1871 = vunpack.c.l.b16 %v1850
        %v1872 = vunpack.c.h.b16 %v1850
        %v1873 = vunpack.c.l.b16 %v1851
        %v1874 = vunpack.c.h.b16 %v1851
        %v1875 = vunpack.c.l.b16 %v1852
        %v1876 = vunpack.c.h.b16 %v1852
        %v1877 = vpack.c.b16 %v1861, %v1861
        %v1878 = vpack.c.b16 %v1862, %v1862
        %v1879 = vpack.c.b16 %v1863, %v1863
        %v1880 = vpack.c.b16 %v1864, %v1864
        %v1881 = vpack.c.b16 %v1865, %v1865
        %v1882 = vpack.c.b16 %v1866, %v1866
        %v1883 = vpack.c.b16 %v1867, %v1867
        %v1884 = vpack.c.b16 %v1868, %v1868
        %v1885 = vpack.c.b16 %v1869, %v1869
        %v1886 = vpack.c.b16 %v1870, %v1870
        %v1887 = vpack.c.b16 %v1871, %v1871
        %v1888 = vpack.c.b16 %v1872, %v1872
        %v1889 = vpack.c.b16 %v1873, %v1873
        %v1890 = vpack.c.b16 %v1874, %v1874
        %v1891 = vpack.c.b16 %v1875, %v1875
        %v1892 = vpack.c.b16 %v1876, %v1876
        %1909 = vst [vmem:[%s612] sm:$0xf] %v1877
        %1910 = vst [vmem:[%s612 + $0x4] sm:$0xf] %v1878
        %1911 = vst [vmem:[%s612 + $0x8] sm:$0xf] %v1879
        %1912 = vst [vmem:[%s612 + $0xc] sm:$0xf] %v1880
        %1913 = vst [vmem:[%s612 + $0x10] sm:$0xf] %v1881
        %1914 = vst [vmem:[%s612 + $0x14] sm:$0xf] %v1882
        %1915 = vst [vmem:[%s612 + $0x18] sm:$0xf] %v1883
        %1916 = vst [vmem:[%s612 + $0x1c] sm:$0xf] %v1884
        %1917 = vst [vmem:[%s612 + $0x20] sm:$0xf] %v1885
        %1918 = vst [vmem:[%s612 + $0x24] sm:$0xf] %v1886
        %1919 = vst [vmem:[%s612 + $0x28] sm:$0xf] %v1887
        %1920 = vst [vmem:[%s612 + $0x2c] sm:$0xf] %v1888
        %1921 = vst [vmem:[%s612 + $0x30] sm:$0xf] %v1889
        %1922 = vst [vmem:[%s612 + $0x34] sm:$0xf] %v1890
        %1923 = vst [vmem:[%s612 + $0x38] sm:$0xf] %v1891
        %1924 = vst [vmem:[%s612 + $0x3c] sm:$0xf] %v1892
        %s1925 = sand.u32 %s291, 1
        %s1926 = scalar_lea.sflag [#allocation4], %s1925
        %s1927 = sand.u32 %s291, 1
        %s1928 = smul.addr %s1927, 64
        %s1929 = scalar_lea.vmem [#allocation13], %s1928
        %s1930 = sand.u32 %s42, 1
        %s1931 = scalar_lea.sflag [#allocation15], %s1930
        %s1932 = sand.u32 %s319, 1
        %s1933 = smul.addr %s1932, 64
        %s1934 = scalar_lea.vmem [#allocation14], %s1933
        %s1935 = sand.u32 %s42, 1
        %s1936 = scalar_lea.sflag [#allocation15], %s1935
        %s1937 = sand.u32 %s347, 1
        %s1938 = smul.addr %s1937, 64
        %s1939 = scalar_lea.vmem [#allocation16], %s1938
        %s1940 = sand.u32 %s375, 1
        %s1941 = scalar_lea.sflag [#allocation18], %s1940
        %s1942 = sand.u32 %s375, 1
        %s1943 = smul.addr %s1942, 64
        %s1944 = scalar_lea.vmem [#allocation17], %s1943
        // Predicated region
        $region85: #{tpu_custom_call.1} parent=59 // pred_check
          %p1945 = pneg %p301
        $region86: #{tpu_custom_call.1} parent=59 // pred_check_branch
          %1947 = sbr.rel (%p1945) target = $region88
        $region87: #{tpu_custom_call.1} parent=59 // pred_region
          %s1948 = smul.u32 16, %s47
          %s1950 = ssub.s32 1024, 1024
          %1951 = vsyncadd %s1926, %s1950
          %s1952 = smul.addr %s46, 32
          %s1953 = sadd.s32 %s1948, %s1952
          %s1954 = smul.addr %s1953, 64
          %s1955 = scalar_lea.hbm %s10, %s1954
          %s1956 = sshll.u32 %s1929, 4
          %s1957 = int_to_ptr.vmem [resolvable:$true] %s1956
          %1962 = dma.vmem_to_hbm [thread:$0]  %s1957, 1024, %s1955, %s1926, 64, 64, 4
        $region88: #{tpu_custom_call.1} parent=59 // pred_fallthru
          _
        // Predicated region
        $region89: #{tpu_custom_call.1} parent=59 // pred_check
          %p1963 = pneg %p329
        $region90: #{tpu_custom_call.1} parent=59 // pred_check_branch
          %1965 = sbr.rel (%p1963) target = $region92
        $region91: #{tpu_custom_call.1} parent=59 // pred_region
          %s1966 = smul.u32 16, %s47
          %s1968 = ssub.s32 1024, 1024
          %1969 = vsyncadd %s1931, %s1968
          %s1970 = smul.addr %s46, 32
          %s1971 = sadd.s32 %s1966, %s1970
          %s1972 = smul.addr %s1971, 64
          %s1973 = scalar_lea.hbm %s11, %s1972
          %s1974 = sshll.u32 %s1934, 4
          %s1975 = int_to_ptr.vmem [resolvable:$true] %s1974
          %1980 = dma.vmem_to_hbm [thread:$0]  %s1975, 1024, %s1973, %s1931, 64, 64, 4
        $region92: #{tpu_custom_call.1} parent=59 // pred_fallthru
          _
        // Predicated region
        $region93: #{tpu_custom_call.1} parent=59 // pred_check
          %p1981 = pneg %p357
        $region94: #{tpu_custom_call.1} parent=59 // pred_check_branch
          %1983 = sbr.rel (%p1981) target = $region96
        $region95: #{tpu_custom_call.1} parent=59 // pred_region
          %s1984 = smul.u32 16, %s47
          %s1986 = ssub.s32 1024, 1024
          %1987 = vsyncadd %s1936, %s1986
          %s1988 = smul.addr %s46, 32
          %s1989 = sadd.s32 %s1984, %s1988
          %s1990 = smul.addr %s1989, 64
          %s1991 = scalar_lea.hbm %s12, %s1990
          %s1992 = sshll.u32 %s1939, 4
          %s1993 = int_to_ptr.vmem [resolvable:$true] %s1992
          %1998 = dma.vmem_to_hbm [thread:$0]  %s1993, 1024, %s1991, %s1936, 64, 64, 4
        $region96: #{tpu_custom_call.1} parent=59 // pred_fallthru
          _
        // Predicated region
        $region97: #{tpu_custom_call.1} parent=59 // pred_check
          %p1999 = pneg %p385
        $region98: #{tpu_custom_call.1} parent=59 // pred_check_branch
          %2001 = sbr.rel (%p1999) target = $region100
        $region99: #{tpu_custom_call.1} parent=59 // pred_region
          %s2002 = smul.u32 16, %s47
          %s2004 = ssub.s32 1024, 1024
          %2005 = vsyncadd %s1941, %s2004
          %s2006 = smul.addr %s46, 32
          %s2007 = sadd.s32 %s2002, %s2006
          %s2008 = smul.addr %s2007, 64
          %s2009 = scalar_lea.hbm %s13, %s2008
          %s2010 = sshll.u32 %s1944, 4
          %s2011 = int_to_ptr.vmem [resolvable:$true] %s2010
          %2016 = dma.vmem_to_hbm [thread:$0]  %s2011, 1024, %s2009, %s1941, 64, 64, 4
        $region100: #{tpu_custom_call.1} parent=59 // pred_fallthru
          _
      $region60: #{tpu_custom_call.1} parent=5 // pred_fallthru
        _
      %p2017 = scmp.le.s32.totalorder 2, %s37
      // Predicated region
      $region101: #{tpu_custom_call.1} parent=5 // pred_check
        %p2018 = pneg %p2017
      $region102: #{tpu_custom_call.1} parent=5 // pred_check_branch
        %2020 = sbr.rel (%p2018) target = $region104
      $region103: #{tpu_custom_call.1} parent=5 // pred_region
        %s2021 = ssub.s32 %s37, 2
        // Predicated region
        $region105: #{tpu_custom_call.1} parent=103 // pred_check
          %p2022 = pneg %p307
        $region106: #{tpu_custom_call.1} parent=103 // pred_check_branch
          %2024 = sbr.rel (%p2022) target = $region108
        $region107: #{tpu_custom_call.1} parent=103 // pred_region
          %s2025 = sand.u32 %s292, 1
          %s2026 = scalar_lea.sflag [#allocation4], %s2025
          %s2027 = sand.u32 %s292, 1
          %s2028 = smul.addr %s2027, 64
          %s2029 = scalar_lea.vmem [#allocation13], %s2028
          %2030 = dma.done %s2026, 1024
        $region108: #{tpu_custom_call.1} parent=103 // pred_fallthru
          _
        // Predicated region
        $region109: #{tpu_custom_call.1} parent=103 // pred_check
          %p2031 = pneg %p335
        $region110: #{tpu_custom_call.1} parent=103 // pred_check_branch
          %2033 = sbr.rel (%p2031) target = $region112
        $region111: #{tpu_custom_call.1} parent=103 // pred_region
          %s2034 = sand.u32 %s43, 1
          %s2035 = scalar_lea.sflag [#allocation15], %s2034
          %s2036 = sand.u32 %s320, 1
          %s2037 = smul.addr %s2036, 64
          %s2038 = scalar_lea.vmem [#allocation14], %s2037
          %2039 = dma.done %s2035, 1024
        $region112: #{tpu_custom_call.1} parent=103 // pred_fallthru
          _
        // Predicated region
        $region113: #{tpu_custom_call.1} parent=103 // pred_check
          %p2040 = pneg %p363
        $region114: #{tpu_custom_call.1} parent=103 // pred_check_branch
          %2042 = sbr.rel (%p2040) target = $region116
        $region115: #{tpu_custom_call.1} parent=103 // pred_region
          %s2043 = sand.u32 %s43, 1
          %s2044 = scalar_lea.sflag [#allocation15], %s2043
          %s2045 = sand.u32 %s348, 1
          %s2046 = smul.addr %s2045, 64
          %s2047 = scalar_lea.vmem [#allocation16], %s2046
          %2048 = dma.done %s2044, 1024
        $region116: #{tpu_custom_call.1} parent=103 // pred_fallthru
          _
        // Predicated region
        $region117: #{tpu_custom_call.1} parent=103 // pred_check
          %p2049 = pneg %p391
        $region118: #{tpu_custom_call.1} parent=103 // pred_check_branch
          %2051 = sbr.rel (%p2049) target = $region120
        $region119: #{tpu_custom_call.1} parent=103 // pred_region
          %s2052 = sand.u32 %s376, 1
          %s2053 = scalar_lea.sflag [#allocation18], %s2052
          %s2054 = sand.u32 %s376, 1
          %s2055 = smul.addr %s2054, 64
          %s2056 = scalar_lea.vmem [#allocation17], %s2055
          %2057 = dma.done %s2053, 1024
        $region120: #{tpu_custom_call.1} parent=103 // pred_fallthru
          _
      $region104: #{tpu_custom_call.1} parent=5 // pred_fallthru
        _
    $region6: #{tpu_custom_call.1} parent=1 // loop_footer
      %s41 = sadd.s32 1, %s37
    $region7: #{tpu_custom_call.1} parent=1 // loop_footer_branch
      %36 = sbr.rel target = $region3
    $region8: #{tpu_custom_call.1} parent=1 // loop_exit
      _
    %2058 = vsyncpa [#allocation3], 1
    %s2059 = scalar_lea.sflag [#allocation3], 1
    %2060 = vsyncpa %s2059, 1
    %2061 = vsyncpa [#allocation6], 1
    %s2062 = scalar_lea.sflag [#allocation6], 1
    %2063 = vsyncpa %s2062, 1
    %2064 = vsyncpa [#allocation9], 1
    %2065 = vsyncpa [#allocation12], 1
    %2066 = vsyncpa [#allocation4], 1
    %s2067 = scalar_lea.sflag [#allocation4], 1
    %2068 = vsyncpa %s2067, 1
    %2069 = vsyncpa [#allocation15], 1
    %s2070 = scalar_lea.sflag [#allocation15], 1
    %2071 = vsyncpa %s2070, 1
    %2072 = vsyncpa [#allocation18], 1
    %s2073 = scalar_lea.sflag [#allocation18], 1
    %2074 = vsyncpa %s2073, 1

</llo_original>
